<compile_context>
chip_gen: v5e
topology: v5e:2x2
jax: 0.10.0
libtpu: 0.0.40
codegen_flags: <defaults>
</compile_context>

<pallas_src>
import math
import functools

import jax
import jax.numpy as jnp
from jax import lax
from jax.experimental import pallas as pl
from jax.experimental.pallas import tpu as pltpu

# Config (mirrors ConfigMamba with dim=64)
DIM = 64
D_IN = 2 * DIM                    # expand * dim = 128
D_STATE = 16
DT_RANK = math.ceil(DIM / 16)     # 4
D_CONV = 4
NLAYERS = 2
RMS_EPS = 1e-5
DEFAULT_CHUNK = 512               # tokens per grid step (VMEM scratch ~= 25 KiB/token)


# ---------------------------------------------------------------------------
# Kernel: full NLAYERS-layer stack for one (batch, chunk) tile.
# Scan state and conv tail are carried across chunks in persistent scratch.
# ---------------------------------------------------------------------------
def mamba_stack_kernel(x_ref, rmsw_ref, inw_ref, convw_ref, convb_ref,
                       wf_ref, dtb_ref, a_ref, d_ref, outw_ref,
                       o_ref,
                       h_s, tail_s, dA_s, dBu_s, hs_s,
                       *, Lc, dim, d_in, d_state, d_conv, nlayers):
    c = pl.program_id(1)                                           # chunk index

    # Scratch persists across grid iterations: reset the per-layer carries at the
    # start of every sequence (chunk 0).  Batch "parallel" iterations each see a
    # fresh chunk 0, so this also re-initializes between batch elements / cores.
    @pl.when(c == 0)
    def _init_carries():
        h_s[...] = jnp.zeros_like(h_s)
        tail_s[...] = jnp.zeros_like(tail_s)

    xc = x_ref[0].astype(jnp.float32)                              # (Lc, dim) residual stream

    # hoisted index tiles (JAX does not CSE broadcast/iota inside loops)
    row_idx = lax.broadcasted_iota(jnp.int32, (Lc, d_in), 0)       # (Lc, d_in)
    row8 = lax.broadcasted_iota(jnp.int32, (8, d_in), 0)           # (8, d_in)

    for layer in range(nlayers):                                   # static, small (2)
        # ---- RMSNorm ----
        ms = jnp.mean(xc * xc, axis=-1, keepdims=True)             # (Lc, 1)
        xn = xc * lax.rsqrt(ms + RMS_EPS) * rmsw_ref[layer]        # (Lc, dim)

        # ---- in_proj: one MXU matmul -> [x | res] ----
        xr = jnp.dot(xn, inw_ref[layer], preferred_element_type=jnp.float32)  # (Lc, 2*d_in)
        xi = xr[:, :d_in]                                          # (Lc, d_in)
        res = xr[:, d_in:]                                         # (Lc, d_in)

        # ---- depthwise causal conv1d via XLU rolls + carried tail ----
        # tap k multiplies x_global[t + k - (d_conv-1)]; rows reaching into the
        # previous chunk come from tail_s (zeros for chunk 0 == causal padding).
        convw = convw_ref[layer]                                   # (d_conv, d_in)
        tail8 = tail_s[layer]                                      # (8, d_in), rows < d_conv-1 valid
        acc = (jnp.broadcast_to(convb_ref[layer], (Lc, d_in))
               + xi * convw[d_conv - 1:d_conv, :])                 # tap k = d_conv-1 (no shift)
        for k in range(d_conv - 1):                                # k = 0 .. d_conv-2
            s = d_conv - 1 - k                                     # shift down by s
            main = pltpu.roll(xi, shift=s, axis=0)                 # rows >= s correct; rows < s wrapped
            bnd8 = tail8 if k == 0 else pltpu.roll(tail8, shift=8 - k, axis=0)
            bnd = jnp.tile(bnd8, (Lc // 8, 1))                     # row t -> tail[(t+k) % 8]
            tap = jnp.where(row_idx < s, bnd, main)
            acc = acc + tap * convw[k:k + 1, :]
        # carry the last d_conv-1 rows of xi to the next chunk (aligned 8-row slice)
        last8 = xi[Lc - 8:Lc, :]
        tail_s[layer] = jnp.where(row8 < d_conv - 1,
                                  pltpu.roll(last8, shift=d_conv - 1, axis=0),
                                  jnp.zeros_like(last8))
        u = acc * jax.nn.sigmoid(acc)                              # SiLU, (Lc, d_in)

        # ---- fused x_proj + dt_proj: single matmul -> [delta_pre | B | C] ----
        xdbl = jnp.dot(u, wf_ref[layer], preferred_element_type=jnp.float32)  # (Lc, d_in+2n)
        delta = jax.nn.softplus(xdbl[:, :d_in] + dtb_ref[layer])   # (Lc, d_in)
        Bm = xdbl[:, d_in:d_in + d_state]                          # (Lc, n)
        Cm = xdbl[:, d_in + d_state:d_in + 2 * d_state]            # (Lc, n)

        # ---- selective scan, vectorized over the state dim ----
        A = a_ref[layer]                                           # (n, d_in) = -exp(A_log)
        # hoist all EUP / broadcast work out of the sequential loop
        dA_s[...] = jnp.exp(delta[:, None, :] * A[None, :, :])     # (Lc, n, d_in)
        dBu_s[...] = (delta * u)[:, None, :] * Bm[:, :, None]      # (Lc, n, d_in)

        def step(t, h):                                            # h: (n, d_in) carry
            h = dA_s[t] * h + dBu_s[t]
            hs_s[t] = h
            return h

        # state carried across chunk boundaries via h_s[layer]
        h_s[layer] = lax.fori_loop(0, Lc, step, h_s[layer], unroll=8)

        # contract hidden states against C (off the sequential critical path)
        y = jnp.sum(hs_s[...] * Cm[:, :, None], axis=1)            # (Lc, d_in)
        y = y + u * d_ref[layer]                                   # D skip connection
        y = y * (res * jax.nn.sigmoid(res))                        # gate with SiLU(res)

        # ---- out_proj + residual ----
        out = jnp.dot(y, outw_ref[layer], preferred_element_type=jnp.float32)  # (Lc, dim)
        xc = xc + out

    o_ref[0] = xc.astype(o_ref.dtype)


# ---------------------------------------------------------------------------
# Wrapper
# ---------------------------------------------------------------------------
def mamba_forward_pallas(x, fp, chunk=DEFAULT_CHUNK):
    B, L, dim = x.shape
    NL, d_conv, d_in = fp["conv_w"].shape
    d_state = fp["A"].shape[1]

    Lc = min(chunk, L)
    if Lc % 8 != 0 or L % Lc != 0:
        # TODO(synk): support ragged last chunks; current model usage has L % 8 == 0.
        raise ValueError(f"sequence length {L} must be a multiple of 8 and of Lc={Lc}")
    nc = L // Lc

    kernel = functools.partial(
        mamba_stack_kernel, Lc=Lc, dim=dim, d_in=d_in,
        d_state=d_state, d_conv=d_conv, nlayers=NL)

    def wspec(shape):
        index_map = lambda b, c: (0,) * len(shape)                 # grid-invariant weights
        try:
            return pl.BlockSpec(shape, index_map, pipeline_mode=pl.Buffered(1))
        except TypeError:                                          # older BlockSpec signature
            return pl.BlockSpec(shape, index_map)

    return pl.pallas_call(
        kernel,
        out_shape=jax.ShapeDtypeStruct((B, L, dim), x.dtype),
        grid=(B, nc),
        in_specs=[
            pl.BlockSpec((1, Lc, dim), lambda b, c: (b, c, 0)),    # x (chunked)
            wspec((NL, 1, dim)),                                   # rms weight
            wspec((NL, dim, 2 * d_in)),                            # in_proj
            wspec((NL, d_conv, d_in)),                             # conv weight (taps, chan)
            wspec((NL, 1, d_in)),                                  # conv bias
            wspec((NL, d_in, d_in + 2 * d_state)),                 # fused x_proj/dt_proj
            wspec((NL, 1, d_in)),                                  # dt_proj bias
            wspec((NL, d_state, d_in)),                            # A = -exp(A_log), transposed
            wspec((NL, 1, d_in)),                                  # D
            wspec((NL, d_in, dim)),                                # out_proj
        ],
        out_specs=pl.BlockSpec((1, Lc, dim), lambda b, c: (b, c, 0)),
        scratch_shapes=[
            pltpu.VMEM((NL, d_state, d_in), jnp.float32),          # carried scan state
            pltpu.VMEM((NL, 8, d_in), jnp.float32),                # carried conv tail rows
            pltpu.VMEM((Lc, d_state, d_in), jnp.float32),          # dA
            pltpu.VMEM((Lc, d_state, d_in), jnp.float32),          # dBu
            pltpu.VMEM((Lc, d_state, d_in), jnp.float32),          # hidden states
        ],
        compiler_params=pltpu.CompilerParams(
            dimension_semantics=("parallel", "arbitrary"),         # batch across TCs, chunks sequential
            vmem_limit_bytes=32 * 1024 * 1024),
    )(x, fp["rms_w"], fp["in_w"], fp["conv_w"], fp["conv_b"], fp["wf"],
      fp["dt_b"], fp["A"], fp["D"], fp["out_w"])


def fuse_params(params_list):
    """Stack per-layer params and precompute the fused/constant pieces."""
    dt_rank = params_list[0]["dt_w"].shape[0]

    def stack(name):
        return jnp.stack([p[name] for p in params_list], axis=0)

    # W_delta = xp_w[:, :dt_rank] @ dt_w  (exact fusion of x_proj -> dt_proj)
    wf = jnp.stack([
        jnp.concatenate(
            [p["xp_w"][:, :dt_rank] @ p["dt_w"], p["xp_w"][:, dt_rank:]], axis=1)
        for p in params_list], axis=0)
    # A = -exp(A_log) is a constant parameter -> precompute on host.
    A = jnp.stack([-jnp.exp(p["A_logT"]) for p in params_list], axis=0)

    return dict(rms_w=stack("rms_w"), in_w=stack("in_w"),
                conv_w=stack("conv_w"), conv_b=stack("conv_b"),
                wf=wf, dt_b=stack("dt_b"), A=A, D=stack("D"),
                out_w=stack("out_w"))


@functools.partial(jax.jit, static_argnames=("chunk",))
def model_forward(x, params_list, chunk=DEFAULT_CHUNK):
    fp = fuse_params(params_list)
    return mamba_forward_pallas(x, fp, chunk=chunk)


# ---------------------------------------------------------------------------
# Parameter init (fresh random weights; same structure as the PyTorch module)
# ---------------------------------------------------------------------------
def init_block_params(key, dim, d_in, d_state, dt_rank, d_conv):
    ks = jax.random.split(key, 6)
    p = {}
    p["rms_w"] = jnp.ones((1, dim), jnp.float32)
    p["in_w"] = jax.random.normal(ks[0], (dim, 2 * d_in), jnp.float32) / math.sqrt(dim)
    p["conv_w"] = jax.random.normal(ks[1], (d_conv, d_in), jnp.float32) * 0.5
    p["conv_b"] = jax.random.normal(ks[2], (1, d_in), jnp.float32) * 0.1
    p["xp_w"] = jax.random.normal(ks[3], (d_in, dt_rank + 2 * d_state),
                                  jnp.float32) / math.sqrt(d_in)
    p["dt_w"] = jax.random.normal(ks[4], (dt_rank, d_in), jnp.float32) / math.sqrt(dt_rank)
    p["dt_b"] = jnp.zeros((1, d_in), jnp.float32)
    # A_log[d, n] = log(n+1) in torch; stored transposed (n, d_in).
    p["A_logT"] = jnp.log(jnp.broadcast_to(
        jnp.arange(1, d_state + 1, dtype=jnp.float32)[:, None], (d_state, d_in)))
    p["D"] = jnp.ones((1, d_in), jnp.float32)
    p["out_w"] = jax.random.normal(ks[5], (d_in, dim), jnp.float32) / math.sqrt(d_in)
    return p


# ---------------------------------------------------------------------------
# Pure-JAX reference (unfused, full-sequence), mirrors the PyTorch forward.
# ---------------------------------------------------------------------------
def ref_block(x, p):
    B, L, dim = x.shape
    d_conv, d_in = p["conv_w"].shape
    d_state = p["A_logT"].shape[0]
    dt_rank = p["dt_w"].shape[0]

    ms = jnp.mean(x * x, axis=-1, keepdims=True)
    xn = x * lax.rsqrt(ms + RMS_EPS) * p["rms_w"][0]
    xr = xn @ p["in_w"]
    xi, res = xr[..., :d_in], xr[..., d_in:]

    xpad = jnp.pad(xi, ((0, 0), (d_conv - 1, 0), (0, 0)))
    acc = jnp.zeros_like(xi) + p["conv_b"][0]
    for k in range(d_conv):
        acc = acc + xpad[:, k:k + L, :] * p["conv_w"][k]
    u = acc * jax.nn.sigmoid(acc)

    xdbl = u @ p["xp_w"]
    dt_r = xdbl[..., :dt_rank]
    Bm = xdbl[..., dt_rank:dt_rank + d_state]
    Cm = xdbl[..., dt_rank + d_state:]
    delta = jax.nn.softplus(dt_r @ p["dt_w"] + p["dt_b"][0])

    A = -jnp.exp(p["A_logT"])                                      # (n, d_in)
    dA = jnp.exp(jnp.einsum('bld,nd->blnd', delta, A))
    dBu = jnp.einsum('bld,bln->blnd', delta * u, Bm)

    def step(h, inp):
        dA_t, dBu_t = inp
        h = dA_t * h + dBu_t
        return h, h

    h0 = jnp.zeros((B, d_state, d_in), jnp.float32)
    _, hs = jax.lax.scan(step, h0,
                         (jnp.moveaxis(dA, 1, 0), jnp.moveaxis(dBu, 1, 0)))
    hs = jnp.moveaxis(hs, 0, 1)                                    # (B, L, n, d_in)
    y = jnp.einsum('blnd,bln->bld', hs, Cm) + u * p["D"][0]
    y = y * (res * jax.nn.sigmoid(res))
    return x + y @ p["out_w"]


def model_forward_ref(x, params_list):
    for p in params_list:
        x = ref_block(x, p)
    return x


if __name__ == "__main__":
    key = jax.random.PRNGKey(0)
    B, L = 2, 32
    kx, kp = jax.random.split(key)
    x = jax.random.normal(kx, (B, L, DIM), jnp.float32)
    layer_keys = jax.random.split(kp, NLAYERS)
    params = [init_block_params(k, DIM, D_IN, D_STATE, DT_RANK, D_CONV)
              for k in layer_keys]

    y_ref = model_forward_ref(x, params)

    # Multi-chunk path (Lc=8 -> 4 chunks; exercises the carried scan state + conv tail).
    y_chunked = model_forward(x, params, chunk=8)
    jax.block_until_ready(y_chunked)
    assert y_chunked.shape == (B, L, DIM) and y_chunked.dtype == jnp.float32
    err = float(jnp.max(jnp.abs(y_chunked - y_ref)))
    assert err < 2e-3, f"chunked kernel mismatch vs reference: max abs err {err}"

    # Single-chunk path (whole sequence resident in one grid step).
    y_full = model_forward(x, params, chunk=32)
    jax.block_until_ready(y_full)
    err = float(jnp.max(jnp.abs(y_full - y_ref)))
    assert err < 2e-3, f"full-chunk kernel mismatch vs reference: max abs err {err}"

    print("KERNEL_OK")
</pallas_src>

<mosaic_0001>
module attributes {stable_mosaic.version = 11 : i64} {
  func.func @mamba_stack_kernel(%arg0: i32, %arg1: i32, %arg2: memref<1x8x64xf32, #tpu.memory_space<vmem>>, %arg3: memref<2x1x64xf32, #tpu.memory_space<vmem>>, %arg4: memref<2x64x256xf32, #tpu.memory_space<vmem>>, %arg5: memref<2x4x128xf32, #tpu.memory_space<vmem>>, %arg6: memref<2x1x128xf32, #tpu.memory_space<vmem>>, %arg7: memref<2x128x160xf32, #tpu.memory_space<vmem>>, %arg8: memref<2x1x128xf32, #tpu.memory_space<vmem>>, %arg9: memref<2x16x128xf32, #tpu.memory_space<vmem>>, %arg10: memref<2x1x128xf32, #tpu.memory_space<vmem>>, %arg11: memref<2x128x64xf32, #tpu.memory_space<vmem>>, %arg12: memref<1x8x64xf32, #tpu.memory_space<vmem>>, %arg13: memref<2x16x128xf32, #tpu.memory_space<vmem>>, %arg14: memref<2x8x128xf32, #tpu.memory_space<vmem>>, %arg15: memref<8x16x128xf32, #tpu.memory_space<vmem>>, %arg16: memref<8x16x128xf32, #tpu.memory_space<vmem>>, %arg17: memref<8x16x128xf32, #tpu.memory_space<vmem>>) attributes {dimension_semantics = [#tpu.dimension_semantics<parallel>, #tpu.dimension_semantics<arbitrary>], iteration_bounds = array<i64: 2, 4>, scalar_prefetch = 0 : i64, scratch_operands = 5 : i64, tpu.core_type = #tpu.core_type<tc>, window_params = [{transform_indices = @transform_0, window_bounds = array<i64: 1, 8, 64>}, {pipeline_mode = #tpu.pipeline_mode<synchronous>, transform_indices = @transform_1, window_bounds = array<i64: 2, 1, 64>}, {pipeline_mode = #tpu.pipeline_mode<synchronous>, transform_indices = @transform_2, window_bounds = array<i64: 2, 64, 256>}, {pipeline_mode = #tpu.pipeline_mode<synchronous>, transform_indices = @transform_3, window_bounds = array<i64: 2, 4, 128>}, {pipeline_mode = #tpu.pipeline_mode<synchronous>, transform_indices = @transform_4, window_bounds = array<i64: 2, 1, 128>}, {pipeline_mode = #tpu.pipeline_mode<synchronous>, transform_indices = @transform_5, window_bounds = array<i64: 2, 128, 160>}, {pipeline_mode = #tpu.pipeline_mode<synchronous>, transform_indices = @transform_6, window_bounds = array<i64: 2, 1, 128>}, {pipeline_mode = #tpu.pipeline_mode<synchronous>, transform_indices = @transform_7, window_bounds = array<i64: 2, 16, 128>}, {pipeline_mode = #tpu.pipeline_mode<synchronous>, transform_indices = @transform_8, window_bounds = array<i64: 2, 1, 128>}, {pipeline_mode = #tpu.pipeline_mode<synchronous>, transform_indices = @transform_9, window_bounds = array<i64: 2, 128, 64>}, {transform_indices = @transform_10, window_bounds = array<i64: 1, 8, 64>}]} {
    %c0_i32 = arith.constant 0 : i32
    %0 = arith.cmpi eq, %arg1, %c0_i32 : i32
    %1 = arith.extui %0 : i1 to i32
    %c0_i32_0 = arith.constant 0 : i32
    %2 = arith.cmpi ne, %1, %c0_i32_0 : i32
    scf.if %2 {
      %cst_250 = arith.constant 0.000000e+00 : f32
      %476 = vector.broadcast %cst_250 : f32 to vector<2x16x128xf32>
      %c0_251 = arith.constant 0 : index
      %c0_252 = arith.constant 0 : index
      %c0_253 = arith.constant 0 : index
      %477 = vector.load %arg13[%c0_251, %c0_252, %c0_253] : memref<2x16x128xf32, #tpu.memory_space<vmem>>, vector<2x16x128xf32>
      tpu.vector_store %arg13[%c0_251, %c0_252, %c0_253], %476 {strides = array<i32>} : memref<2x16x128xf32, #tpu.memory_space<vmem>>, vector<2x16x128xf32>,
      %cst_254 = arith.constant 0.000000e+00 : f32
      %478 = vector.broadcast %cst_254 : f32 to vector<2x8x128xf32>
      %c0_255 = arith.constant 0 : index
      %c0_256 = arith.constant 0 : index
      %c0_257 = arith.constant 0 : index
      %479 = vector.load %arg14[%c0_255, %c0_256, %c0_257] : memref<2x8x128xf32, #tpu.memory_space<vmem>>, vector<2x8x128xf32>
      tpu.vector_store %arg14[%c0_255, %c0_256, %c0_257], %478 {strides = array<i32>} : memref<2x8x128xf32, #tpu.memory_space<vmem>>, vector<2x8x128xf32>,
    } else {
    }
    %c0 = arith.constant 0 : index
    %c0_1 = arith.constant 0 : index
    %c0_2 = arith.constant 0 : index
    %3 = vector.load %arg2[%c0, %c0_1, %c0_2] : memref<1x8x64xf32, #tpu.memory_space<vmem>>, vector<1x8x64xf32>
    %4 = vector.shape_cast %3 : vector<1x8x64xf32> to vector<8x64xf32>
    %5 = tpu.iota {dimensions = array<i32: 0>} : vector<8x128xi32>
    %6 = tpu.iota {dimensions = array<i32: 0>} : vector<8x128xi32>
    %7 = arith.mulf %4, %4 : vector<8x64xf32>
    %cst = arith.constant dense<0.000000e+00> : vector<8xf32>
    %8 = vector.multi_reduction <add>, %7, %cst [1] : vector<8x64xf32> to vector<8xf32>
    %9 = vector.shape_cast %8 : vector<8xf32> to vector<8x1xf32>
    %cst_3 = arith.constant 6.400000e+01 : f32
    %10 = vector.broadcast %cst_3 : f32 to vector<8x1xf32>
    %11 = arith.divf %9, %10 : vector<8x1xf32>
    %cst_4 = arith.constant 9.99999974E-6 : f32
    %12 = vector.broadcast %cst_4 : f32 to vector<8x1xf32>
    %13 = arith.addf %11, %12 : vector<8x1xf32>
    %14 = math.rsqrt %13 : vector<8x1xf32>
    %15 = vector.broadcast %14 : vector<8x1xf32> to vector<8x64xf32>
    %16 = arith.mulf %4, %15 : vector<8x64xf32>
    %c0_5 = arith.constant 0 : index
    %c0_6 = arith.constant 0 : index
    %c0_7 = arith.constant 0 : index
    %17 = vector.load %arg3[%c0_5, %c0_6, %c0_7] : memref<2x1x64xf32, #tpu.memory_space<vmem>>, vector<1x1x64xf32>
    %18 = vector.shape_cast %17 : vector<1x1x64xf32> to vector<1x64xf32>
    %19 = vector.broadcast %18 : vector<1x64xf32> to vector<8x64xf32>
    %20 = arith.mulf %16, %19 : vector<8x64xf32>
    %c0_8 = arith.constant 0 : index
    %c0_9 = arith.constant 0 : index
    %c0_10 = arith.constant 0 : index
    %21 = vector.load %arg4[%c0_8, %c0_9, %c0_10] : memref<2x64x256xf32, #tpu.memory_space<vmem>>, vector<1x64x256xf32>
    %22 = vector.shape_cast %21 : vector<1x64x256xf32> to vector<64x256xf32>
    %cst_11 = arith.constant dense<0.000000e+00> : vector<8x256xf32>
    %23 = tpu.matmul %20, %22, %cst_11 {dimension_numbers = #tpu.dot_dimension_numbers<[1], [0], [0], [1], [0, 0, 1, 1], [], []>} : vector<8x64xf32>, vector<64x256xf32>, vector<8x256xf32> -> vector<8x256xf32>
    %24 = vector.extract_strided_slice %23 {offsets = [0, 0], sizes = [8, 128], strides = [1, 1]} : vector<8x256xf32> to vector<8x128xf32>
    %25 = vector.extract_strided_slice %23 {offsets = [0, 128], sizes = [8, 128], strides = [1, 1]} : vector<8x256xf32> to vector<8x128xf32>
    %c0_12 = arith.constant 0 : index
    %c0_13 = arith.constant 0 : index
    %c0_14 = arith.constant 0 : index
    %26 = vector.load %arg5[%c0_12, %c0_13, %c0_14] : memref<2x4x128xf32, #tpu.memory_space<vmem>>, vector<1x4x128xf32>
    %27 = vector.shape_cast %26 : vector<1x4x128xf32> to vector<4x128xf32>
    %c0_15 = arith.constant 0 : index
    %c0_16 = arith.constant 0 : index
    %c0_17 = arith.constant 0 : index
    %28 = vector.load %arg14[%c0_15, %c0_16, %c0_17] : memref<2x8x128xf32, #tpu.memory_space<vmem>>, vector<1x8x128xf32>
    %29 = vector.shape_cast %28 : vector<1x8x128xf32> to vector<8x128xf32>
    %c0_18 = arith.constant 0 : index
    %c0_19 = arith.constant 0 : index
    %c0_20 = arith.constant 0 : index
    %30 = vector.load %arg6[%c0_18, %c0_19, %c0_20] : memref<2x1x128xf32, #tpu.memory_space<vmem>>, vector<1x1x128xf32>
    %31 = vector.shape_cast %30 : vector<1x1x128xf32> to vector<1x128xf32>
    %32 = vector.shape_cast %31 : vector<1x128xf32> to vector<1x128xf32>
    %33 = vector.broadcast %32 : vector<1x128xf32> to vector<8x128xf32>
    %34 = vector.extract_strided_slice %27 {offsets = [3, 0], sizes = [1, 128], strides = [1, 1]} : vector<4x128xf32> to vector<1x128xf32>
    %35 = vector.broadcast %34 : vector<1x128xf32> to vector<8x128xf32>
    %36 = arith.mulf %24, %35 : vector<8x128xf32>
    %37 = arith.addf %33, %36 : vector<8x128xf32>
    %c3_i32 = arith.constant 3 : i32
    %38 = tpu.dynamic_rotate %24 by %c3_i32 dim 0 : vector<8x128xf32>, i32 -> vector<8x128xf32>
    %c3_i32_21 = arith.constant 3 : i32
    %39 = vector.broadcast %c3_i32_21 : i32 to vector<8x128xi32>
    %40 = arith.cmpi slt, %5, %39 : vector<8x128xi32>
    %41 = arith.select %40, %29, %38 : vector<8x128xi1>, vector<8x128xf32>
    %42 = vector.extract_strided_slice %27 {offsets = [0, 0], sizes = [1, 128], strides = [1, 1]} : vector<4x128xf32> to vector<1x128xf32>
    %43 = vector.broadcast %42 : vector<1x128xf32> to vector<8x128xf32>
    %44 = arith.mulf %41, %43 : vector<8x128xf32>
    %45 = arith.addf %37, %44 : vector<8x128xf32>
    %c2_i32 = arith.constant 2 : i32
    %46 = tpu.dynamic_rotate %24 by %c2_i32 dim 0 : vector<8x128xf32>, i32 -> vector<8x128xf32>
    %c7_i32 = arith.constant 7 : i32
    %47 = tpu.dynamic_rotate %29 by %c7_i32 dim 0 : vector<8x128xf32>, i32 -> vector<8x128xf32>
    %c2_i32_22 = arith.constant 2 : i32
    %48 = vector.broadcast %c2_i32_22 : i32 to vector<8x128xi32>
    %49 = arith.cmpi slt, %5, %48 : vector<8x128xi32>
    %50 = arith.select %49, %47, %46 : vector<8x128xi1>, vector<8x128xf32>
    %51 = vector.extract_strided_slice %27 {offsets = [1, 0], sizes = [1, 128], strides = [1, 1]} : vector<4x128xf32> to vector<1x128xf32>
    %52 = vector.broadcast %51 : vector<1x128xf32> to vector<8x128xf32>
    %53 = arith.mulf %50, %52 : vector<8x128xf32>
    %54 = arith.addf %45, %53 : vector<8x128xf32>
    %c1_i32 = arith.constant 1 : i32
    %55 = tpu.dynamic_rotate %24 by %c1_i32 dim 0 : vector<8x128xf32>, i32 -> vector<8x128xf32>
    %c6_i32 = arith.constant 6 : i32
    %56 = tpu.dynamic_rotate %29 by %c6_i32 dim 0 : vector<8x128xf32>, i32 -> vector<8x128xf32>
    %c1_i32_23 = arith.constant 1 : i32
    %57 = vector.broadcast %c1_i32_23 : i32 to vector<8x128xi32>
    %58 = arith.cmpi slt, %5, %57 : vector<8x128xi32>
    %59 = arith.select %58, %56, %55 : vector<8x128xi1>, vector<8x128xf32>
    %60 = vector.extract_strided_slice %27 {offsets = [2, 0], sizes = [1, 128], strides = [1, 1]} : vector<4x128xf32> to vector<1x128xf32>
    %61 = vector.broadcast %60 : vector<1x128xf32> to vector<8x128xf32>
    %62 = arith.mulf %59, %61 : vector<8x128xf32>
    %63 = arith.addf %54, %62 : vector<8x128xf32>
    %c3_i32_24 = arith.constant 3 : i32
    %64 = vector.broadcast %c3_i32_24 : i32 to vector<8x128xi32>
    %65 = arith.cmpi slt, %6, %64 : vector<8x128xi32>
    %c3_i32_25 = arith.constant 3 : i32
    %66 = tpu.dynamic_rotate %24 by %c3_i32_25 dim 0 : vector<8x128xf32>, i32 -> vector<8x128xf32>
    %cst_26 = arith.constant 0.000000e+00 : f32
    %67 = vector.broadcast %cst_26 : f32 to vector<8x128xf32>
    %68 = arith.select %65, %66, %67 : vector<8x128xi1>, vector<8x128xf32>
    %c0_27 = arith.constant 0 : index
    %c0_28 = arith.constant 0 : index
    %c0_29 = arith.constant 0 : index
    %69 = vector.load %arg14[%c0_27, %c0_28, %c0_29] : memref<2x8x128xf32, #tpu.memory_space<vmem>>, vector<1x8x128xf32>
    %70 = vector.shape_cast %69 : vector<1x8x128xf32> to vector<8x128xf32>
    %71 = vector.shape_cast %68 : vector<8x128xf32> to vector<1x8x128xf32>
    tpu.vector_store %arg14[%c0_27, %c0_28, %c0_29], %71 {strides = array<i32>} : memref<2x8x128xf32, #tpu.memory_space<vmem>>, vector<1x8x128xf32>,
    %72 = arith.negf %63 : vector<8x128xf32>
    %73 = math.exp %72 : vector<8x128xf32>
    %cst_30 = arith.constant 1.000000e+00 : f32
    %74 = vector.broadcast %cst_30 : f32 to vector<8x128xf32>
    %75 = arith.addf %74, %73 : vector<8x128xf32>
    %76 = arith.divf %74, %75 : vector<8x128xf32>
    %77 = arith.mulf %63, %76 : vector<8x128xf32>
    %c0_31 = arith.constant 0 : index
    %c0_32 = arith.constant 0 : index
    %c0_33 = arith.constant 0 : index
    %78 = vector.load %arg7[%c0_31, %c0_32, %c0_33] : memref<2x128x160xf32, #tpu.memory_space<vmem>>, vector<1x128x160xf32>
    %79 = vector.shape_cast %78 : vector<1x128x160xf32> to vector<128x160xf32>
    %cst_34 = arith.constant dense<0.000000e+00> : vector<8x160xf32>
    %80 = tpu.matmul %77, %79, %cst_34 {dimension_numbers = #tpu.dot_dimension_numbers<[1], [0], [0], [1], [0, 0, 1, 1], [], []>} : vector<8x128xf32>, vector<128x160xf32>, vector<8x160xf32> -> vector<8x160xf32>
    %81 = vector.extract_strided_slice %80 {offsets = [0, 0], sizes = [8, 128], strides = [1, 1]} : vector<8x160xf32> to vector<8x128xf32>
    %c0_35 = arith.constant 0 : index
    %c0_36 = arith.constant 0 : index
    %c0_37 = arith.constant 0 : index
    %82 = vector.load %arg8[%c0_35, %c0_36, %c0_37] : memref<2x1x128xf32, #tpu.memory_space<vmem>>, vector<1x1x128xf32>
    %83 = vector.shape_cast %82 : vector<1x1x128xf32> to vector<1x128xf32>
    %84 = vector.broadcast %83 : vector<1x128xf32> to vector<8x128xf32>
    %85 = arith.addf %81, %84 : vector<8x128xf32>
    %cst_38 = arith.constant 0.000000e+00 : f32
    %86 = vector.broadcast %cst_38 : f32 to vector<8x128xf32>
    %87 = arith.maximumf %85, %86 : vector<8x128xf32>
    %88 = vector.broadcast %cst_38 : f32 to vector<8x128xf32>
    %89 = arith.subf %85, %88 : vector<8x128xf32>
    %90 = arith.cmpf one, %89, %89 : vector<8x128xf32>
    %91 = vector.broadcast %cst_38 : f32 to vector<8x128xf32>
    %92 = arith.addf %85, %91 : vector<8x128xf32>
    %93 = math.absf %89 : vector<8x128xf32>
    %cst_39 = arith.constant 0.000000e+00 : f32
    %94 = vector.broadcast %cst_39 : f32 to vector<8x128xf32>
    %95 = arith.subf %94, %93 : vector<8x128xf32>
    %96 = math.exp %95 : vector<8x128xf32>
    %97 = math.log1p %96 : vector<8x128xf32>
    %98 = arith.addf %87, %97 : vector<8x128xf32>
    %99 = arith.select %90, %92, %98 : vector<8x128xi1>, vector<8x128xf32>
    %100 = vector.extract_strided_slice %80 {offsets = [0, 128], sizes = [8, 16], strides = [1, 1]} : vector<8x160xf32> to vector<8x16xf32>
    %101 = vector.extract_strided_slice %80 {offsets = [0, 144], sizes = [8, 16], strides = [1, 1]} : vector<8x160xf32> to vector<8x16xf32>
    %c0_40 = arith.constant 0 : index
    %c0_41 = arith.constant 0 : index
    %c0_42 = arith.constant 0 : index
    %102 = vector.load %arg9[%c0_40, %c0_41, %c0_42] : memref<2x16x128xf32, #tpu.memory_space<vmem>>, vector<1x16x128xf32>
    %103 = vector.shape_cast %102 : vector<1x16x128xf32> to vector<16x128xf32>
    %104 = vector.shape_cast %99 : vector<8x128xf32> to vector<8x1x128xf32>
    %105 = vector.shape_cast %103 : vector<16x128xf32> to vector<1x16x128xf32>
    %106 = vector.broadcast %104 : vector<8x1x128xf32> to vector<8x16x128xf32>
    %107 = vector.broadcast %105 : vector<1x16x128xf32> to vector<8x16x128xf32>
    %108 = arith.mulf %106, %107 : vector<8x16x128xf32>
    %109 = math.exp %108 : vector<8x16x128xf32>
    %c0_43 = arith.constant 0 : index
    %c0_44 = arith.constant 0 : index
    %c0_45 = arith.constant 0 : index
    %110 = vector.load %arg15[%c0_43, %c0_44, %c0_45] : memref<8x16x128xf32, #tpu.memory_space<vmem>>, vector<8x16x128xf32>
    tpu.vector_store %arg15[%c0_43, %c0_44, %c0_45], %109 {strides = array<i32>} : memref<8x16x128xf32, #tpu.memory_space<vmem>>, vector<8x16x128xf32>,
    %111 = arith.mulf %99, %77 : vector<8x128xf32>
    %112 = vector.shape_cast %111 : vector<8x128xf32> to vector<8x1x128xf32>
    %113 = vector.shape_cast %100 : vector<8x16xf32> to vector<8x16x1xf32>
    %114 = vector.broadcast %112 : vector<8x1x128xf32> to vector<8x16x128xf32>
    %115 = vector.broadcast %113 : vector<8x16x1xf32> to vector<8x16x128xf32>
    %116 = arith.mulf %114, %115 : vector<8x16x128xf32>
    %c0_46 = arith.constant 0 : index
    %c0_47 = arith.constant 0 : index
    %c0_48 = arith.constant 0 : index
    %117 = vector.load %arg16[%c0_46, %c0_47, %c0_48] : memref<8x16x128xf32, #tpu.memory_space<vmem>>, vector<8x16x128xf32>
    tpu.vector_store %arg16[%c0_46, %c0_47, %c0_48], %116 {strides = array<i32>} : memref<8x16x128xf32, #tpu.memory_space<vmem>>, vector<8x16x128xf32>,
    %c0_49 = arith.constant 0 : index
    %c0_50 = arith.constant 0 : index
    %c0_51 = arith.constant 0 : index
    %118 = vector.load %arg13[%c0_49, %c0_50, %c0_51] : memref<2x16x128xf32, #tpu.memory_space<vmem>>, vector<1x16x128xf32>
    %119 = vector.shape_cast %118 : vector<1x16x128xf32> to vector<16x128xf32>
    %c0_i32_52 = arith.constant 0 : i32
    %120 = arith.index_cast %c0_i32_52 : i32 to index
    %c0_53 = arith.constant 0 : index
    %c0_54 = arith.constant 0 : index
    %121 = vector.load %arg15[%120, %c0_53, %c0_54] : memref<8x16x128xf32, #tpu.memory_space<vmem>>, vector<1x16x128xf32>
    %122 = vector.shape_cast %121 : vector<1x16x128xf32> to vector<16x128xf32>
    %123 = arith.mulf %122, %119 : vector<16x128xf32>
    %124 = arith.index_cast %c0_i32_52 : i32 to index
    %c0_55 = arith.constant 0 : index
    %c0_56 = arith.constant 0 : index
    %125 = vector.load %arg16[%124, %c0_55, %c0_56] : memref<8x16x128xf32, #tpu.memory_space<vmem>>, vector<1x16x128xf32>
    %126 = vector.shape_cast %125 : vector<1x16x128xf32> to vector<16x128xf32>
    %127 = arith.addf %123, %126 : vector<16x128xf32>
    %128 = arith.index_cast %c0_i32_52 : i32 to index
    %c0_57 = arith.constant 0 : index
    %c0_58 = arith.constant 0 : index
    %129 = vector.load %arg17[%128, %c0_57, %c0_58] : memref<8x16x128xf32, #tpu.memory_space<vmem>>, vector<1x16x128xf32>
    %130 = vector.shape_cast %129 : vector<1x16x128xf32> to vector<16x128xf32>
    %131 = vector.shape_cast %127 : vector<16x128xf32> to vector<1x16x128xf32>
    tpu.vector_store %arg17[%128, %c0_57, %c0_58], %131 {strides = array<i32>} : memref<8x16x128xf32, #tpu.memory_space<vmem>>, vector<1x16x128xf32>,
    %c1_i32_59 = arith.constant 1 : i32
    %132 = arith.index_cast %c1_i32_59 : i32 to index
    %c0_60 = arith.constant 0 : index
    %c0_61 = arith.constant 0 : index
    %133 = vector.load %arg15[%132, %c0_60, %c0_61] : memref<8x16x128xf32, #tpu.memory_space<vmem>>, vector<1x16x128xf32>
    %134 = vector.shape_cast %133 : vector<1x16x128xf32> to vector<16x128xf32>
    %135 = arith.mulf %134, %127 : vector<16x128xf32>
    %136 = arith.index_cast %c1_i32_59 : i32 to index
    %c0_62 = arith.constant 0 : index
    %c0_63 = arith.constant 0 : index
    %137 = vector.load %arg16[%136, %c0_62, %c0_63] : memref<8x16x128xf32, #tpu.memory_space<vmem>>, vector<1x16x128xf32>
    %138 = vector.shape_cast %137 : vector<1x16x128xf32> to vector<16x128xf32>
    %139 = arith.addf %135, %138 : vector<16x128xf32>
    %140 = arith.index_cast %c1_i32_59 : i32 to index
    %c0_64 = arith.constant 0 : index
    %c0_65 = arith.constant 0 : index
    %141 = vector.load %arg17[%140, %c0_64, %c0_65] : memref<8x16x128xf32, #tpu.memory_space<vmem>>, vector<1x16x128xf32>
    %142 = vector.shape_cast %141 : vector<1x16x128xf32> to vector<16x128xf32>
    %143 = vector.shape_cast %139 : vector<16x128xf32> to vector<1x16x128xf32>
    tpu.vector_store %arg17[%140, %c0_64, %c0_65], %143 {strides = array<i32>} : memref<8x16x128xf32, #tpu.memory_space<vmem>>, vector<1x16x128xf32>,
    %c2_i32_66 = arith.constant 2 : i32
    %144 = arith.index_cast %c2_i32_66 : i32 to index
    %c0_67 = arith.constant 0 : index
    %c0_68 = arith.constant 0 : index
    %145 = vector.load %arg15[%144, %c0_67, %c0_68] : memref<8x16x128xf32, #tpu.memory_space<vmem>>, vector<1x16x128xf32>
    %146 = vector.shape_cast %145 : vector<1x16x128xf32> to vector<16x128xf32>
    %147 = arith.mulf %146, %139 : vector<16x128xf32>
    %148 = arith.index_cast %c2_i32_66 : i32 to index
    %c0_69 = arith.constant 0 : index
    %c0_70 = arith.constant 0 : index
    %149 = vector.load %arg16[%148, %c0_69, %c0_70] : memref<8x16x128xf32, #tpu.memory_space<vmem>>, vector<1x16x128xf32>
    %150 = vector.shape_cast %149 : vector<1x16x128xf32> to vector<16x128xf32>
    %151 = arith.addf %147, %150 : vector<16x128xf32>
    %152 = arith.index_cast %c2_i32_66 : i32 to index
    %c0_71 = arith.constant 0 : index
    %c0_72 = arith.constant 0 : index
    %153 = vector.load %arg17[%152, %c0_71, %c0_72] : memref<8x16x128xf32, #tpu.memory_space<vmem>>, vector<1x16x128xf32>
    %154 = vector.shape_cast %153 : vector<1x16x128xf32> to vector<16x128xf32>
    %155 = vector.shape_cast %151 : vector<16x128xf32> to vector<1x16x128xf32>
    tpu.vector_store %arg17[%152, %c0_71, %c0_72], %155 {strides = array<i32>} : memref<8x16x128xf32, #tpu.memory_space<vmem>>, vector<1x16x128xf32>,
    %c3_i32_73 = arith.constant 3 : i32
    %156 = arith.index_cast %c3_i32_73 : i32 to index
    %c0_74 = arith.constant 0 : index
    %c0_75 = arith.constant 0 : index
    %157 = vector.load %arg15[%156, %c0_74, %c0_75] : memref<8x16x128xf32, #tpu.memory_space<vmem>>, vector<1x16x128xf32>
    %158 = vector.shape_cast %157 : vector<1x16x128xf32> to vector<16x128xf32>
    %159 = arith.mulf %158, %151 : vector<16x128xf32>
    %160 = arith.index_cast %c3_i32_73 : i32 to index
    %c0_76 = arith.constant 0 : index
    %c0_77 = arith.constant 0 : index
    %161 = vector.load %arg16[%160, %c0_76, %c0_77] : memref<8x16x128xf32, #tpu.memory_space<vmem>>, vector<1x16x128xf32>
    %162 = vector.shape_cast %161 : vector<1x16x128xf32> to vector<16x128xf32>
    %163 = arith.addf %159, %162 : vector<16x128xf32>
    %164 = arith.index_cast %c3_i32_73 : i32 to index
    %c0_78 = arith.constant 0 : index
    %c0_79 = arith.constant 0 : index
    %165 = vector.load %arg17[%164, %c0_78, %c0_79] : memref<8x16x128xf32, #tpu.memory_space<vmem>>, vector<1x16x128xf32>
    %166 = vector.shape_cast %165 : vector<1x16x128xf32> to vector<16x128xf32>
    %167 = vector.shape_cast %163 : vector<16x128xf32> to vector<1x16x128xf32>
    tpu.vector_store %arg17[%164, %c0_78, %c0_79], %167 {strides = array<i32>} : memref<8x16x128xf32, #tpu.memory_space<vmem>>, vector<1x16x128xf32>,
    %c4_i32 = arith.constant 4 : i32
    %168 = arith.index_cast %c4_i32 : i32 to index
    %c0_80 = arith.constant 0 : index
    %c0_81 = arith.constant 0 : index
    %169 = vector.load %arg15[%168, %c0_80, %c0_81] : memref<8x16x128xf32, #tpu.memory_space<vmem>>, vector<1x16x128xf32>
    %170 = vector.shape_cast %169 : vector<1x16x128xf32> to vector<16x128xf32>
    %171 = arith.mulf %170, %163 : vector<16x128xf32>
    %172 = arith.index_cast %c4_i32 : i32 to index
    %c0_82 = arith.constant 0 : index
    %c0_83 = arith.constant 0 : index
    %173 = vector.load %arg16[%172, %c0_82, %c0_83] : memref<8x16x128xf32, #tpu.memory_space<vmem>>, vector<1x16x128xf32>
    %174 = vector.shape_cast %173 : vector<1x16x128xf32> to vector<16x128xf32>
    %175 = arith.addf %171, %174 : vector<16x128xf32>
    %176 = arith.index_cast %c4_i32 : i32 to index
    %c0_84 = arith.constant 0 : index
    %c0_85 = arith.constant 0 : index
    %177 = vector.load %arg17[%176, %c0_84, %c0_85] : memref<8x16x128xf32, #tpu.memory_space<vmem>>, vector<1x16x128xf32>
    %178 = vector.shape_cast %177 : vector<1x16x128xf32> to vector<16x128xf32>
    %179 = vector.shape_cast %175 : vector<16x128xf32> to vector<1x16x128xf32>
    tpu.vector_store %arg17[%176, %c0_84, %c0_85], %179 {strides = array<i32>} : memref<8x16x128xf32, #tpu.memory_space<vmem>>, vector<1x16x128xf32>,
    %c5_i32 = arith.constant 5 : i32
    %180 = arith.index_cast %c5_i32 : i32 to index
    %c0_86 = arith.constant 0 : index
    %c0_87 = arith.constant 0 : index
    %181 = vector.load %arg15[%180, %c0_86, %c0_87] : memref<8x16x128xf32, #tpu.memory_space<vmem>>, vector<1x16x128xf32>
    %182 = vector.shape_cast %181 : vector<1x16x128xf32> to vector<16x128xf32>
    %183 = arith.mulf %182, %175 : vector<16x128xf32>
    %184 = arith.index_cast %c5_i32 : i32 to index
    %c0_88 = arith.constant 0 : index
    %c0_89 = arith.constant 0 : index
    %185 = vector.load %arg16[%184, %c0_88, %c0_89] : memref<8x16x128xf32, #tpu.memory_space<vmem>>, vector<1x16x128xf32>
    %186 = vector.shape_cast %185 : vector<1x16x128xf32> to vector<16x128xf32>
    %187 = arith.addf %183, %186 : vector<16x128xf32>
    %188 = arith.index_cast %c5_i32 : i32 to index
    %c0_90 = arith.constant 0 : index
    %c0_91 = arith.constant 0 : index
    %189 = vector.load %arg17[%188, %c0_90, %c0_91] : memref<8x16x128xf32, #tpu.memory_space<vmem>>, vector<1x16x128xf32>
    %190 = vector.shape_cast %189 : vector<1x16x128xf32> to vector<16x128xf32>
    %191 = vector.shape_cast %187 : vector<16x128xf32> to vector<1x16x128xf32>
    tpu.vector_store %arg17[%188, %c0_90, %c0_91], %191 {strides = array<i32>} : memref<8x16x128xf32, #tpu.memory_space<vmem>>, vector<1x16x128xf32>,
    %c6_i32_92 = arith.constant 6 : i32
    %192 = arith.index_cast %c6_i32_92 : i32 to index
    %c0_93 = arith.constant 0 : index
    %c0_94 = arith.constant 0 : index
    %193 = vector.load %arg15[%192, %c0_93, %c0_94] : memref<8x16x128xf32, #tpu.memory_space<vmem>>, vector<1x16x128xf32>
    %194 = vector.shape_cast %193 : vector<1x16x128xf32> to vector<16x128xf32>
    %195 = arith.mulf %194, %187 : vector<16x128xf32>
    %196 = arith.index_cast %c6_i32_92 : i32 to index
    %c0_95 = arith.constant 0 : index
    %c0_96 = arith.constant 0 : index
    %197 = vector.load %arg16[%196, %c0_95, %c0_96] : memref<8x16x128xf32, #tpu.memory_space<vmem>>, vector<1x16x128xf32>
    %198 = vector.shape_cast %197 : vector<1x16x128xf32> to vector<16x128xf32>
    %199 = arith.addf %195, %198 : vector<16x128xf32>
    %200 = arith.index_cast %c6_i32_92 : i32 to index
    %c0_97 = arith.constant 0 : index
    %c0_98 = arith.constant 0 : index
    %201 = vector.load %arg17[%200, %c0_97, %c0_98] : memref<8x16x128xf32, #tpu.memory_space<vmem>>, vector<1x16x128xf32>
    %202 = vector.shape_cast %201 : vector<1x16x128xf32> to vector<16x128xf32>
    %203 = vector.shape_cast %199 : vector<16x128xf32> to vector<1x16x128xf32>
    tpu.vector_store %arg17[%200, %c0_97, %c0_98], %203 {strides = array<i32>} : memref<8x16x128xf32, #tpu.memory_space<vmem>>, vector<1x16x128xf32>,
    %c7_i32_99 = arith.constant 7 : i32
    %204 = arith.index_cast %c7_i32_99 : i32 to index
    %c0_100 = arith.constant 0 : index
    %c0_101 = arith.constant 0 : index
    %205 = vector.load %arg15[%204, %c0_100, %c0_101] : memref<8x16x128xf32, #tpu.memory_space<vmem>>, vector<1x16x128xf32>
    %206 = vector.shape_cast %205 : vector<1x16x128xf32> to vector<16x128xf32>
    %207 = arith.mulf %206, %199 : vector<16x128xf32>
    %208 = arith.index_cast %c7_i32_99 : i32 to index
    %c0_102 = arith.constant 0 : index
    %c0_103 = arith.constant 0 : index
    %209 = vector.load %arg16[%208, %c0_102, %c0_103] : memref<8x16x128xf32, #tpu.memory_space<vmem>>, vector<1x16x128xf32>
    %210 = vector.shape_cast %209 : vector<1x16x128xf32> to vector<16x128xf32>
    %211 = arith.addf %207, %210 : vector<16x128xf32>
    %212 = arith.index_cast %c7_i32_99 : i32 to index
    %c0_104 = arith.constant 0 : index
    %c0_105 = arith.constant 0 : index
    %213 = vector.load %arg17[%212, %c0_104, %c0_105] : memref<8x16x128xf32, #tpu.memory_space<vmem>>, vector<1x16x128xf32>
    %214 = vector.shape_cast %213 : vector<1x16x128xf32> to vector<16x128xf32>
    %215 = vector.shape_cast %211 : vector<16x128xf32> to vector<1x16x128xf32>
    tpu.vector_store %arg17[%212, %c0_104, %c0_105], %215 {strides = array<i32>} : memref<8x16x128xf32, #tpu.memory_space<vmem>>, vector<1x16x128xf32>,
    %c8_i32 = arith.constant 8 : i32
    %c0_106 = arith.constant 0 : index
    %c0_107 = arith.constant 0 : index
    %c0_108 = arith.constant 0 : index
    %216 = vector.load %arg13[%c0_106, %c0_107, %c0_108] : memref<2x16x128xf32, #tpu.memory_space<vmem>>, vector<1x16x128xf32>
    %217 = vector.shape_cast %216 : vector<1x16x128xf32> to vector<16x128xf32>
    %218 = vector.shape_cast %211 : vector<16x128xf32> to vector<1x16x128xf32>
    tpu.vector_store %arg13[%c0_106, %c0_107, %c0_108], %218 {strides = array<i32>} : memref<2x16x128xf32, #tpu.memory_space<vmem>>, vector<1x16x128xf32>,
    %c0_109 = arith.constant 0 : index
    %c0_110 = arith.constant 0 : index
    %c0_111 = arith.constant 0 : index
    %219 = vector.load %arg17[%c0_109, %c0_110, %c0_111] : memref<8x16x128xf32, #tpu.memory_space<vmem>>, vector<8x16x128xf32>
    %220 = vector.shape_cast %101 : vector<8x16xf32> to vector<8x16x1xf32>
    %221 = vector.broadcast %220 : vector<8x16x1xf32> to vector<8x16x128xf32>
    %222 = arith.mulf %219, %221 : vector<8x16x128xf32>
    %cst_112 = arith.constant dense<0.000000e+00> : vector<8x128xf32>
    %223 = vector.multi_reduction <add>, %222, %cst_112 [1] : vector<8x16x128xf32> to vector<8x128xf32>
    %c0_113 = arith.constant 0 : index
    %c0_114 = arith.constant 0 : index
    %c0_115 = arith.constant 0 : index
    %224 = vector.load %arg10[%c0_113, %c0_114, %c0_115] : memref<2x1x128xf32, #tpu.memory_space<vmem>>, vector<1x1x128xf32>
    %225 = vector.shape_cast %224 : vector<1x1x128xf32> to vector<1x128xf32>
    %226 = vector.broadcast %225 : vector<1x128xf32> to vector<8x128xf32>
    %227 = arith.mulf %77, %226 : vector<8x128xf32>
    %228 = arith.addf %223, %227 : vector<8x128xf32>
    %229 = arith.negf %25 : vector<8x128xf32>
    %230 = math.exp %229 : vector<8x128xf32>
    %cst_116 = arith.constant 1.000000e+00 : f32
    %231 = vector.broadcast %cst_116 : f32 to vector<8x128xf32>
    %232 = arith.addf %231, %230 : vector<8x128xf32>
    %233 = arith.divf %231, %232 : vector<8x128xf32>
    %234 = arith.mulf %25, %233 : vector<8x128xf32>
    %235 = arith.mulf %228, %234 : vector<8x128xf32>
    %c0_117 = arith.constant 0 : index
    %c0_118 = arith.constant 0 : index
    %c0_119 = arith.constant 0 : index
    %236 = vector.load %arg11[%c0_117, %c0_118, %c0_119] : memref<2x128x64xf32, #tpu.memory_space<vmem>>, vector<1x128x64xf32>
    %237 = vector.shape_cast %236 : vector<1x128x64xf32> to vector<128x64xf32>
    %cst_120 = arith.constant dense<0.000000e+00> : vector<8x64xf32>
    %238 = tpu.matmul %235, %237, %cst_120 {dimension_numbers = #tpu.dot_dimension_numbers<[1], [0], [0], [1], [0, 0, 1, 1], [], []>} : vector<8x128xf32>, vector<128x64xf32>, vector<8x64xf32> -> vector<8x64xf32>
    %239 = arith.addf %4, %238 : vector<8x64xf32>
    %240 = arith.mulf %239, %239 : vector<8x64xf32>
    %cst_121 = arith.constant dense<0.000000e+00> : vector<8xf32>
    %241 = vector.multi_reduction <add>, %240, %cst_121 [1] : vector<8x64xf32> to vector<8xf32>
    %242 = vector.shape_cast %241 : vector<8xf32> to vector<8x1xf32>
    %cst_122 = arith.constant 6.400000e+01 : f32
    %243 = vector.broadcast %cst_122 : f32 to vector<8x1xf32>
    %244 = arith.divf %242, %243 : vector<8x1xf32>
    %cst_123 = arith.constant 9.99999974E-6 : f32
    %245 = vector.broadcast %cst_123 : f32 to vector<8x1xf32>
    %246 = arith.addf %244, %245 : vector<8x1xf32>
    %247 = math.rsqrt %246 : vector<8x1xf32>
    %248 = vector.broadcast %247 : vector<8x1xf32> to vector<8x64xf32>
    %249 = arith.mulf %239, %248 : vector<8x64xf32>
    %c1 = arith.constant 1 : index
    %c0_124 = arith.constant 0 : index
    %c0_125 = arith.constant 0 : index
    %250 = vector.load %arg3[%c1, %c0_124, %c0_125] : memref<2x1x64xf32, #tpu.memory_space<vmem>>, vector<1x1x64xf32>
    %251 = vector.shape_cast %250 : vector<1x1x64xf32> to vector<1x64xf32>
    %252 = vector.broadcast %251 : vector<1x64xf32> to vector<8x64xf32>
    %253 = arith.mulf %249, %252 : vector<8x64xf32>
    %c1_126 = arith.constant 1 : index
    %c0_127 = arith.constant 0 : index
    %c0_128 = arith.constant 0 : index
    %254 = vector.load %arg4[%c1_126, %c0_127, %c0_128] : memref<2x64x256xf32, #tpu.memory_space<vmem>>, vector<1x64x256xf32>
    %255 = vector.shape_cast %254 : vector<1x64x256xf32> to vector<64x256xf32>
    %cst_129 = arith.constant dense<0.000000e+00> : vector<8x256xf32>
    %256 = tpu.matmul %253, %255, %cst_129 {dimension_numbers = #tpu.dot_dimension_numbers<[1], [0], [0], [1], [0, 0, 1, 1], [], []>} : vector<8x64xf32>, vector<64x256xf32>, vector<8x256xf32> -> vector<8x256xf32>
    %257 = vector.extract_strided_slice %256 {offsets = [0, 0], sizes = [8, 128], strides = [1, 1]} : vector<8x256xf32> to vector<8x128xf32>
    %258 = vector.extract_strided_slice %256 {offsets = [0, 128], sizes = [8, 128], strides = [1, 1]} : vector<8x256xf32> to vector<8x128xf32>
    %c1_130 = arith.constant 1 : index
    %c0_131 = arith.constant 0 : index
    %c0_132 = arith.constant 0 : index
    %259 = vector.load %arg5[%c1_130, %c0_131, %c0_132] : memref<2x4x128xf32, #tpu.memory_space<vmem>>, vector<1x4x128xf32>
    %260 = vector.shape_cast %259 : vector<1x4x128xf32> to vector<4x128xf32>
    %c1_133 = arith.constant 1 : index
    %c0_134 = arith.constant 0 : index
    %c0_135 = arith.constant 0 : index
    %261 = vector.load %arg14[%c1_133, %c0_134, %c0_135] : memref<2x8x128xf32, #tpu.memory_space<vmem>>, vector<1x8x128xf32>
    %262 = vector.shape_cast %261 : vector<1x8x128xf32> to vector<8x128xf32>
    %c1_136 = arith.constant 1 : index
    %c0_137 = arith.constant 0 : index
    %c0_138 = arith.constant 0 : index
    %263 = vector.load %arg6[%c1_136, %c0_137, %c0_138] : memref<2x1x128xf32, #tpu.memory_space<vmem>>, vector<1x1x128xf32>
    %264 = vector.shape_cast %263 : vector<1x1x128xf32> to vector<1x128xf32>
    %265 = vector.shape_cast %264 : vector<1x128xf32> to vector<1x128xf32>
    %266 = vector.broadcast %265 : vector<1x128xf32> to vector<8x128xf32>
    %267 = vector.extract_strided_slice %260 {offsets = [3, 0], sizes = [1, 128], strides = [1, 1]} : vector<4x128xf32> to vector<1x128xf32>
    %268 = vector.broadcast %267 : vector<1x128xf32> to vector<8x128xf32>
    %269 = arith.mulf %257, %268 : vector<8x128xf32>
    %270 = arith.addf %266, %269 : vector<8x128xf32>
    %c3_i32_139 = arith.constant 3 : i32
    %271 = tpu.dynamic_rotate %257 by %c3_i32_139 dim 0 : vector<8x128xf32>, i32 -> vector<8x128xf32>
    %c3_i32_140 = arith.constant 3 : i32
    %272 = vector.broadcast %c3_i32_140 : i32 to vector<8x128xi32>
    %273 = arith.cmpi slt, %5, %272 : vector<8x128xi32>
    %274 = arith.select %273, %262, %271 : vector<8x128xi1>, vector<8x128xf32>
    %275 = vector.extract_strided_slice %260 {offsets = [0, 0], sizes = [1, 128], strides = [1, 1]} : vector<4x128xf32> to vector<1x128xf32>
    %276 = vector.broadcast %275 : vector<1x128xf32> to vector<8x128xf32>
    %277 = arith.mulf %274, %276 : vector<8x128xf32>
    %278 = arith.addf %270, %277 : vector<8x128xf32>
    %c2_i32_141 = arith.constant 2 : i32
    %279 = tpu.dynamic_rotate %257 by %c2_i32_141 dim 0 : vector<8x128xf32>, i32 -> vector<8x128xf32>
    %c7_i32_142 = arith.constant 7 : i32
    %280 = tpu.dynamic_rotate %262 by %c7_i32_142 dim 0 : vector<8x128xf32>, i32 -> vector<8x128xf32>
    %c2_i32_143 = arith.constant 2 : i32
    %281 = vector.broadcast %c2_i32_143 : i32 to vector<8x128xi32>
    %282 = arith.cmpi slt, %5, %281 : vector<8x128xi32>
    %283 = arith.select %282, %280, %279 : vector<8x128xi1>, vector<8x128xf32>
    %284 = vector.extract_strided_slice %260 {offsets = [1, 0], sizes = [1, 128], strides = [1, 1]} : vector<4x128xf32> to vector<1x128xf32>
    %285 = vector.broadcast %284 : vector<1x128xf32> to vector<8x128xf32>
    %286 = arith.mulf %283, %285 : vector<8x128xf32>
    %287 = arith.addf %278, %286 : vector<8x128xf32>
    %c1_i32_144 = arith.constant 1 : i32
    %288 = tpu.dynamic_rotate %257 by %c1_i32_144 dim 0 : vector<8x128xf32>, i32 -> vector<8x128xf32>
    %c6_i32_145 = arith.constant 6 : i32
    %289 = tpu.dynamic_rotate %262 by %c6_i32_145 dim 0 : vector<8x128xf32>, i32 -> vector<8x128xf32>
    %c1_i32_146 = arith.constant 1 : i32
    %290 = vector.broadcast %c1_i32_146 : i32 to vector<8x128xi32>
    %291 = arith.cmpi slt, %5, %290 : vector<8x128xi32>
    %292 = arith.select %291, %289, %288 : vector<8x128xi1>, vector<8x128xf32>
    %293 = vector.extract_strided_slice %260 {offsets = [2, 0], sizes = [1, 128], strides = [1, 1]} : vector<4x128xf32> to vector<1x128xf32>
    %294 = vector.broadcast %293 : vector<1x128xf32> to vector<8x128xf32>
    %295 = arith.mulf %292, %294 : vector<8x128xf32>
    %296 = arith.addf %287, %295 : vector<8x128xf32>
    %c3_i32_147 = arith.constant 3 : i32
    %297 = vector.broadcast %c3_i32_147 : i32 to vector<8x128xi32>
    %298 = arith.cmpi slt, %6, %297 : vector<8x128xi32>
    %c3_i32_148 = arith.constant 3 : i32
    %299 = tpu.dynamic_rotate %257 by %c3_i32_148 dim 0 : vector<8x128xf32>, i32 -> vector<8x128xf32>
    %cst_149 = arith.constant 0.000000e+00 : f32
    %300 = vector.broadcast %cst_149 : f32 to vector<8x128xf32>
    %301 = arith.select %298, %299, %300 : vector<8x128xi1>, vector<8x128xf32>
    %c1_150 = arith.constant 1 : index
    %c0_151 = arith.constant 0 : index
    %c0_152 = arith.constant 0 : index
    %302 = vector.load %arg14[%c1_150, %c0_151, %c0_152] : memref<2x8x128xf32, #tpu.memory_space<vmem>>, vector<1x8x128xf32>
    %303 = vector.shape_cast %302 : vector<1x8x128xf32> to vector<8x128xf32>
    %304 = vector.shape_cast %301 : vector<8x128xf32> to vector<1x8x128xf32>
    tpu.vector_store %arg14[%c1_150, %c0_151, %c0_152], %304 {strides = array<i32>} : memref<2x8x128xf32, #tpu.memory_space<vmem>>, vector<1x8x128xf32>,
    %305 = arith.negf %296 : vector<8x128xf32>
    %306 = math.exp %305 : vector<8x128xf32>
    %cst_153 = arith.constant 1.000000e+00 : f32
    %307 = vector.broadcast %cst_153 : f32 to vector<8x128xf32>
    %308 = arith.addf %307, %306 : vector<8x128xf32>
    %309 = arith.divf %307, %308 : vector<8x128xf32>
    %310 = arith.mulf %296, %309 : vector<8x128xf32>
    %c1_154 = arith.constant 1 : index
    %c0_155 = arith.constant 0 : index
    %c0_156 = arith.constant 0 : index
    %311 = vector.load %arg7[%c1_154, %c0_155, %c0_156] : memref<2x128x160xf32, #tpu.memory_space<vmem>>, vector<1x128x160xf32>
    %312 = vector.shape_cast %311 : vector<1x128x160xf32> to vector<128x160xf32>
    %cst_157 = arith.constant dense<0.000000e+00> : vector<8x160xf32>
    %313 = tpu.matmul %310, %312, %cst_157 {dimension_numbers = #tpu.dot_dimension_numbers<[1], [0], [0], [1], [0, 0, 1, 1], [], []>} : vector<8x128xf32>, vector<128x160xf32>, vector<8x160xf32> -> vector<8x160xf32>
    %314 = vector.extract_strided_slice %313 {offsets = [0, 0], sizes = [8, 128], strides = [1, 1]} : vector<8x160xf32> to vector<8x128xf32>
    %c1_158 = arith.constant 1 : index
    %c0_159 = arith.constant 0 : index
    %c0_160 = arith.constant 0 : index
    %315 = vector.load %arg8[%c1_158, %c0_159, %c0_160] : memref<2x1x128xf32, #tpu.memory_space<vmem>>, vector<1x1x128xf32>
    %316 = vector.shape_cast %315 : vector<1x1x128xf32> to vector<1x128xf32>
    %317 = vector.broadcast %316 : vector<1x128xf32> to vector<8x128xf32>
    %318 = arith.addf %314, %317 : vector<8x128xf32>
    %cst_161 = arith.constant 0.000000e+00 : f32
    %319 = vector.broadcast %cst_161 : f32 to vector<8x128xf32>
    %320 = arith.maximumf %318, %319 : vector<8x128xf32>
    %321 = vector.broadcast %cst_161 : f32 to vector<8x128xf32>
    %322 = arith.subf %318, %321 : vector<8x128xf32>
    %323 = arith.cmpf one, %322, %322 : vector<8x128xf32>
    %324 = vector.broadcast %cst_161 : f32 to vector<8x128xf32>
    %325 = arith.addf %318, %324 : vector<8x128xf32>
    %326 = math.absf %322 : vector<8x128xf32>
    %cst_162 = arith.constant 0.000000e+00 : f32
    %327 = vector.broadcast %cst_162 : f32 to vector<8x128xf32>
    %328 = arith.subf %327, %326 : vector<8x128xf32>
    %329 = math.exp %328 : vector<8x128xf32>
    %330 = math.log1p %329 : vector<8x128xf32>
    %331 = arith.addf %320, %330 : vector<8x128xf32>
    %332 = arith.select %323, %325, %331 : vector<8x128xi1>, vector<8x128xf32>
    %333 = vector.extract_strided_slice %313 {offsets = [0, 128], sizes = [8, 16], strides = [1, 1]} : vector<8x160xf32> to vector<8x16xf32>
    %334 = vector.extract_strided_slice %313 {offsets = [0, 144], sizes = [8, 16], strides = [1, 1]} : vector<8x160xf32> to vector<8x16xf32>
    %c1_163 = arith.constant 1 : index
    %c0_164 = arith.constant 0 : index
    %c0_165 = arith.constant 0 : index
    %335 = vector.load %arg9[%c1_163, %c0_164, %c0_165] : memref<2x16x128xf32, #tpu.memory_space<vmem>>, vector<1x16x128xf32>
    %336 = vector.shape_cast %335 : vector<1x16x128xf32> to vector<16x128xf32>
    %337 = vector.shape_cast %332 : vector<8x128xf32> to vector<8x1x128xf32>
    %338 = vector.shape_cast %336 : vector<16x128xf32> to vector<1x16x128xf32>
    %339 = vector.broadcast %337 : vector<8x1x128xf32> to vector<8x16x128xf32>
    %340 = vector.broadcast %338 : vector<1x16x128xf32> to vector<8x16x128xf32>
    %341 = arith.mulf %339, %340 : vector<8x16x128xf32>
    %342 = math.exp %341 : vector<8x16x128xf32>
    %c0_166 = arith.constant 0 : index
    %c0_167 = arith.constant 0 : index
    %c0_168 = arith.constant 0 : index
    %343 = vector.load %arg15[%c0_166, %c0_167, %c0_168] : memref<8x16x128xf32, #tpu.memory_space<vmem>>, vector<8x16x128xf32>
    tpu.vector_store %arg15[%c0_166, %c0_167, %c0_168], %342 {strides = array<i32>} : memref<8x16x128xf32, #tpu.memory_space<vmem>>, vector<8x16x128xf32>,
    %344 = arith.mulf %332, %310 : vector<8x128xf32>
    %345 = vector.shape_cast %344 : vector<8x128xf32> to vector<8x1x128xf32>
    %346 = vector.shape_cast %333 : vector<8x16xf32> to vector<8x16x1xf32>
    %347 = vector.broadcast %345 : vector<8x1x128xf32> to vector<8x16x128xf32>
    %348 = vector.broadcast %346 : vector<8x16x1xf32> to vector<8x16x128xf32>
    %349 = arith.mulf %347, %348 : vector<8x16x128xf32>
    %c0_169 = arith.constant 0 : index
    %c0_170 = arith.constant 0 : index
    %c0_171 = arith.constant 0 : index
    %350 = vector.load %arg16[%c0_169, %c0_170, %c0_171] : memref<8x16x128xf32, #tpu.memory_space<vmem>>, vector<8x16x128xf32>
    tpu.vector_store %arg16[%c0_169, %c0_170, %c0_171], %349 {strides = array<i32>} : memref<8x16x128xf32, #tpu.memory_space<vmem>>, vector<8x16x128xf32>,
    %c1_172 = arith.constant 1 : index
    %c0_173 = arith.constant 0 : index
    %c0_174 = arith.constant 0 : index
    %351 = vector.load %arg13[%c1_172, %c0_173, %c0_174] : memref<2x16x128xf32, #tpu.memory_space<vmem>>, vector<1x16x128xf32>
    %352 = vector.shape_cast %351 : vector<1x16x128xf32> to vector<16x128xf32>
    %c0_i32_175 = arith.constant 0 : i32
    %353 = arith.index_cast %c0_i32_175 : i32 to index
    %c0_176 = arith.constant 0 : index
    %c0_177 = arith.constant 0 : index
    %354 = vector.load %arg15[%353, %c0_176, %c0_177] : memref<8x16x128xf32, #tpu.memory_space<vmem>>, vector<1x16x128xf32>
    %355 = vector.shape_cast %354 : vector<1x16x128xf32> to vector<16x128xf32>
    %356 = arith.mulf %355, %352 : vector<16x128xf32>
    %357 = arith.index_cast %c0_i32_175 : i32 to index
    %c0_178 = arith.constant 0 : index
    %c0_179 = arith.constant 0 : index
    %358 = vector.load %arg16[%357, %c0_178, %c0_179] : memref<8x16x128xf32, #tpu.memory_space<vmem>>, vector<1x16x128xf32>
    %359 = vector.shape_cast %358 : vector<1x16x128xf32> to vector<16x128xf32>
    %360 = arith.addf %356, %359 : vector<16x128xf32>
    %361 = arith.index_cast %c0_i32_175 : i32 to index
    %c0_180 = arith.constant 0 : index
    %c0_181 = arith.constant 0 : index
    %362 = vector.load %arg17[%361, %c0_180, %c0_181] : memref<8x16x128xf32, #tpu.memory_space<vmem>>, vector<1x16x128xf32>
    %363 = vector.shape_cast %362 : vector<1x16x128xf32> to vector<16x128xf32>
    %364 = vector.shape_cast %360 : vector<16x128xf32> to vector<1x16x128xf32>
    tpu.vector_store %arg17[%361, %c0_180, %c0_181], %364 {strides = array<i32>} : memref<8x16x128xf32, #tpu.memory_space<vmem>>, vector<1x16x128xf32>,
    %c1_i32_182 = arith.constant 1 : i32
    %365 = arith.index_cast %c1_i32_182 : i32 to index
    %c0_183 = arith.constant 0 : index
    %c0_184 = arith.constant 0 : index
    %366 = vector.load %arg15[%365, %c0_183, %c0_184] : memref<8x16x128xf32, #tpu.memory_space<vmem>>, vector<1x16x128xf32>
    %367 = vector.shape_cast %366 : vector<1x16x128xf32> to vector<16x128xf32>
    %368 = arith.mulf %367, %360 : vector<16x128xf32>
    %369 = arith.index_cast %c1_i32_182 : i32 to index
    %c0_185 = arith.constant 0 : index
    %c0_186 = arith.constant 0 : index
    %370 = vector.load %arg16[%369, %c0_185, %c0_186] : memref<8x16x128xf32, #tpu.memory_space<vmem>>, vector<1x16x128xf32>
    %371 = vector.shape_cast %370 : vector<1x16x128xf32> to vector<16x128xf32>
    %372 = arith.addf %368, %371 : vector<16x128xf32>
    %373 = arith.index_cast %c1_i32_182 : i32 to index
    %c0_187 = arith.constant 0 : index
    %c0_188 = arith.constant 0 : index
    %374 = vector.load %arg17[%373, %c0_187, %c0_188] : memref<8x16x128xf32, #tpu.memory_space<vmem>>, vector<1x16x128xf32>
    %375 = vector.shape_cast %374 : vector<1x16x128xf32> to vector<16x128xf32>
    %376 = vector.shape_cast %372 : vector<16x128xf32> to vector<1x16x128xf32>
    tpu.vector_store %arg17[%373, %c0_187, %c0_188], %376 {strides = array<i32>} : memref<8x16x128xf32, #tpu.memory_space<vmem>>, vector<1x16x128xf32>,
    %c2_i32_189 = arith.constant 2 : i32
    %377 = arith.index_cast %c2_i32_189 : i32 to index
    %c0_190 = arith.constant 0 : index
    %c0_191 = arith.constant 0 : index
    %378 = vector.load %arg15[%377, %c0_190, %c0_191] : memref<8x16x128xf32, #tpu.memory_space<vmem>>, vector<1x16x128xf32>
    %379 = vector.shape_cast %378 : vector<1x16x128xf32> to vector<16x128xf32>
    %380 = arith.mulf %379, %372 : vector<16x128xf32>
    %381 = arith.index_cast %c2_i32_189 : i32 to index
    %c0_192 = arith.constant 0 : index
    %c0_193 = arith.constant 0 : index
    %382 = vector.load %arg16[%381, %c0_192, %c0_193] : memref<8x16x128xf32, #tpu.memory_space<vmem>>, vector<1x16x128xf32>
    %383 = vector.shape_cast %382 : vector<1x16x128xf32> to vector<16x128xf32>
    %384 = arith.addf %380, %383 : vector<16x128xf32>
    %385 = arith.index_cast %c2_i32_189 : i32 to index
    %c0_194 = arith.constant 0 : index
    %c0_195 = arith.constant 0 : index
    %386 = vector.load %arg17[%385, %c0_194, %c0_195] : memref<8x16x128xf32, #tpu.memory_space<vmem>>, vector<1x16x128xf32>
    %387 = vector.shape_cast %386 : vector<1x16x128xf32> to vector<16x128xf32>
    %388 = vector.shape_cast %384 : vector<16x128xf32> to vector<1x16x128xf32>
    tpu.vector_store %arg17[%385, %c0_194, %c0_195], %388 {strides = array<i32>} : memref<8x16x128xf32, #tpu.memory_space<vmem>>, vector<1x16x128xf32>,
    %c3_i32_196 = arith.constant 3 : i32
    %389 = arith.index_cast %c3_i32_196 : i32 to index
    %c0_197 = arith.constant 0 : index
    %c0_198 = arith.constant 0 : index
    %390 = vector.load %arg15[%389, %c0_197, %c0_198] : memref<8x16x128xf32, #tpu.memory_space<vmem>>, vector<1x16x128xf32>
    %391 = vector.shape_cast %390 : vector<1x16x128xf32> to vector<16x128xf32>
    %392 = arith.mulf %391, %384 : vector<16x128xf32>
    %393 = arith.index_cast %c3_i32_196 : i32 to index
    %c0_199 = arith.constant 0 : index
    %c0_200 = arith.constant 0 : index
    %394 = vector.load %arg16[%393, %c0_199, %c0_200] : memref<8x16x128xf32, #tpu.memory_space<vmem>>, vector<1x16x128xf32>
    %395 = vector.shape_cast %394 : vector<1x16x128xf32> to vector<16x128xf32>
    %396 = arith.addf %392, %395 : vector<16x128xf32>
    %397 = arith.index_cast %c3_i32_196 : i32 to index
    %c0_201 = arith.constant 0 : index
    %c0_202 = arith.constant 0 : index
    %398 = vector.load %arg17[%397, %c0_201, %c0_202] : memref<8x16x128xf32, #tpu.memory_space<vmem>>, vector<1x16x128xf32>
    %399 = vector.shape_cast %398 : vector<1x16x128xf32> to vector<16x128xf32>
    %400 = vector.shape_cast %396 : vector<16x128xf32> to vector<1x16x128xf32>
    tpu.vector_store %arg17[%397, %c0_201, %c0_202], %400 {strides = array<i32>} : memref<8x16x128xf32, #tpu.memory_space<vmem>>, vector<1x16x128xf32>,
    %c4_i32_203 = arith.constant 4 : i32
    %401 = arith.index_cast %c4_i32_203 : i32 to index
    %c0_204 = arith.constant 0 : index
    %c0_205 = arith.constant 0 : index
    %402 = vector.load %arg15[%401, %c0_204, %c0_205] : memref<8x16x128xf32, #tpu.memory_space<vmem>>, vector<1x16x128xf32>
    %403 = vector.shape_cast %402 : vector<1x16x128xf32> to vector<16x128xf32>
    %404 = arith.mulf %403, %396 : vector<16x128xf32>
    %405 = arith.index_cast %c4_i32_203 : i32 to index
    %c0_206 = arith.constant 0 : index
    %c0_207 = arith.constant 0 : index
    %406 = vector.load %arg16[%405, %c0_206, %c0_207] : memref<8x16x128xf32, #tpu.memory_space<vmem>>, vector<1x16x128xf32>
    %407 = vector.shape_cast %406 : vector<1x16x128xf32> to vector<16x128xf32>
    %408 = arith.addf %404, %407 : vector<16x128xf32>
    %409 = arith.index_cast %c4_i32_203 : i32 to index
    %c0_208 = arith.constant 0 : index
    %c0_209 = arith.constant 0 : index
    %410 = vector.load %arg17[%409, %c0_208, %c0_209] : memref<8x16x128xf32, #tpu.memory_space<vmem>>, vector<1x16x128xf32>
    %411 = vector.shape_cast %410 : vector<1x16x128xf32> to vector<16x128xf32>
    %412 = vector.shape_cast %408 : vector<16x128xf32> to vector<1x16x128xf32>
    tpu.vector_store %arg17[%409, %c0_208, %c0_209], %412 {strides = array<i32>} : memref<8x16x128xf32, #tpu.memory_space<vmem>>, vector<1x16x128xf32>,
    %c5_i32_210 = arith.constant 5 : i32
    %413 = arith.index_cast %c5_i32_210 : i32 to index
    %c0_211 = arith.constant 0 : index
    %c0_212 = arith.constant 0 : index
    %414 = vector.load %arg15[%413, %c0_211, %c0_212] : memref<8x16x128xf32, #tpu.memory_space<vmem>>, vector<1x16x128xf32>
    %415 = vector.shape_cast %414 : vector<1x16x128xf32> to vector<16x128xf32>
    %416 = arith.mulf %415, %408 : vector<16x128xf32>
    %417 = arith.index_cast %c5_i32_210 : i32 to index
    %c0_213 = arith.constant 0 : index
    %c0_214 = arith.constant 0 : index
    %418 = vector.load %arg16[%417, %c0_213, %c0_214] : memref<8x16x128xf32, #tpu.memory_space<vmem>>, vector<1x16x128xf32>
    %419 = vector.shape_cast %418 : vector<1x16x128xf32> to vector<16x128xf32>
    %420 = arith.addf %416, %419 : vector<16x128xf32>
    %421 = arith.index_cast %c5_i32_210 : i32 to index
    %c0_215 = arith.constant 0 : index
    %c0_216 = arith.constant 0 : index
    %422 = vector.load %arg17[%421, %c0_215, %c0_216] : memref<8x16x128xf32, #tpu.memory_space<vmem>>, vector<1x16x128xf32>
    %423 = vector.shape_cast %422 : vector<1x16x128xf32> to vector<16x128xf32>
    %424 = vector.shape_cast %420 : vector<16x128xf32> to vector<1x16x128xf32>
    tpu.vector_store %arg17[%421, %c0_215, %c0_216], %424 {strides = array<i32>} : memref<8x16x128xf32, #tpu.memory_space<vmem>>, vector<1x16x128xf32>,
    %c6_i32_217 = arith.constant 6 : i32
    %425 = arith.index_cast %c6_i32_217 : i32 to index
    %c0_218 = arith.constant 0 : index
    %c0_219 = arith.constant 0 : index
    %426 = vector.load %arg15[%425, %c0_218, %c0_219] : memref<8x16x128xf32, #tpu.memory_space<vmem>>, vector<1x16x128xf32>
    %427 = vector.shape_cast %426 : vector<1x16x128xf32> to vector<16x128xf32>
    %428 = arith.mulf %427, %420 : vector<16x128xf32>
    %429 = arith.index_cast %c6_i32_217 : i32 to index
    %c0_220 = arith.constant 0 : index
    %c0_221 = arith.constant 0 : index
    %430 = vector.load %arg16[%429, %c0_220, %c0_221] : memref<8x16x128xf32, #tpu.memory_space<vmem>>, vector<1x16x128xf32>
    %431 = vector.shape_cast %430 : vector<1x16x128xf32> to vector<16x128xf32>
    %432 = arith.addf %428, %431 : vector<16x128xf32>
    %433 = arith.index_cast %c6_i32_217 : i32 to index
    %c0_222 = arith.constant 0 : index
    %c0_223 = arith.constant 0 : index
    %434 = vector.load %arg17[%433, %c0_222, %c0_223] : memref<8x16x128xf32, #tpu.memory_space<vmem>>, vector<1x16x128xf32>
    %435 = vector.shape_cast %434 : vector<1x16x128xf32> to vector<16x128xf32>
    %436 = vector.shape_cast %432 : vector<16x128xf32> to vector<1x16x128xf32>
    tpu.vector_store %arg17[%433, %c0_222, %c0_223], %436 {strides = array<i32>} : memref<8x16x128xf32, #tpu.memory_space<vmem>>, vector<1x16x128xf32>,
    %c7_i32_224 = arith.constant 7 : i32
    %437 = arith.index_cast %c7_i32_224 : i32 to index
    %c0_225 = arith.constant 0 : index
    %c0_226 = arith.constant 0 : index
    %438 = vector.load %arg15[%437, %c0_225, %c0_226] : memref<8x16x128xf32, #tpu.memory_space<vmem>>, vector<1x16x128xf32>
    %439 = vector.shape_cast %438 : vector<1x16x128xf32> to vector<16x128xf32>
    %440 = arith.mulf %439, %432 : vector<16x128xf32>
    %441 = arith.index_cast %c7_i32_224 : i32 to index
    %c0_227 = arith.constant 0 : index
    %c0_228 = arith.constant 0 : index
    %442 = vector.load %arg16[%441, %c0_227, %c0_228] : memref<8x16x128xf32, #tpu.memory_space<vmem>>, vector<1x16x128xf32>
    %443 = vector.shape_cast %442 : vector<1x16x128xf32> to vector<16x128xf32>
    %444 = arith.addf %440, %443 : vector<16x128xf32>
    %445 = arith.index_cast %c7_i32_224 : i32 to index
    %c0_229 = arith.constant 0 : index
    %c0_230 = arith.constant 0 : index
    %446 = vector.load %arg17[%445, %c0_229, %c0_230] : memref<8x16x128xf32, #tpu.memory_space<vmem>>, vector<1x16x128xf32>
    %447 = vector.shape_cast %446 : vector<1x16x128xf32> to vector<16x128xf32>
    %448 = vector.shape_cast %444 : vector<16x128xf32> to vector<1x16x128xf32>
    tpu.vector_store %arg17[%445, %c0_229, %c0_230], %448 {strides = array<i32>} : memref<8x16x128xf32, #tpu.memory_space<vmem>>, vector<1x16x128xf32>,
    %c8_i32_231 = arith.constant 8 : i32
    %c1_232 = arith.constant 1 : index
    %c0_233 = arith.constant 0 : index
    %c0_234 = arith.constant 0 : index
    %449 = vector.load %arg13[%c1_232, %c0_233, %c0_234] : memref<2x16x128xf32, #tpu.memory_space<vmem>>, vector<1x16x128xf32>
    %450 = vector.shape_cast %449 : vector<1x16x128xf32> to vector<16x128xf32>
    %451 = vector.shape_cast %444 : vector<16x128xf32> to vector<1x16x128xf32>
    tpu.vector_store %arg13[%c1_232, %c0_233, %c0_234], %451 {strides = array<i32>} : memref<2x16x128xf32, #tpu.memory_space<vmem>>, vector<1x16x128xf32>,
    %c0_235 = arith.constant 0 : index
    %c0_236 = arith.constant 0 : index
    %c0_237 = arith.constant 0 : index
    %452 = vector.load %arg17[%c0_235, %c0_236, %c0_237] : memref<8x16x128xf32, #tpu.memory_space<vmem>>, vector<8x16x128xf32>
    %453 = vector.shape_cast %334 : vector<8x16xf32> to vector<8x16x1xf32>
    %454 = vector.broadcast %453 : vector<8x16x1xf32> to vector<8x16x128xf32>
    %455 = arith.mulf %452, %454 : vector<8x16x128xf32>
    %cst_238 = arith.constant dense<0.000000e+00> : vector<8x128xf32>
    %456 = vector.multi_reduction <add>, %455, %cst_238 [1] : vector<8x16x128xf32> to vector<8x128xf32>
    %c1_239 = arith.constant 1 : index
    %c0_240 = arith.constant 0 : index
    %c0_241 = arith.constant 0 : index
    %457 = vector.load %arg10[%c1_239, %c0_240, %c0_241] : memref<2x1x128xf32, #tpu.memory_space<vmem>>, vector<1x1x128xf32>
    %458 = vector.shape_cast %457 : vector<1x1x128xf32> to vector<1x128xf32>
    %459 = vector.broadcast %458 : vector<1x128xf32> to vector<8x128xf32>
    %460 = arith.mulf %310, %459 : vector<8x128xf32>
    %461 = arith.addf %456, %460 : vector<8x128xf32>
    %462 = arith.negf %258 : vector<8x128xf32>
    %463 = math.exp %462 : vector<8x128xf32>
    %cst_242 = arith.constant 1.000000e+00 : f32
    %464 = vector.broadcast %cst_242 : f32 to vector<8x128xf32>
    %465 = arith.addf %464, %463 : vector<8x128xf32>
    %466 = arith.divf %464, %465 : vector<8x128xf32>
    %467 = arith.mulf %258, %466 : vector<8x128xf32>
    %468 = arith.mulf %461, %467 : vector<8x128xf32>
    %c1_243 = arith.constant 1 : index
    %c0_244 = arith.constant 0 : index
    %c0_245 = arith.constant 0 : index
    %469 = vector.load %arg11[%c1_243, %c0_244, %c0_245] : memref<2x128x64xf32, #tpu.memory_space<vmem>>, vector<1x128x64xf32>
    %470 = vector.shape_cast %469 : vector<1x128x64xf32> to vector<128x64xf32>
    %cst_246 = arith.constant dense<0.000000e+00> : vector<8x64xf32>
    %471 = tpu.matmul %468, %470, %cst_246 {dimension_numbers = #tpu.dot_dimension_numbers<[1], [0], [0], [1], [0, 0, 1, 1], [], []>} : vector<8x128xf32>, vector<128x64xf32>, vector<8x64xf32> -> vector<8x64xf32>
    %472 = arith.addf %239, %471 : vector<8x64xf32>
    %c0_247 = arith.constant 0 : index
    %c0_248 = arith.constant 0 : index
    %c0_249 = arith.constant 0 : index
    %473 = vector.load %arg12[%c0_247, %c0_248, %c0_249] : memref<1x8x64xf32, #tpu.memory_space<vmem>>, vector<1x8x64xf32>
    %474 = vector.shape_cast %473 : vector<1x8x64xf32> to vector<8x64xf32>
    %475 = vector.shape_cast %472 : vector<8x64xf32> to vector<1x8x64xf32>
    tpu.vector_store %arg12[%c0_247, %c0_248, %c0_249], %475 {strides = array<i32>} : memref<1x8x64xf32, #tpu.memory_space<vmem>>, vector<1x8x64xf32>,
    return
  }
  func.func @transform_0(%arg0: i32, %arg1: i32) -> (i32, i32, i32) {
    %c0_i32 = arith.constant 0 : i32
    %c0_i32_0 = arith.constant 0 : i32
    return %arg0, %arg1, %c0_i32 : i32, i32, i32
  }
  func.func @transform_1(%arg0: i32, %arg1: i32) -> (i32, i32, i32) {
    %c0_i32 = arith.constant 0 : i32
    %c0_i32_0 = arith.constant 0 : i32
    %c0_i32_1 = arith.constant 0 : i32
    %c0_i32_2 = arith.constant 0 : i32
    return %c0_i32, %c0_i32_0, %c0_i32_1 : i32, i32, i32
  }
  func.func @transform_2(%arg0: i32, %arg1: i32) -> (i32, i32, i32) {
    %c0_i32 = arith.constant 0 : i32
    %c0_i32_0 = arith.constant 0 : i32
    %c0_i32_1 = arith.constant 0 : i32
    %c0_i32_2 = arith.constant 0 : i32
    return %c0_i32, %c0_i32_0, %c0_i32_1 : i32, i32, i32
  }
  func.func @transform_3(%arg0: i32, %arg1: i32) -> (i32, i32, i32) {
    %c0_i32 = arith.constant 0 : i32
    %c0_i32_0 = arith.constant 0 : i32
    %c0_i32_1 = arith.constant 0 : i32
    %c0_i32_2 = arith.constant 0 : i32
    return %c0_i32, %c0_i32_0, %c0_i32_1 : i32, i32, i32
  }
  func.func @transform_4(%arg0: i32, %arg1: i32) -> (i32, i32, i32) {
    %c0_i32 = arith.constant 0 : i32
    %c0_i32_0 = arith.constant 0 : i32
    %c0_i32_1 = arith.constant 0 : i32
    %c0_i32_2 = arith.constant 0 : i32
    return %c0_i32, %c0_i32_0, %c0_i32_1 : i32, i32, i32
  }
  func.func @transform_5(%arg0: i32, %arg1: i32) -> (i32, i32, i32) {
    %c0_i32 = arith.constant 0 : i32
    %c0_i32_0 = arith.constant 0 : i32
    %c0_i32_1 = arith.constant 0 : i32
    %c0_i32_2 = arith.constant 0 : i32
    return %c0_i32, %c0_i32_0, %c0_i32_1 : i32, i32, i32
  }
  func.func @transform_6(%arg0: i32, %arg1: i32) -> (i32, i32, i32) {
    %c0_i32 = arith.constant 0 : i32
    %c0_i32_0 = arith.constant 0 : i32
    %c0_i32_1 = arith.constant 0 : i32
    %c0_i32_2 = arith.constant 0 : i32
    return %c0_i32, %c0_i32_0, %c0_i32_1 : i32, i32, i32
  }
  func.func @transform_7(%arg0: i32, %arg1: i32) -> (i32, i32, i32) {
    %c0_i32 = arith.constant 0 : i32
    %c0_i32_0 = arith.constant 0 : i32
    %c0_i32_1 = arith.constant 0 : i32
    %c0_i32_2 = arith.constant 0 : i32
    return %c0_i32, %c0_i32_0, %c0_i32_1 : i32, i32, i32
  }
  func.func @transform_8(%arg0: i32, %arg1: i32) -> (i32, i32, i32) {
    %c0_i32 = arith.constant 0 : i32
    %c0_i32_0 = arith.constant 0 : i32
    %c0_i32_1 = arith.constant 0 : i32
    %c0_i32_2 = arith.constant 0 : i32
    return %c0_i32, %c0_i32_0, %c0_i32_1 : i32, i32, i32
  }
  func.func @transform_9(%arg0: i32, %arg1: i32) -> (i32, i32, i32) {
    %c0_i32 = arith.constant 0 : i32
    %c0_i32_0 = arith.constant 0 : i32
    %c0_i32_1 = arith.constant 0 : i32
    %c0_i32_2 = arith.constant 0 : i32
    return %c0_i32, %c0_i32_0, %c0_i32_1 : i32, i32, i32
  }
  func.func @transform_10(%arg0: i32, %arg1: i32) -> (i32, i32, i32) {
    %c0_i32 = arith.constant 0 : i32
    %c0_i32_0 = arith.constant 0 : i32
    return %arg0, %arg1, %c0_i32 : i32, i32, i32
  }
}

</mosaic_0001>

<llo_original>
// kernel: model_forward.1
$region0: #{model_forward.1}
  #allocation0 [shape = 'u32[]', space=smem, size = 0x4, offset = 0x4, fixed_abs, tag = 'smem constant byte address 0x4 - core index']
  #allocation1 [shape = 'u32[72,128]{1,0:T(1,128)}', space=vmem, size = 0x9000, scoped, tag = 'internal scratch']
  #allocation2 [shape = 'f32[2,16,128]{2,1,0:T(8,128)}', space=vmem, size = 0x4000, scoped, tag = 'scratch operand']
  #allocation3 [shape = 'f32[2,8,128]{2,1,0:T(8,128)}', space=vmem, size = 0x2000, scoped, tag = 'scratch operand']
  #allocation4 [shape = 'f32[8,16,128]{2,1,0:T(8,128)}', space=vmem, size = 0x10000, scoped, tag = 'scratch operand']
  #allocation5 [shape = 'f32[8,16,128]{2,1,0:T(8,128)}', space=vmem, size = 0x10000, scoped, tag = 'scratch operand']
  #allocation6 [shape = 'f32[8,16,128]{2,1,0:T(8,128)}', space=vmem, size = 0x10000, scoped, tag = 'scratch operand']
  %s0 = inlined_call_operand.vmem [shape: f32[2,32,64], index: 0, kind: input, shape index: {}]
  %s1 = inlined_call_operand.vmem [shape: f32[2,1,64], index: 1, kind: input, shape index: {}]
  %s2 = inlined_call_operand.vmem [shape: f32[2,64,256], index: 2, kind: input, shape index: {}]
  %s3 = inlined_call_operand.vmem [shape: f32[2,4,128], index: 3, kind: input, shape index: {}]
  %s4 = inlined_call_operand.vmem [shape: f32[2,1,128], index: 4, kind: input, shape index: {}]
  %s5 = inlined_call_operand.vmem [shape: f32[2,128,160], index: 5, kind: input, shape index: {}]
  %s6 = inlined_call_operand.vmem [shape: f32[2,1,128], index: 6, kind: input, shape index: {}]
  %s7 = inlined_call_operand.vmem [shape: f32[2,16,128], index: 7, kind: input, shape index: {}]
  %s8 = inlined_call_operand.vmem [shape: f32[2,1,128], index: 8, kind: input, shape index: {}]
  %s9 = inlined_call_operand.vmem [shape: f32[2,128,64], index: 9, kind: input, shape index: {}]
  %s10 = inlined_call_operand.hbm [shape: f32[2,32,64], index: 10, kind: output, shape index: {}]
  %s11 = sld [smem:[#allocation0]]
  $region77: #{model_forward.1} parent=0
    _
  %s13 = ssub.s32 1, %s11
  %s14 = scalar_select 0, %s13, %s11
  $region1: #{model_forward.1} parent=0
    #allocation7 [shape = 'u8[8192]{0}', space=vmem, size = 0x2000, scoped, tag = 'output window, operand 0']
    #allocation8 [shape = 's32[2]{0}', space=sflag, size = 0x8, scoped, tag = 'scoped memory for model_forward.1']
    %15 = vsyncpa [#allocation8], 0
    %s16 = scalar_lea.sflag [#allocation8], 1
    %17 = vsyncpa %s16, 0
    loop: start=0, step=1, limit=10
    $region2: #{model_forward.1} parent=1 // loop_pre_header
      _
    $region3: #{model_forward.1} parent=1 // loop_header
      %s19 = sphi 0, %s23
      %p20 = scmp.ge.s32.totalorder %s19, 10
      %s26 = sphi 0, %s38
      %s27 = sphi 0, %s34
      %s28 = sphi 0, %s26
      %s29 = sphi 0, %s27
      %s30 = sphi 0, %s28
      %s31 = sphi 0, %s29
      %s43 = sphi 0, %s45
      %s46 = sphi 0, %s43
      %s47 = sphi 0, %s46
      %s63 = sphi 0, %s47
      %s67 = sphi 0, %s67
      %s69 = sphi 0, %s67
      %s70 = sphi 0, %s69
      %s84 = sphi 0, %s70
      %s88 = sphi 0, %s88
      %s90 = sphi 0, %s88
      %s91 = sphi 0, %s90
      %s105 = sphi 0, %s91
      %s109 = sphi 0, %s109
      %s111 = sphi 0, %s109
      %s112 = sphi 0, %s111
      %s126 = sphi 0, %s112
      %s130 = sphi 0, %s130
      %s132 = sphi 0, %s130
      %s133 = sphi 0, %s132
      %s147 = sphi 0, %s133
      %s151 = sphi 0, %s151
      %s153 = sphi 0, %s151
      %s154 = sphi 0, %s153
      %s168 = sphi 0, %s154
      %s172 = sphi 0, %s172
      %s174 = sphi 0, %s172
      %s175 = sphi 0, %s174
      %s189 = sphi 0, %s175
      %s193 = sphi 0, %s193
      %s195 = sphi 0, %s193
      %s196 = sphi 0, %s195
      %s210 = sphi 0, %s196
      %s214 = sphi 0, %s214
      %s216 = sphi 0, %s214
      %s217 = sphi 0, %s216
      %s231 = sphi 0, %s217
      %s235 = sphi 0, %s235
      %s237 = sphi 0, %s235
      %s238 = sphi 0, %s237
      %s252 = sphi 0, %s238
      %s260 = sphi 0, %s262
      %s263 = sphi 0, %s260
      %s264 = sphi 0, %s263
      %s280 = sphi 0, %s264
    $region4: #{model_forward.1} parent=1 // loop_header_branch
      %22 = sbr.rel (%p20) target = $region8
    $region5: #{model_forward.1} parent=1 // loop_body
      %s24 = ssub.s32 %s19, 1
      %s25 = ssub.s32 %s19, 2
      %s32 = sadd.s32 1, %s27
      %p33 = scmp.ge.s32.totalorder %s32, 4
      %s34 = scalar_select %p33, 0, %s32
      %s35 = sadd.s32 1, %s26
      %s36 = scalar_select %p33, %s35, %s26
      %p37 = scmp.ge.s32.totalorder %s36, 2
      %s38 = scalar_select %p37, 0, %s36
      %s39 = ssub.s32 %s26, %s38
      %s40 = ssub.s32 %s27, %s34
      %s41 = sor.u32 %s39, %s40
      %p42 = scmp.eq.s32.totalorder %s41, 0
      %s44 = sadd.s32 %s43, 1
      %s45 = scalar_select %p42, %s43, %s44
      %p48 = pneg %p42
      %p49 = scmp.eq.s32.totalorder %s19, 7
      %p50 = por %p48, %p49
      %p51 = scmp.ne.s32.totalorder %s43, %s46
      %p52 = scmp.eq.s32.totalorder %s19, 0
      %p53 = por %p51, %p52
      %p54 = scmp.ne.s32.totalorder %s43, %s46
      %p55 = scmp.eq.s32.totalorder %s24, 7
      %p56 = por %p54, %p55
      %p57 = scmp.ne.s32.totalorder %s46, %s47
      %p58 = scmp.eq.s32.totalorder %s24, 0
      %p59 = por %p57, %p58
      %p60 = scmp.ne.s32.totalorder %s46, %s47
      %p61 = scmp.eq.s32.totalorder %s25, 7
      %p62 = por %p60, %p61
      %p64 = scmp.ne.s32.totalorder %s47, %s63
      %p65 = scmp.eq.s32.totalorder %s25, 0
      %p66 = por %p64, %p65
      %s68 = sadd.s32 %s67, 1
      %p71 = scmp.eq.s32.totalorder %s19, 7
      %p72 = scmp.ne.s32.totalorder %s67, %s69
      %p73 = scmp.eq.s32.totalorder %s19, 0
      %p74 = por %p72, %p73
      %p75 = scmp.ne.s32.totalorder %s67, %s69
      %p76 = scmp.eq.s32.totalorder %s24, 7
      %p77 = por %p75, %p76
      %p78 = scmp.ne.s32.totalorder %s69, %s70
      %p79 = scmp.eq.s32.totalorder %s24, 0
      %p80 = por %p78, %p79
      %p81 = scmp.ne.s32.totalorder %s69, %s70
      %p82 = scmp.eq.s32.totalorder %s25, 7
      %p83 = por %p81, %p82
      %p85 = scmp.ne.s32.totalorder %s70, %s84
      %p86 = scmp.eq.s32.totalorder %s25, 0
      %p87 = por %p85, %p86
      %s89 = sadd.s32 %s88, 1
      %p92 = scmp.eq.s32.totalorder %s19, 7
      %p93 = scmp.ne.s32.totalorder %s88, %s90
      %p94 = scmp.eq.s32.totalorder %s19, 0
      %p95 = por %p93, %p94
      %p96 = scmp.ne.s32.totalorder %s88, %s90
      %p97 = scmp.eq.s32.totalorder %s24, 7
      %p98 = por %p96, %p97
      %p99 = scmp.ne.s32.totalorder %s90, %s91
      %p100 = scmp.eq.s32.totalorder %s24, 0
      %p101 = por %p99, %p100
      %p102 = scmp.ne.s32.totalorder %s90, %s91
      %p103 = scmp.eq.s32.totalorder %s25, 7
      %p104 = por %p102, %p103
      %p106 = scmp.ne.s32.totalorder %s91, %s105
      %p107 = scmp.eq.s32.totalorder %s25, 0
      %p108 = por %p106, %p107
      %s110 = sadd.s32 %s109, 1
      %p113 = scmp.eq.s32.totalorder %s19, 7
      %p114 = scmp.ne.s32.totalorder %s109, %s111
      %p115 = scmp.eq.s32.totalorder %s19, 0
      %p116 = por %p114, %p115
      %p117 = scmp.ne.s32.totalorder %s109, %s111
      %p118 = scmp.eq.s32.totalorder %s24, 7
      %p119 = por %p117, %p118
      %p120 = scmp.ne.s32.totalorder %s111, %s112
      %p121 = scmp.eq.s32.totalorder %s24, 0
      %p122 = por %p120, %p121
      %p123 = scmp.ne.s32.totalorder %s111, %s112
      %p124 = scmp.eq.s32.totalorder %s25, 7
      %p125 = por %p123, %p124
      %p127 = scmp.ne.s32.totalorder %s112, %s126
      %p128 = scmp.eq.s32.totalorder %s25, 0
      %p129 = por %p127, %p128
      %s131 = sadd.s32 %s130, 1
      %p134 = scmp.eq.s32.totalorder %s19, 7
      %p135 = scmp.ne.s32.totalorder %s130, %s132
      %p136 = scmp.eq.s32.totalorder %s19, 0
      %p137 = por %p135, %p136
      %p138 = scmp.ne.s32.totalorder %s130, %s132
      %p139 = scmp.eq.s32.totalorder %s24, 7
      %p140 = por %p138, %p139
      %p141 = scmp.ne.s32.totalorder %s132, %s133
      %p142 = scmp.eq.s32.totalorder %s24, 0
      %p143 = por %p141, %p142
      %p144 = scmp.ne.s32.totalorder %s132, %s133
      %p145 = scmp.eq.s32.totalorder %s25, 7
      %p146 = por %p144, %p145
      %p148 = scmp.ne.s32.totalorder %s133, %s147
      %p149 = scmp.eq.s32.totalorder %s25, 0
      %p150 = por %p148, %p149
      %s152 = sadd.s32 %s151, 1
      %p155 = scmp.eq.s32.totalorder %s19, 7
      %p156 = scmp.ne.s32.totalorder %s151, %s153
      %p157 = scmp.eq.s32.totalorder %s19, 0
      %p158 = por %p156, %p157
      %p159 = scmp.ne.s32.totalorder %s151, %s153
      %p160 = scmp.eq.s32.totalorder %s24, 7
      %p161 = por %p159, %p160
      %p162 = scmp.ne.s32.totalorder %s153, %s154
      %p163 = scmp.eq.s32.totalorder %s24, 0
      %p164 = por %p162, %p163
      %p165 = scmp.ne.s32.totalorder %s153, %s154
      %p166 = scmp.eq.s32.totalorder %s25, 7
      %p167 = por %p165, %p166
      %p169 = scmp.ne.s32.totalorder %s154, %s168
      %p170 = scmp.eq.s32.totalorder %s25, 0
      %p171 = por %p169, %p170
      %s173 = sadd.s32 %s172, 1
      %p176 = scmp.eq.s32.totalorder %s19, 7
      %p177 = scmp.ne.s32.totalorder %s172, %s174
      %p178 = scmp.eq.s32.totalorder %s19, 0
      %p179 = por %p177, %p178
      %p180 = scmp.ne.s32.totalorder %s172, %s174
      %p181 = scmp.eq.s32.totalorder %s24, 7
      %p182 = por %p180, %p181
      %p183 = scmp.ne.s32.totalorder %s174, %s175
      %p184 = scmp.eq.s32.totalorder %s24, 0
      %p185 = por %p183, %p184
      %p186 = scmp.ne.s32.totalorder %s174, %s175
      %p187 = scmp.eq.s32.totalorder %s25, 7
      %p188 = por %p186, %p187
      %p190 = scmp.ne.s32.totalorder %s175, %s189
      %p191 = scmp.eq.s32.totalorder %s25, 0
      %p192 = por %p190, %p191
      %s194 = sadd.s32 %s193, 1
      %p197 = scmp.eq.s32.totalorder %s19, 7
      %p198 = scmp.ne.s32.totalorder %s193, %s195
      %p199 = scmp.eq.s32.totalorder %s19, 0
      %p200 = por %p198, %p199
      %p201 = scmp.ne.s32.totalorder %s193, %s195
      %p202 = scmp.eq.s32.totalorder %s24, 7
      %p203 = por %p201, %p202
      %p204 = scmp.ne.s32.totalorder %s195, %s196
      %p205 = scmp.eq.s32.totalorder %s24, 0
      %p206 = por %p204, %p205
      %p207 = scmp.ne.s32.totalorder %s195, %s196
      %p208 = scmp.eq.s32.totalorder %s25, 7
      %p209 = por %p207, %p208
      %p211 = scmp.ne.s32.totalorder %s196, %s210
      %p212 = scmp.eq.s32.totalorder %s25, 0
      %p213 = por %p211, %p212
      %s215 = sadd.s32 %s214, 1
      %p218 = scmp.eq.s32.totalorder %s19, 7
      %p219 = scmp.ne.s32.totalorder %s214, %s216
      %p220 = scmp.eq.s32.totalorder %s19, 0
      %p221 = por %p219, %p220
      %p222 = scmp.ne.s32.totalorder %s214, %s216
      %p223 = scmp.eq.s32.totalorder %s24, 7
      %p224 = por %p222, %p223
      %p225 = scmp.ne.s32.totalorder %s216, %s217
      %p226 = scmp.eq.s32.totalorder %s24, 0
      %p227 = por %p225, %p226
      %p228 = scmp.ne.s32.totalorder %s216, %s217
      %p229 = scmp.eq.s32.totalorder %s25, 7
      %p230 = por %p228, %p229
      %p232 = scmp.ne.s32.totalorder %s217, %s231
      %p233 = scmp.eq.s32.totalorder %s25, 0
      %p234 = por %p232, %p233
      %s236 = sadd.s32 %s235, 1
      %p239 = scmp.eq.s32.totalorder %s19, 7
      %p240 = scmp.ne.s32.totalorder %s235, %s237
      %p241 = scmp.eq.s32.totalorder %s19, 0
      %p242 = por %p240, %p241
      %p243 = scmp.ne.s32.totalorder %s235, %s237
      %p244 = scmp.eq.s32.totalorder %s24, 7
      %p245 = por %p243, %p244
      %p246 = scmp.ne.s32.totalorder %s237, %s238
      %p247 = scmp.eq.s32.totalorder %s24, 0
      %p248 = por %p246, %p247
      %p249 = scmp.ne.s32.totalorder %s237, %s238
      %p250 = scmp.eq.s32.totalorder %s25, 7
      %p251 = por %p249, %p250
      %p253 = scmp.ne.s32.totalorder %s238, %s252
      %p254 = scmp.eq.s32.totalorder %s25, 0
      %p255 = por %p253, %p254
      %s256 = ssub.s32 %s26, %s38
      %s257 = ssub.s32 %s27, %s34
      %s258 = sor.u32 %s256, %s257
      %p259 = scmp.eq.s32.totalorder %s258, 0
      %s261 = sadd.s32 %s260, 1
      %s262 = scalar_select %p259, %s260, %s261
      %p265 = pneg %p259
      %p266 = scmp.eq.s32.totalorder %s19, 7
      %p267 = por %p265, %p266
      %p268 = scmp.ne.s32.totalorder %s260, %s263
      %p269 = scmp.eq.s32.totalorder %s19, 0
      %p270 = por %p268, %p269
      %p271 = scmp.ne.s32.totalorder %s260, %s263
      %p272 = scmp.eq.s32.totalorder %s24, 7
      %p273 = por %p271, %p272
      %p274 = scmp.ne.s32.totalorder %s263, %s264
      %p275 = scmp.eq.s32.totalorder %s24, 0
      %p276 = por %p274, %p275
      %p277 = scmp.ne.s32.totalorder %s263, %s264
      %p278 = scmp.eq.s32.totalorder %s25, 7
      %p279 = por %p277, %p278
      %p281 = scmp.ne.s32.totalorder %s264, %s280
      %p282 = scmp.eq.s32.totalorder %s25, 0
      %p283 = por %p281, %p282
      %p284 = scmp.le.s32.totalorder 1, %s19
      %p285 = scmp.lt.s32.totalorder %s19, 9
      %p286 = pnand %p284, %p285
      %p287 = pneg %p286
      // Predicated region
      $region9: #{model_forward.1} parent=5 // pred_check
        _
      $region10: #{model_forward.1} parent=5 // pred_check_branch
        %289 = sbr.rel (%p286) target = $region12
      $region11: #{model_forward.1} parent=5 // pred_region
        %s290 = ssub.s32 %s19, 1
        // Predicated region
        $region13: #{model_forward.1} parent=11 // pred_check
          %p291 = pneg %p80
        $region14: #{model_forward.1} parent=11 // pred_check_branch
          %293 = sbr.rel (%p291) target = $region16
        $region15: #{model_forward.1} parent=11 // pred_region
          _
        $region16: #{model_forward.1} parent=11 // pred_fallthru
          _
        // Predicated region
        $region17: #{model_forward.1} parent=11 // pred_check
          %p294 = pneg %p101
        $region18: #{model_forward.1} parent=11 // pred_check_branch
          %296 = sbr.rel (%p294) target = $region20
        $region19: #{model_forward.1} parent=11 // pred_region
          _
        $region20: #{model_forward.1} parent=11 // pred_fallthru
          _
        // Predicated region
        $region21: #{model_forward.1} parent=11 // pred_check
          %p297 = pneg %p122
        $region22: #{model_forward.1} parent=11 // pred_check_branch
          %299 = sbr.rel (%p297) target = $region24
        $region23: #{model_forward.1} parent=11 // pred_region
          _
        $region24: #{model_forward.1} parent=11 // pred_fallthru
          _
        // Predicated region
        $region25: #{model_forward.1} parent=11 // pred_check
          %p300 = pneg %p143
        $region26: #{model_forward.1} parent=11 // pred_check_branch
          %302 = sbr.rel (%p300) target = $region28
        $region27: #{model_forward.1} parent=11 // pred_region
          _
        $region28: #{model_forward.1} parent=11 // pred_fallthru
          _
        // Predicated region
        $region29: #{model_forward.1} parent=11 // pred_check
          %p303 = pneg %p164
        $region30: #{model_forward.1} parent=11 // pred_check_branch
          %305 = sbr.rel (%p303) target = $region32
        $region31: #{model_forward.1} parent=11 // pred_region
          _
        $region32: #{model_forward.1} parent=11 // pred_fallthru
          _
        // Predicated region
        $region33: #{model_forward.1} parent=11 // pred_check
          %p306 = pneg %p185
        $region34: #{model_forward.1} parent=11 // pred_check_branch
          %308 = sbr.rel (%p306) target = $region36
        $region35: #{model_forward.1} parent=11 // pred_region
          _
        $region36: #{model_forward.1} parent=11 // pred_fallthru
          _
        // Predicated region
        $region37: #{model_forward.1} parent=11 // pred_check
          %p309 = pneg %p206
        $region38: #{model_forward.1} parent=11 // pred_check_branch
          %311 = sbr.rel (%p309) target = $region40
        $region39: #{model_forward.1} parent=11 // pred_region
          _
        $region40: #{model_forward.1} parent=11 // pred_fallthru
          _
        // Predicated region
        $region41: #{model_forward.1} parent=11 // pred_check
          %p312 = pneg %p227
        $region42: #{model_forward.1} parent=11 // pred_check_branch
          %314 = sbr.rel (%p312) target = $region44
        $region43: #{model_forward.1} parent=11 // pred_region
          _
        $region44: #{model_forward.1} parent=11 // pred_fallthru
          _
        // Predicated region
        $region45: #{model_forward.1} parent=11 // pred_check
          %p315 = pneg %p248
        $region46: #{model_forward.1} parent=11 // pred_check_branch
          %317 = sbr.rel (%p315) target = $region48
        $region47: #{model_forward.1} parent=11 // pred_region
          _
        $region48: #{model_forward.1} parent=11 // pred_fallthru
          _
      $region12: #{model_forward.1} parent=5 // pred_fallthru
        _
      %p318 = scmp.lt.s32.totalorder %s19, 8
      // Predicated region
      $region49: #{model_forward.1} parent=5 // pred_check
        %p319 = pneg %p318
      $region50: #{model_forward.1} parent=5 // pred_check_branch
        %321 = sbr.rel (%p319) target = $region52
      $region51: #{model_forward.1} parent=5 // pred_region
        // Predicated region
        $region53: #{model_forward.1} parent=51 // pred_check
          %p322 = pneg %p53
        $region54: #{model_forward.1} parent=51 // pred_check_branch
          %324 = sbr.rel (%p322) target = $region56
        $region55: #{model_forward.1} parent=51 // pred_region
          %p325 = scmp.lt.s32.totalorder %s26, 1
          %s326 = scalar_select %p325, %s26, 1
          %p327 = scmp.lt.s32.totalorder %s27, 3
          %s328 = scalar_select %p327, %s27, 3
          %s329 = smul.addr %s326, 4
          %s330 = sadd.s32 %s328, %s329
          %s331 = smul.addr %s330, 8
          %s332 = scalar_lea.vmem %s0, %s331
        $region56: #{model_forward.1} parent=51 // pred_fallthru
          _
      $region52: #{model_forward.1} parent=5 // pred_fallthru
        _
      %p333 = scmp.le.s32.totalorder 1, %s19
      %p334 = scmp.lt.s32.totalorder %s19, 9
      %p335 = pnand %p333, %p334
      %p336 = pneg %p335
      // Predicated region
      $region57: #{model_forward.1} parent=5 // pred_check
        _
      $region58: #{model_forward.1} parent=5 // pred_check_branch
        %338 = sbr.rel (%p335) target = $region60
      $region59: #{model_forward.1} parent=5 // pred_region
        %s339 = ssub.s32 %s19, 1
        %p340 = scmp.lt.s32.totalorder %s28, 1
        %s341 = scalar_select %p340, %s28, 1
        %p342 = scmp.lt.s32.totalorder %s29, 3
        %s343 = scalar_select %p342, %s29, 3
        %s344 = smul.addr %s341, 4
        %s345 = sadd.s32 %s343, %s344
        %s346 = smul.addr %s345, 8
        %s347 = scalar_lea.vmem %s0, %s346
        %p348 = pneg %p59
        %p349 = pneg %p56
        %p350 = pneg %p80
        %p351 = pneg %p77
        %p352 = pneg %p101
        %p353 = pneg %p98
        %p354 = pneg %p122
        %p355 = pneg %p119
        %p356 = pneg %p143
        %p357 = pneg %p140
        %p358 = pneg %p164
        %p359 = pneg %p161
        %p360 = pneg %p185
        %p361 = pneg %p182
        %p362 = pneg %p206
        %p363 = pneg %p203
        %p364 = pneg %p227
        %p365 = pneg %p224
        %p366 = pneg %p248
        %p367 = pneg %p245
        %p368 = pneg %p276
        %p369 = pneg %p273
        %s370 = sand.u32 %s263, 1
        %s371 = scalar_lea.sflag [#allocation8], %s370
        %s372 = sand.u32 %s263, 1
        %s373 = smul.addr %s372, 8
        %s374 = scalar_lea.vmem [#allocation7], %s373
        %p375 = scmp.lt.s32.totalorder %s28, 1
        %s376 = scalar_select %p375, %s28, 1
        %p377 = scmp.lt.s32.totalorder %s29, 3
        %s378 = scalar_select %p377, %s29, 3
        %s379 = smul.addr %s376, 4
        %s380 = sadd.s32 %s378, %s379
        %s381 = smul.addr %s380, 8
        %s382 = scalar_lea.vmem %s0, %s381
        %p383 = scmp.eq.s32.totalorder %s29, 0
        // Predicated region
        $region61: #{model_forward.1} parent=59 // pred_check
          %p384 = pneg %p383
        $region62: #{model_forward.1} parent=59 // pred_check_branch
          %386 = sbr.rel (%p384) target = $region64
        $region63: #{model_forward.1} parent=59 // pred_region
          %387 = vst [vmem:[#allocation2] sm:$0xff] 0.0
          %388 = vst [vmem:[#allocation2 + $0x8] sm:$0xff] 0.0
          %389 = vst [vmem:[#allocation2 + $0x10] sm:$0xff] 0.0
          %390 = vst [vmem:[#allocation2 + $0x18] sm:$0xff] 0.0
          %391 = vst [vmem:[#allocation3] sm:$0xff] 0.0
          %392 = vst [vmem:[#allocation3 + $0x8] sm:$0xff] 0.0
        $region64: #{model_forward.1} parent=59 // pred_fallthru
          _
        %v393 = vld [vmem:[%s382] sm:$0xff]
        %v394 = vlaneseq
        %v395 = vshrl.u32 %v394, 7
        %v396 = vmul.f32 %v393, %v393
        %vm397 = vcmask 523264
        %v398 = vsel %vm397, %v396, 0.0
        %399 = vadd.xlane.f32.xlu0 %v398
        %v400 = vpop.xlane.xlu0 %399
        %v401 = vrcp.pop 64.0
        %v402 = vmul.f32 64.0, %v401
        %v403 = vsub.f32 1.0, %v402
        %v404 = vmul.f32 %v401, %v403
        %v405 = vadd.f32 %v401, %v404
        %vm406 = vweird.f32 %v401
        %v407 = vsel %vm406, %v401, %v405
        %v408 = vmul.f32 %v400, %v407
        %v409 = vadd.f32 %v408, 1e-05
        %v410 = vrsqrt.pop %v409
        %v411 = vmul.f32 %v410, %v409
        %v412 = vmul.f32 %v411, %v410
        %v413 = vmul.f32 0.5, %v412
        %v414 = vsub.f32 1.5, %v413
        %v415 = vmul.f32 %v410, %v414
        %vm416 = vweird.f32 %v409
        %vm417 = vweird.f32 %v410
        %vm418 = vmor %vm416, %vm417
        %v419 = vsel %vm418, %v410, %v415
        %v420 = vmul.f32 %v393, %v419
        %v421 = vld [vmem:[%s1] sm:$0x1]
        %v423 = vperm.slane %v421, 0
        %v425 = vmul.f32 %v420, %v423
        %v426 = vld [vmem:[%s2] sm:$0xff]
        %v427 = vld [vmem:[%s2 + $0x8] sm:$0xff]
        %v428 = vld [vmem:[%s2 + $0x10] sm:$0xff]
        %v429 = vld [vmem:[%s2 + $0x18] sm:$0xff]
        %v430 = vld [vmem:[%s2 + $0x20] sm:$0xff]
        %v431 = vld [vmem:[%s2 + $0x28] sm:$0xff]
        %v432 = vld [vmem:[%s2 + $0x30] sm:$0xff]
        %v433 = vld [vmem:[%s2 + $0x38] sm:$0xff]
        %v434 = vld [vmem:[%s2 + $0x40] sm:$0xff]
        %v435 = vld [vmem:[%s2 + $0x48] sm:$0xff]
        %v436 = vld [vmem:[%s2 + $0x50] sm:$0xff]
        %v437 = vld [vmem:[%s2 + $0x58] sm:$0xff]
        %v438 = vld [vmem:[%s2 + $0x60] sm:$0xff]
        %v439 = vld [vmem:[%s2 + $0x68] sm:$0xff]
        %v440 = vld [vmem:[%s2 + $0x70] sm:$0xff]
        %v441 = vld [vmem:[%s2 + $0x78] sm:$0xff]
        %v443 = vsel %vm397, %v425, 0
        %445 = vmatpush.msra.mxu0 0.0
        %446 = vmatpush.msra.mxu0 0.0
        %447 = vmatpush.msra.mxu0 0.0
        %448 = vmatpush.msra.mxu0 0.0
        %449 = vmatpush.msra.mxu0 0.0
        %450 = vmatpush.msra.mxu0 0.0
        %451 = vmatpush.msra.mxu0 0.0
        %452 = vmatpush.msra.mxu0 0.0
        %453 = vmatpush.msra.mxu0 %v440
        %454 = vmatpush.msra.mxu0 %v438
        %455 = vmatpush.msra.mxu0 %v436
        %456 = vmatpush.msra.mxu0 %v434
        %457 = vmatpush.msra.mxu0 %v432
        %458 = vmatpush.msra.mxu0 %v430
        %459 = vmatpush.msra.mxu0 %v428
        %460 = vmatpush.msra.mxu0 %v426
        %461 = vmatmul.f32.gmra.mxu0 %v443
        %v462 = vpop.f32.mrf.mxu0
        %v463 = vadd.f32 0.0, %v462
        %464 = vdwg.mxu0
        %465 = vmatpush.msra.mxu0 0.0
        %466 = vmatpush.msra.mxu0 0.0
        %467 = vmatpush.msra.mxu0 0.0
        %468 = vmatpush.msra.mxu0 0.0
        %469 = vmatpush.msra.mxu0 0.0
        %470 = vmatpush.msra.mxu0 0.0
        %471 = vmatpush.msra.mxu0 0.0
        %472 = vmatpush.msra.mxu0 0.0
        %473 = vmatpush.msra.mxu0 %v441
        %474 = vmatpush.msra.mxu0 %v439
        %475 = vmatpush.msra.mxu0 %v437
        %476 = vmatpush.msra.mxu0 %v435
        %477 = vmatpush.msra.mxu0 %v433
        %478 = vmatpush.msra.mxu0 %v431
        %479 = vmatpush.msra.mxu0 %v429
        %480 = vmatpush.msra.mxu0 %v427
        %481 = vmatmul.f32.gmra.mxu0 %v443
        %v482 = vpop.f32.mrf.mxu0
        %v483 = vadd.f32 0.0, %v482
        %484 = vdwg.mxu0
        %v485 = vld [vmem:[%s3] sm:$0xf]
        %v486 = vld [vmem:[#allocation3] sm:$0xff]
        %v487 = vld [vmem:[%s4] sm:$0x1]
        %v489 = vperm.slane %v487, 0
        %v491 = vperm.slane %v485, 3
        %v492 = vmul.f32 %v463, %v491
        %v493 = vadd.f32 %v489, %v492
        %v494 = vrot.slane %v463, 5
        %vm495 = vcmp.lt.s32.totalorder %v395, 3
        %v496 = vsel %vm495, %v486, %v494
        %v497 = vperm.slane %v485, 0
        %v498 = vmul.f32 %v496, %v497
        %v499 = vadd.f32 %v493, %v498
        %v500 = vrot.slane %v463, 6
        %v501 = vrot.slane %v486, 1
        %vm502 = vcmp.lt.s32.totalorder %v395, 2
        %v503 = vsel %vm502, %v501, %v500
        %v504 = vperm.slane %v485, 1
        %v505 = vmul.f32 %v503, %v504
        %v506 = vadd.f32 %v499, %v505
        %v507 = vrot.slane %v463, 7
        %v508 = vrot.slane %v486, 2
        %vm509 = vcmp.lt.s32.totalorder %v395, 1
        %v510 = vsel %vm509, %v508, %v507
        %v511 = vperm.slane %v485, 2
        %v512 = vmul.f32 %v510, %v511
        %v513 = vadd.f32 %v506, %v512
        %v514 = vsel %vm495, %v494, 0.0
        %515 = vst [vmem:[#allocation3] sm:$0xff] %v514
        %v516 = vxor.u32 %v513, 2147483648
        %v517 = vmul.f32 %v516, 1.442695
        %v518 = vpow.pop %v517
        %v519 = vadd.f32 %v518, 1.0
        %v520 = vrcp.pop %v519
        %v521 = vmul.f32 %v519, %v520
        %v522 = vsub.f32 1.0, %v521
        %v523 = vmul.f32 %v520, %v522
        %v524 = vadd.f32 %v520, %v523
        %vm525 = vweird.f32 %v519
        %vm526 = vweird.f32 %v520
        %vm527 = vmor %vm525, %vm526
        %v528 = vsel %vm527, %v520, %v524
        %v529 = vand.u32 2147483647, %v519
        %vm530 = vcmp.eq.f32.partialorder %v529, 8.507059e+37
        %v531 = vand.u32 %v519, 2147483648
        %v532 = vor.u32 1.1754944e-38, %v531
        %v533 = vsel %vm530, %v532, %v528
        %v534 = vmul.f32 1.0, %v533
        %v535 = vmul.f32 %v513, %v534
        %v536 = vld [vmem:[%s5] sm:$0xff]
        %v537 = vld [vmem:[%s5 + $0x8] sm:$0xff]
        %v538 = vld [vmem:[%s5 + $0x10] sm:$0xff]
        %v539 = vld [vmem:[%s5 + $0x18] sm:$0xff]
        %v540 = vld [vmem:[%s5 + $0x20] sm:$0xff]
        %v541 = vld [vmem:[%s5 + $0x28] sm:$0xff]
        %v542 = vld [vmem:[%s5 + $0x30] sm:$0xff]
        %v543 = vld [vmem:[%s5 + $0x38] sm:$0xff]
        %v544 = vld [vmem:[%s5 + $0x40] sm:$0xff]
        %v545 = vld [vmem:[%s5 + $0x48] sm:$0xff]
        %v546 = vld [vmem:[%s5 + $0x50] sm:$0xff]
        %v547 = vld [vmem:[%s5 + $0x58] sm:$0xff]
        %v548 = vld [vmem:[%s5 + $0x60] sm:$0xff]
        %v549 = vld [vmem:[%s5 + $0x68] sm:$0xff]
        %v550 = vld [vmem:[%s5 + $0x70] sm:$0xff]
        %v551 = vld [vmem:[%s5 + $0x78] sm:$0xff]
        %v552 = vld [vmem:[%s5 + $0x80] sm:$0xff]
        %v553 = vld [vmem:[%s5 + $0x88] sm:$0xff]
        %v554 = vld [vmem:[%s5 + $0x90] sm:$0xff]
        %v555 = vld [vmem:[%s5 + $0x98] sm:$0xff]
        %v556 = vld [vmem:[%s5 + $0xa0] sm:$0xff]
        %v557 = vld [vmem:[%s5 + $0xa8] sm:$0xff]
        %v558 = vld [vmem:[%s5 + $0xb0] sm:$0xff]
        %v559 = vld [vmem:[%s5 + $0xb8] sm:$0xff]
        %v560 = vld [vmem:[%s5 + $0xc0] sm:$0xff]
        %v561 = vld [vmem:[%s5 + $0xc8] sm:$0xff]
        %v562 = vld [vmem:[%s5 + $0xd0] sm:$0xff]
        %v563 = vld [vmem:[%s5 + $0xd8] sm:$0xff]
        %v564 = vld [vmem:[%s5 + $0xe0] sm:$0xff]
        %v565 = vld [vmem:[%s5 + $0xe8] sm:$0xff]
        %v566 = vld [vmem:[%s5 + $0xf0] sm:$0xff]
        %v567 = vld [vmem:[%s5 + $0xf8] sm:$0xff]
        %568 = vmatpush.msra.mxu0 %v566
        %569 = vmatpush.msra.mxu0 %v564
        %570 = vmatpush.msra.mxu0 %v562
        %571 = vmatpush.msra.mxu0 %v560
        %572 = vmatpush.msra.mxu0 %v558
        %573 = vmatpush.msra.mxu0 %v556
        %574 = vmatpush.msra.mxu0 %v554
        %575 = vmatpush.msra.mxu0 %v552
        %576 = vmatpush.msra.mxu0 %v550
        %577 = vmatpush.msra.mxu0 %v548
        %578 = vmatpush.msra.mxu0 %v546
        %579 = vmatpush.msra.mxu0 %v544
        %580 = vmatpush.msra.mxu0 %v542
        %581 = vmatpush.msra.mxu0 %v540
        %582 = vmatpush.msra.mxu0 %v538
        %583 = vmatpush.msra.mxu0 %v536
        %584 = vmatmul.f32.gmra.mxu0 %v535
        %v585 = vpop.f32.mrf.mxu0
        %v586 = vadd.f32 0.0, %v585
        %587 = vdwg.mxu0
        %588 = vmatpush.msra.mxu0 %v567
        %589 = vmatpush.msra.mxu0 %v565
        %590 = vmatpush.msra.mxu0 %v563
        %591 = vmatpush.msra.mxu0 %v561
        %592 = vmatpush.msra.mxu0 %v559
        %593 = vmatpush.msra.mxu0 %v557
        %594 = vmatpush.msra.mxu0 %v555
        %595 = vmatpush.msra.mxu0 %v553
        %596 = vmatpush.msra.mxu0 %v551
        %597 = vmatpush.msra.mxu0 %v549
        %598 = vmatpush.msra.mxu0 %v547
        %599 = vmatpush.msra.mxu0 %v545
        %600 = vmatpush.msra.mxu0 %v543
        %601 = vmatpush.msra.mxu0 %v541
        %602 = vmatpush.msra.mxu0 %v539
        %603 = vmatpush.msra.mxu0 %v537
        %604 = vmatmul.f32.gmra.mxu0 %v535
        %v605 = vpop.f32.mrf.mxu0
        %v606 = vadd.f32 0.0, %v605
        %607 = vdwg.mxu0
        %v608 = vld [vmem:[%s6] sm:$0x1]
        %v610 = vperm.slane %v608, 0
        %v612 = vadd.f32 %v586, %v610
        %v613 = vmax.f32 %v612, 0.0
        %vm614 = vcmp.ne.f32.partialorder %v612, %v612
        %v615 = vadd.f32 %v612, 0.0
        %v616 = vand.u32 2147483647, %v612
        %v617 = vsub.f32 0.0, %v616
        %v618 = vmul.f32 %v617, 1.442695
        %v619 = vpow.pop %v618
        %v620 = vadd.f32 %v619, 1.0
        %v621 = vlog2.pop %v620
        %v622 = vmul.f32 %v621, 0.6931472
        %v623 = vmul.f32 -0.5, %v619
        %v624 = vadd.f32 %v623, 1.0
        %v625 = vmul.f32 %v624, %v619
        %v626 = vand.u32 2147483647, %v619
        %vm627 = vcmp.lt.f32.partialorder %v626, 0.0004427343
        %v628 = vsel %vm627, %v625, %v622
        %v629 = vadd.f32 %v613, %v628
        %v630 = vsel %vm614, %v615, %v629
        %v631 = vld [vmem:[%s7] sm:$0xff]
        %v632 = vld [vmem:[%s7 + $0x8] sm:$0xff]
        %v634 = vrot.slane %v630, 1
        %v635 = vrot.slane %v630, 2
        %v636 = vrot.slane %v630, 3
        %v637 = vrot.slane %v630, 4
        %v638 = vrot.slane %v630, 5
        %v639 = vrot.slane %v630, 6
        %v640 = vrot.slane %v630, 7
        %v641 = vperm.slane %v630, 0
        %v642 = vperm.slane %v634, 0
        %v643 = vperm.slane %v635, 0
        %v644 = vperm.slane %v636, 0
        %v645 = vperm.slane %v637, 0
        %v646 = vperm.slane %v638, 0
        %v647 = vperm.slane %v639, 0
        %v648 = vperm.slane %v640, 0
        %v657 = vmul.f32 %v641, %v631
        %v658 = vmul.f32 %v641, %v632
        %v659 = vmul.f32 %v642, %v631
        %v660 = vmul.f32 %v642, %v632
        %v661 = vmul.f32 %v643, %v631
        %v662 = vmul.f32 %v643, %v632
        %v663 = vmul.f32 %v644, %v631
        %v664 = vmul.f32 %v644, %v632
        %v665 = vmul.f32 %v645, %v631
        %v666 = vmul.f32 %v645, %v632
        %v667 = vmul.f32 %v646, %v631
        %v668 = vmul.f32 %v646, %v632
        %v669 = vmul.f32 %v647, %v631
        %v670 = vmul.f32 %v647, %v632
        %v671 = vmul.f32 %v648, %v631
        %v672 = vmul.f32 %v648, %v632
        %v673 = vmul.f32 %v657, 1.442695
        %v674 = vpow.pop %v673
        %v675 = vmul.f32 %v658, 1.442695
        %v676 = vpow.pop %v675
        %v677 = vmul.f32 %v659, 1.442695
        %v678 = vpow.pop %v677
        %v679 = vmul.f32 %v660, 1.442695
        %v680 = vpow.pop %v679
        %v681 = vmul.f32 %v661, 1.442695
        %v682 = vpow.pop %v681
        %v683 = vmul.f32 %v662, 1.442695
        %v684 = vpow.pop %v683
        %v685 = vmul.f32 %v663, 1.442695
        %v686 = vpow.pop %v685
        %v687 = vmul.f32 %v664, 1.442695
        %v688 = vpow.pop %v687
        %v689 = vmul.f32 %v665, 1.442695
        %v690 = vpow.pop %v689
        %v691 = vmul.f32 %v666, 1.442695
        %v692 = vpow.pop %v691
        %v693 = vmul.f32 %v667, 1.442695
        %v694 = vpow.pop %v693
        %v695 = vmul.f32 %v668, 1.442695
        %v696 = vpow.pop %v695
        %v697 = vmul.f32 %v669, 1.442695
        %v698 = vpow.pop %v697
        %v699 = vmul.f32 %v670, 1.442695
        %v700 = vpow.pop %v699
        %v701 = vmul.f32 %v671, 1.442695
        %v702 = vpow.pop %v701
        %v703 = vmul.f32 %v672, 1.442695
        %v704 = vpow.pop %v703
        %705 = vst [vmem:[#allocation4] sm:$0xff] %v674
        %706 = vst [vmem:[#allocation4 + $0x8] sm:$0xff] %v676
        %707 = vst [vmem:[#allocation4 + $0x10] sm:$0xff] %v678
        %708 = vst [vmem:[#allocation4 + $0x18] sm:$0xff] %v680
        %709 = vst [vmem:[#allocation4 + $0x20] sm:$0xff] %v682
        %710 = vst [vmem:[#allocation4 + $0x28] sm:$0xff] %v684
        %711 = vst [vmem:[#allocation4 + $0x30] sm:$0xff] %v686
        %712 = vst [vmem:[#allocation4 + $0x38] sm:$0xff] %v688
        %713 = vst [vmem:[#allocation4 + $0x40] sm:$0xff] %v690
        %714 = vst [vmem:[#allocation4 + $0x48] sm:$0xff] %v692
        %715 = vst [vmem:[#allocation4 + $0x50] sm:$0xff] %v694
        %716 = vst [vmem:[#allocation4 + $0x58] sm:$0xff] %v696
        %717 = vst [vmem:[#allocation4 + $0x60] sm:$0xff] %v698
        %718 = vst [vmem:[#allocation4 + $0x68] sm:$0xff] %v700
        %719 = vst [vmem:[#allocation4 + $0x70] sm:$0xff] %v702
        %720 = vst [vmem:[#allocation4 + $0x78] sm:$0xff] %v704
        %v721 = vmul.f32 %v630, %v535
        %v723 = vrot.slane %v721, 1
        %v724 = vrot.slane %v721, 2
        %v725 = vrot.slane %v721, 3
        %v726 = vrot.slane %v721, 4
        %v727 = vrot.slane %v721, 5
        %v728 = vrot.slane %v721, 6
        %v729 = vrot.slane %v721, 7
        %v730 = vperm.slane %v606, 0
        %v731 = vlaneseq
        %v732 = vshrl.u32 %v731, 7
        %734 = vset.pattern.permute.xlu0 %v732
        %735 = vperm.xlu0 %734, %v730
        %v736 = vpop.permute.xlu0 %735
        %v737 = vlaneseq
        %v738 = vshrl.u32 %v737, 7
        %v739 = vadd.s32 %v738, 8
        %740 = vset.pattern.permute.xlu0 %v739
        %741 = vperm.xlu0 %740, %v730
        %v742 = vpop.permute.xlu0 %741
        %v743 = vperm.slane %v606, 1
        %v744 = vlaneseq
        %v745 = vshrl.u32 %v744, 7
        %747 = vset.pattern.permute.xlu0 %v745
        %748 = vperm.xlu0 %747, %v743
        %v749 = vpop.permute.xlu0 %748
        %v750 = vlaneseq
        %v751 = vshrl.u32 %v750, 7
        %v752 = vadd.s32 %v751, 8
        %753 = vset.pattern.permute.xlu0 %v752
        %754 = vperm.xlu0 %753, %v743
        %v755 = vpop.permute.xlu0 %754
        %v756 = vperm.slane %v606, 2
        %v757 = vlaneseq
        %v758 = vshrl.u32 %v757, 7
        %760 = vset.pattern.permute.xlu0 %v758
        %761 = vperm.xlu0 %760, %v756
        %v762 = vpop.permute.xlu0 %761
        %v763 = vlaneseq
        %v764 = vshrl.u32 %v763, 7
        %v765 = vadd.s32 %v764, 8
        %766 = vset.pattern.permute.xlu0 %v765
        %767 = vperm.xlu0 %766, %v756
        %v768 = vpop.permute.xlu0 %767
        %v769 = vperm.slane %v606, 3
        %v770 = vlaneseq
        %v771 = vshrl.u32 %v770, 7
        %773 = vset.pattern.permute.xlu0 %v771
        %774 = vperm.xlu0 %773, %v769
        %v775 = vpop.permute.xlu0 %774
        %v776 = vlaneseq
        %v777 = vshrl.u32 %v776, 7
        %v778 = vadd.s32 %v777, 8
        %779 = vset.pattern.permute.xlu0 %v778
        %780 = vperm.xlu0 %779, %v769
        %v781 = vpop.permute.xlu0 %780
        %v782 = vperm.slane %v606, 4
        %v783 = vlaneseq
        %v784 = vshrl.u32 %v783, 7
        %786 = vset.pattern.permute.xlu0 %v784
        %787 = vperm.xlu0 %786, %v782
        %v788 = vpop.permute.xlu0 %787
        %v789 = vlaneseq
        %v790 = vshrl.u32 %v789, 7
        %v791 = vadd.s32 %v790, 8
        %792 = vset.pattern.permute.xlu0 %v791
        %793 = vperm.xlu0 %792, %v782
        %v794 = vpop.permute.xlu0 %793
        %v795 = vperm.slane %v606, 5
        %v796 = vlaneseq
        %v797 = vshrl.u32 %v796, 7
        %799 = vset.pattern.permute.xlu0 %v797
        %800 = vperm.xlu0 %799, %v795
        %v801 = vpop.permute.xlu0 %800
        %v802 = vlaneseq
        %v803 = vshrl.u32 %v802, 7
        %v804 = vadd.s32 %v803, 8
        %805 = vset.pattern.permute.xlu0 %v804
        %806 = vperm.xlu0 %805, %v795
        %v807 = vpop.permute.xlu0 %806
        %v808 = vperm.slane %v606, 6
        %v809 = vlaneseq
        %v810 = vshrl.u32 %v809, 7
        %812 = vset.pattern.permute.xlu0 %v810
        %813 = vperm.xlu0 %812, %v808
        %v814 = vpop.permute.xlu0 %813
        %v815 = vlaneseq
        %v816 = vshrl.u32 %v815, 7
        %v817 = vadd.s32 %v816, 8
        %818 = vset.pattern.permute.xlu0 %v817
        %819 = vperm.xlu0 %818, %v808
        %v820 = vpop.permute.xlu0 %819
        %v821 = vperm.slane %v606, 7
        %v822 = vlaneseq
        %v823 = vshrl.u32 %v822, 7
        %825 = vset.pattern.permute.xlu0 %v823
        %826 = vperm.xlu0 %825, %v821
        %v827 = vpop.permute.xlu0 %826
        %v828 = vlaneseq
        %v829 = vshrl.u32 %v828, 7
        %v830 = vadd.s32 %v829, 8
        %831 = vset.pattern.permute.xlu0 %v830
        %832 = vperm.xlu0 %831, %v821
        %v833 = vpop.permute.xlu0 %832
        %v834 = vperm.slane %v721, 0
        %v835 = vperm.slane %v723, 0
        %v836 = vperm.slane %v724, 0
        %v837 = vperm.slane %v725, 0
        %v838 = vperm.slane %v726, 0
        %v839 = vperm.slane %v727, 0
        %v840 = vperm.slane %v728, 0
        %v841 = vperm.slane %v729, 0
        %v850 = vmul.f32 %v834, %v736
        %v851 = vmul.f32 %v834, %v742
        %v852 = vmul.f32 %v835, %v749
        %v853 = vmul.f32 %v835, %v755
        %v854 = vmul.f32 %v836, %v762
        %v855 = vmul.f32 %v836, %v768
        %v856 = vmul.f32 %v837, %v775
        %v857 = vmul.f32 %v837, %v781
        %v858 = vmul.f32 %v838, %v788
        %v859 = vmul.f32 %v838, %v794
        %v860 = vmul.f32 %v839, %v801
        %v861 = vmul.f32 %v839, %v807
        %v862 = vmul.f32 %v840, %v814
        %v863 = vmul.f32 %v840, %v820
        %v864 = vmul.f32 %v841, %v827
        %v865 = vmul.f32 %v841, %v833
        %866 = vst [vmem:[#allocation5] sm:$0xff] %v850
        %867 = vst [vmem:[#allocation5 + $0x8] sm:$0xff] %v851
        %868 = vst [vmem:[#allocation5 + $0x10] sm:$0xff] %v852
        %869 = vst [vmem:[#allocation5 + $0x18] sm:$0xff] %v853
        %870 = vst [vmem:[#allocation5 + $0x20] sm:$0xff] %v854
        %871 = vst [vmem:[#allocation5 + $0x28] sm:$0xff] %v855
        %872 = vst [vmem:[#allocation5 + $0x30] sm:$0xff] %v856
        %873 = vst [vmem:[#allocation5 + $0x38] sm:$0xff] %v857
        %874 = vst [vmem:[#allocation5 + $0x40] sm:$0xff] %v858
        %875 = vst [vmem:[#allocation5 + $0x48] sm:$0xff] %v859
        %876 = vst [vmem:[#allocation5 + $0x50] sm:$0xff] %v860
        %877 = vst [vmem:[#allocation5 + $0x58] sm:$0xff] %v861
        %878 = vst [vmem:[#allocation5 + $0x60] sm:$0xff] %v862
        %879 = vst [vmem:[#allocation5 + $0x68] sm:$0xff] %v863
        %880 = vst [vmem:[#allocation5 + $0x70] sm:$0xff] %v864
        %881 = vst [vmem:[#allocation5 + $0x78] sm:$0xff] %v865
        %v882 = vld [vmem:[#allocation2] sm:$0xff]
        %v883 = vld [vmem:[#allocation2 + $0x8] sm:$0xff]
        %v884 = vld [vmem:[#allocation4] sm:$0xff]
        %v885 = vld [vmem:[#allocation4 + $0x8] sm:$0xff]
        %v886 = vmul.f32 %v884, %v882
        %v887 = vmul.f32 %v885, %v883
        %v888 = vld [vmem:[#allocation5] sm:$0xff]
        %v889 = vld [vmem:[#allocation5 + $0x8] sm:$0xff]
        %v890 = vadd.f32 %v886, %v888
        %v891 = vadd.f32 %v887, %v889
        %892 = vst [vmem:[#allocation6] sm:$0xff] %v890
        %893 = vst [vmem:[#allocation6 + $0x8] sm:$0xff] %v891
        %s894 = scalar_lea.vmem [#allocation4], 16
        %v895 = vld [vmem:[%s894] sm:$0xff]
        %v896 = vld [vmem:[%s894 + $0x8] sm:$0xff]
        %v897 = vmul.f32 %v895, %v890
        %v898 = vmul.f32 %v896, %v891
        %s899 = scalar_lea.vmem [#allocation5], 16
        %v900 = vld [vmem:[%s899] sm:$0xff]
        %v901 = vld [vmem:[%s899 + $0x8] sm:$0xff]
        %v902 = vadd.f32 %v897, %v900
        %v903 = vadd.f32 %v898, %v901
        %s904 = scalar_lea.vmem [#allocation6], 16
        %905 = vst [vmem:[%s904] sm:$0xff] %v902
        %906 = vst [vmem:[%s904 + $0x8] sm:$0xff] %v903
        %s907 = scalar_lea.vmem [#allocation4], 32
        %v908 = vld [vmem:[%s907] sm:$0xff]
        %v909 = vld [vmem:[%s907 + $0x8] sm:$0xff]
        %v910 = vmul.f32 %v908, %v902
        %v911 = vmul.f32 %v909, %v903
        %s912 = scalar_lea.vmem [#allocation5], 32
        %v913 = vld [vmem:[%s912] sm:$0xff]
        %v914 = vld [vmem:[%s912 + $0x8] sm:$0xff]
        %v915 = vadd.f32 %v910, %v913
        %v916 = vadd.f32 %v911, %v914
        %s917 = scalar_lea.vmem [#allocation6], 32
        %918 = vst [vmem:[%s917] sm:$0xff] %v915
        %919 = vst [vmem:[%s917 + $0x8] sm:$0xff] %v916
        %s920 = scalar_lea.vmem [#allocation4], 48
        %v921 = vld [vmem:[%s920] sm:$0xff]
        %v922 = vld [vmem:[%s920 + $0x8] sm:$0xff]
        %v923 = vmul.f32 %v921, %v915
        %v924 = vmul.f32 %v922, %v916
        %s925 = scalar_lea.vmem [#allocation5], 48
        %v926 = vld [vmem:[%s925] sm:$0xff]
        %v927 = vld [vmem:[%s925 + $0x8] sm:$0xff]
        %v928 = vadd.f32 %v923, %v926
        %v929 = vadd.f32 %v924, %v927
        %s930 = scalar_lea.vmem [#allocation6], 48
        %931 = vst [vmem:[%s930] sm:$0xff] %v928
        %932 = vst [vmem:[%s930 + $0x8] sm:$0xff] %v929
        %s933 = scalar_lea.vmem [#allocation4], 64
        %v934 = vld [vmem:[%s933] sm:$0xff]
        %v935 = vld [vmem:[%s933 + $0x8] sm:$0xff]
        %v936 = vmul.f32 %v934, %v928
        %v937 = vmul.f32 %v935, %v929
        %s938 = scalar_lea.vmem [#allocation5], 64
        %v939 = vld [vmem:[%s938] sm:$0xff]
        %v940 = vld [vmem:[%s938 + $0x8] sm:$0xff]
        %v941 = vadd.f32 %v936, %v939
        %v942 = vadd.f32 %v937, %v940
        %s943 = scalar_lea.vmem [#allocation6], 64
        %944 = vst [vmem:[%s943] sm:$0xff] %v941
        %945 = vst [vmem:[%s943 + $0x8] sm:$0xff] %v942
        %s946 = scalar_lea.vmem [#allocation4], 80
        %v947 = vld [vmem:[%s946] sm:$0xff]
        %v948 = vld [vmem:[%s946 + $0x8] sm:$0xff]
        %v949 = vmul.f32 %v947, %v941
        %v950 = vmul.f32 %v948, %v942
        %s951 = scalar_lea.vmem [#allocation5], 80
        %v952 = vld [vmem:[%s951] sm:$0xff]
        %v953 = vld [vmem:[%s951 + $0x8] sm:$0xff]
        %v954 = vadd.f32 %v949, %v952
        %v955 = vadd.f32 %v950, %v953
        %s956 = scalar_lea.vmem [#allocation6], 80
        %957 = vst [vmem:[%s956] sm:$0xff] %v954
        %958 = vst [vmem:[%s956 + $0x8] sm:$0xff] %v955
        %s959 = scalar_lea.vmem [#allocation4], 96
        %v960 = vld [vmem:[%s959] sm:$0xff]
        %v961 = vld [vmem:[%s959 + $0x8] sm:$0xff]
        %v962 = vmul.f32 %v960, %v954
        %v963 = vmul.f32 %v961, %v955
        %s964 = scalar_lea.vmem [#allocation5], 96
        %v965 = vld [vmem:[%s964] sm:$0xff]
        %v966 = vld [vmem:[%s964 + $0x8] sm:$0xff]
        %v967 = vadd.f32 %v962, %v965
        %v968 = vadd.f32 %v963, %v966
        %s969 = scalar_lea.vmem [#allocation6], 96
        %970 = vst [vmem:[%s969] sm:$0xff] %v967
        %971 = vst [vmem:[%s969 + $0x8] sm:$0xff] %v968
        %s972 = scalar_lea.vmem [#allocation4], 112
        %v973 = vld [vmem:[%s972] sm:$0xff]
        %v974 = vld [vmem:[%s972 + $0x8] sm:$0xff]
        %v975 = vmul.f32 %v973, %v967
        %v976 = vmul.f32 %v974, %v968
        %s977 = scalar_lea.vmem [#allocation5], 112
        %v978 = vld [vmem:[%s977] sm:$0xff]
        %v979 = vld [vmem:[%s977 + $0x8] sm:$0xff]
        %v980 = vadd.f32 %v975, %v978
        %v981 = vadd.f32 %v976, %v979
        %s982 = scalar_lea.vmem [#allocation6], 112
        %983 = vst [vmem:[%s982] sm:$0xff] %v980
        %984 = vst [vmem:[%s982 + $0x8] sm:$0xff] %v981
        %985 = vst [vmem:[#allocation2] sm:$0xff] %v980
        %986 = vst [vmem:[#allocation2 + $0x8] sm:$0xff] %v981
        %v987 = vld [vmem:[#allocation6] sm:$0xff]
        %v988 = vld [vmem:[#allocation6 + $0x8] sm:$0xff]
        %v989 = vld [vmem:[#allocation6 + $0x10] sm:$0xff]
        %v990 = vld [vmem:[#allocation6 + $0x18] sm:$0xff]
        %v991 = vld [vmem:[#allocation6 + $0x20] sm:$0xff]
        %v992 = vld [vmem:[#allocation6 + $0x28] sm:$0xff]
        %v993 = vld [vmem:[#allocation6 + $0x30] sm:$0xff]
        %v994 = vld [vmem:[#allocation6 + $0x38] sm:$0xff]
        %v995 = vld [vmem:[#allocation6 + $0x40] sm:$0xff]
        %v996 = vld [vmem:[#allocation6 + $0x48] sm:$0xff]
        %v997 = vld [vmem:[#allocation6 + $0x50] sm:$0xff]
        %v998 = vld [vmem:[#allocation6 + $0x58] sm:$0xff]
        %v999 = vld [vmem:[#allocation6 + $0x60] sm:$0xff]
        %v1000 = vld [vmem:[#allocation6 + $0x68] sm:$0xff]
        %v1001 = vld [vmem:[#allocation6 + $0x70] sm:$0xff]
        %v1002 = vld [vmem:[#allocation6 + $0x78] sm:$0xff]
        %v1003 = vlaneseq
        %v1004 = vshrl.u32 %v1003, 7
        %v1005 = vadd.s32 %v1004, 16
        %1006 = vset.pattern.permute.xlu0 %v1005
        %1007 = vperm.xlu0 %1006, %v730
        %v1008 = vpop.permute.xlu0 %1007
        %v1009 = vlaneseq
        %v1010 = vshrl.u32 %v1009, 7
        %v1011 = vadd.s32 %v1010, 24
        %1012 = vset.pattern.permute.xlu0 %v1011
        %1013 = vperm.xlu0 %1012, %v730
        %v1014 = vpop.permute.xlu0 %1013
        %v1015 = vlaneseq
        %v1016 = vshrl.u32 %v1015, 7
        %v1017 = vadd.s32 %v1016, 16
        %1018 = vset.pattern.permute.xlu0 %v1017
        %1019 = vperm.xlu0 %1018, %v743
        %v1020 = vpop.permute.xlu0 %1019
        %v1021 = vlaneseq
        %v1022 = vshrl.u32 %v1021, 7
        %v1023 = vadd.s32 %v1022, 24
        %1024 = vset.pattern.permute.xlu0 %v1023
        %1025 = vperm.xlu0 %1024, %v743
        %v1026 = vpop.permute.xlu0 %1025
        %v1027 = vlaneseq
        %v1028 = vshrl.u32 %v1027, 7
        %v1029 = vadd.s32 %v1028, 16
        %1030 = vset.pattern.permute.xlu0 %v1029
        %1031 = vperm.xlu0 %1030, %v756
        %v1032 = vpop.permute.xlu0 %1031
        %v1033 = vlaneseq
        %v1034 = vshrl.u32 %v1033, 7
        %v1035 = vadd.s32 %v1034, 24
        %1036 = vset.pattern.permute.xlu0 %v1035
        %1037 = vperm.xlu0 %1036, %v756
        %v1038 = vpop.permute.xlu0 %1037
        %v1039 = vlaneseq
        %v1040 = vshrl.u32 %v1039, 7
        %v1041 = vadd.s32 %v1040, 16
        %1042 = vset.pattern.permute.xlu0 %v1041
        %1043 = vperm.xlu0 %1042, %v769
        %v1044 = vpop.permute.xlu0 %1043
        %v1045 = vlaneseq
        %v1046 = vshrl.u32 %v1045, 7
        %v1047 = vadd.s32 %v1046, 24
        %1048 = vset.pattern.permute.xlu0 %v1047
        %1049 = vperm.xlu0 %1048, %v769
        %v1050 = vpop.permute.xlu0 %1049
        %v1051 = vlaneseq
        %v1052 = vshrl.u32 %v1051, 7
        %v1053 = vadd.s32 %v1052, 16
        %1054 = vset.pattern.permute.xlu0 %v1053
        %1055 = vperm.xlu0 %1054, %v782
        %v1056 = vpop.permute.xlu0 %1055
        %v1057 = vlaneseq
        %v1058 = vshrl.u32 %v1057, 7
        %v1059 = vadd.s32 %v1058, 24
        %1060 = vset.pattern.permute.xlu0 %v1059
        %1061 = vperm.xlu0 %1060, %v782
        %v1062 = vpop.permute.xlu0 %1061
        %v1063 = vlaneseq
        %v1064 = vshrl.u32 %v1063, 7
        %v1065 = vadd.s32 %v1064, 16
        %1066 = vset.pattern.permute.xlu0 %v1065
        %1067 = vperm.xlu0 %1066, %v795
        %v1068 = vpop.permute.xlu0 %1067
        %v1069 = vlaneseq
        %v1070 = vshrl.u32 %v1069, 7
        %v1071 = vadd.s32 %v1070, 24
        %1072 = vset.pattern.permute.xlu0 %v1071
        %1073 = vperm.xlu0 %1072, %v795
        %v1074 = vpop.permute.xlu0 %1073
        %v1075 = vlaneseq
        %v1076 = vshrl.u32 %v1075, 7
        %v1077 = vadd.s32 %v1076, 16
        %1078 = vset.pattern.permute.xlu0 %v1077
        %1079 = vperm.xlu0 %1078, %v808
        %v1080 = vpop.permute.xlu0 %1079
        %v1081 = vlaneseq
        %v1082 = vshrl.u32 %v1081, 7
        %v1083 = vadd.s32 %v1082, 24
        %1084 = vset.pattern.permute.xlu0 %v1083
        %1085 = vperm.xlu0 %1084, %v808
        %v1086 = vpop.permute.xlu0 %1085
        %v1087 = vlaneseq
        %v1088 = vshrl.u32 %v1087, 7
        %v1089 = vadd.s32 %v1088, 16
        %1090 = vset.pattern.permute.xlu0 %v1089
        %1091 = vperm.xlu0 %1090, %v821
        %v1092 = vpop.permute.xlu0 %1091
        %v1093 = vlaneseq
        %v1094 = vshrl.u32 %v1093, 7
        %v1095 = vadd.s32 %v1094, 24
        %1096 = vset.pattern.permute.xlu0 %v1095
        %1097 = vperm.xlu0 %1096, %v821
        %v1098 = vpop.permute.xlu0 %1097
        %v1099 = vmul.f32 %v987, %v1008
        %v1100 = vmul.f32 %v988, %v1014
        %v1101 = vmul.f32 %v989, %v1020
        %v1102 = vmul.f32 %v990, %v1026
        %v1103 = vmul.f32 %v991, %v1032
        %v1104 = vmul.f32 %v992, %v1038
        %v1105 = vmul.f32 %v993, %v1044
        %v1106 = vmul.f32 %v994, %v1050
        %v1107 = vmul.f32 %v995, %v1056
        %v1108 = vmul.f32 %v996, %v1062
        %v1109 = vmul.f32 %v997, %v1068
        %v1110 = vmul.f32 %v998, %v1074
        %v1111 = vmul.f32 %v999, %v1080
        %v1112 = vmul.f32 %v1000, %v1086
        %v1113 = vmul.f32 %v1001, %v1092
        %v1114 = vmul.f32 %v1002, %v1098
        %v1115 = vadd.f32 %v1099, %v1100
        %v1116 = vrot.slane %v1115, 4
        %v1117 = vadd.f32 %v1115, %v1116
        %v1118 = vrot.slane %v1117, 2
        %v1119 = vadd.f32 %v1117, %v1118
        %v1120 = vrot.slane %v1119, 1
        %v1121 = vadd.f32 %v1119, %v1120
        %v1122 = vadd.f32 %v1101, %v1102
        %v1123 = vrot.slane %v1122, 4
        %v1124 = vadd.f32 %v1122, %v1123
        %v1125 = vrot.slane %v1124, 2
        %v1126 = vadd.f32 %v1124, %v1125
        %v1127 = vrot.slane %v1126, 1
        %v1128 = vadd.f32 %v1126, %v1127
        %v1129 = vadd.f32 %v1103, %v1104
        %v1130 = vrot.slane %v1129, 4
        %v1131 = vadd.f32 %v1129, %v1130
        %v1132 = vrot.slane %v1131, 2
        %v1133 = vadd.f32 %v1131, %v1132
        %v1134 = vrot.slane %v1133, 1
        %v1135 = vadd.f32 %v1133, %v1134
        %v1136 = vadd.f32 %v1105, %v1106
        %v1137 = vrot.slane %v1136, 4
        %v1138 = vadd.f32 %v1136, %v1137
        %v1139 = vrot.slane %v1138, 2
        %v1140 = vadd.f32 %v1138, %v1139
        %v1141 = vrot.slane %v1140, 1
        %v1142 = vadd.f32 %v1140, %v1141
        %v1143 = vadd.f32 %v1107, %v1108
        %v1144 = vrot.slane %v1143, 4
        %v1145 = vadd.f32 %v1143, %v1144
        %v1146 = vrot.slane %v1145, 2
        %v1147 = vadd.f32 %v1145, %v1146
        %v1148 = vrot.slane %v1147, 1
        %v1149 = vadd.f32 %v1147, %v1148
        %v1150 = vadd.f32 %v1109, %v1110
        %v1151 = vrot.slane %v1150, 4
        %v1152 = vadd.f32 %v1150, %v1151
        %v1153 = vrot.slane %v1152, 2
        %v1154 = vadd.f32 %v1152, %v1153
        %v1155 = vrot.slane %v1154, 1
        %v1156 = vadd.f32 %v1154, %v1155
        %v1157 = vadd.f32 %v1111, %v1112
        %v1158 = vrot.slane %v1157, 4
        %v1159 = vadd.f32 %v1157, %v1158
        %v1160 = vrot.slane %v1159, 2
        %v1161 = vadd.f32 %v1159, %v1160
        %v1162 = vrot.slane %v1161, 1
        %v1163 = vadd.f32 %v1161, %v1162
        %v1164 = vadd.f32 %v1113, %v1114
        %v1165 = vrot.slane %v1164, 4
        %v1166 = vadd.f32 %v1164, %v1165
        %v1167 = vrot.slane %v1166, 2
        %v1168 = vadd.f32 %v1166, %v1167
        %v1169 = vrot.slane %v1168, 1
        %v1170 = vadd.f32 %v1168, %v1169
        %v1171 = vld [vmem:[%s8] sm:$0x1]
        %v1173 = vperm.slane %v1171, 0
        %v1175 = vmul.f32 %v535, %v1173
        %v1177 = vrot.slane %v1175, 1
        %v1178 = vrot.slane %v1175, 2
        %v1179 = vrot.slane %v1175, 3
        %v1180 = vrot.slane %v1175, 4
        %v1181 = vrot.slane %v1175, 5
        %v1182 = vrot.slane %v1175, 6
        %v1183 = vrot.slane %v1175, 7
        %v1192 = vadd.f32 %v1121, %v1175
        %v1193 = vadd.f32 %v1128, %v1177
        %v1194 = vadd.f32 %v1135, %v1178
        %v1195 = vadd.f32 %v1142, %v1179
        %v1196 = vadd.f32 %v1149, %v1180
        %v1197 = vadd.f32 %v1156, %v1181
        %v1198 = vadd.f32 %v1163, %v1182
        %v1199 = vadd.f32 %v1170, %v1183
        %v1200 = vxor.u32 %v483, 2147483648
        %v1201 = vmul.f32 %v1200, 1.442695
        %v1202 = vpow.pop %v1201
        %v1203 = vadd.f32 %v1202, 1.0
        %v1204 = vrcp.pop %v1203
        %v1205 = vmul.f32 %v1203, %v1204
        %v1206 = vsub.f32 1.0, %v1205
        %v1207 = vmul.f32 %v1204, %v1206
        %v1208 = vadd.f32 %v1204, %v1207
        %vm1209 = vweird.f32 %v1203
        %vm1210 = vweird.f32 %v1204
        %vm1211 = vmor %vm1209, %vm1210
        %v1212 = vsel %vm1211, %v1204, %v1208
        %v1213 = vand.u32 2147483647, %v1203
        %vm1214 = vcmp.eq.f32.partialorder %v1213, 8.507059e+37
        %v1215 = vand.u32 %v1203, 2147483648
        %v1216 = vor.u32 1.1754944e-38, %v1215
        %v1217 = vsel %vm1214, %v1216, %v1212
        %v1218 = vmul.f32 1.0, %v1217
        %v1219 = vmul.f32 %v483, %v1218
        %v1221 = vrot.slane %v1219, 1
        %v1222 = vrot.slane %v1219, 2
        %v1223 = vrot.slane %v1219, 3
        %v1224 = vrot.slane %v1219, 4
        %v1225 = vrot.slane %v1219, 5
        %v1226 = vrot.slane %v1219, 6
        %v1227 = vrot.slane %v1219, 7
        %v1236 = vmul.f32 %v1192, %v1219
        %v1237 = vmul.f32 %v1193, %v1221
        %v1238 = vmul.f32 %v1194, %v1222
        %v1239 = vmul.f32 %v1195, %v1223
        %v1240 = vmul.f32 %v1196, %v1224
        %v1241 = vmul.f32 %v1197, %v1225
        %v1242 = vmul.f32 %v1198, %v1226
        %v1243 = vmul.f32 %v1199, %v1227
        %v1244 = vld [vmem:[%s9] sm:$0xff]
        %v1245 = vld [vmem:[%s9 + $0x8] sm:$0xff]
        %v1246 = vld [vmem:[%s9 + $0x10] sm:$0xff]
        %v1247 = vld [vmem:[%s9 + $0x18] sm:$0xff]
        %v1248 = vld [vmem:[%s9 + $0x20] sm:$0xff]
        %v1249 = vld [vmem:[%s9 + $0x28] sm:$0xff]
        %v1250 = vld [vmem:[%s9 + $0x30] sm:$0xff]
        %v1251 = vld [vmem:[%s9 + $0x38] sm:$0xff]
        %v1252 = vld [vmem:[%s9 + $0x40] sm:$0xff]
        %v1253 = vld [vmem:[%s9 + $0x48] sm:$0xff]
        %v1254 = vld [vmem:[%s9 + $0x50] sm:$0xff]
        %v1255 = vld [vmem:[%s9 + $0x58] sm:$0xff]
        %v1256 = vld [vmem:[%s9 + $0x60] sm:$0xff]
        %v1257 = vld [vmem:[%s9 + $0x68] sm:$0xff]
        %v1258 = vld [vmem:[%s9 + $0x70] sm:$0xff]
        %v1259 = vld [vmem:[%s9 + $0x78] sm:$0xff]
        %v1268 = vrot.slane %v1237, 7
        %vm1269 = vcmask 1041409
        %v1270 = vsel %vm1269, %v1268, %v1236
        %v1271 = vrot.slane %v1238, 6
        %vm1272 = vcmask 1042434
        %v1273 = vsel %vm1272, %v1271, %v1270
        %v1274 = vrot.slane %v1239, 5
        %vm1275 = vcmask 1043459
        %v1276 = vsel %vm1275, %v1274, %v1273
        %v1277 = vrot.slane %v1240, 4
        %vm1278 = vcmask 1044484
        %v1279 = vsel %vm1278, %v1277, %v1276
        %v1280 = vrot.slane %v1241, 3
        %vm1281 = vcmask 1045509
        %v1282 = vsel %vm1281, %v1280, %v1279
        %v1283 = vrot.slane %v1242, 2
        %vm1284 = vcmask 1046534
        %v1285 = vsel %vm1284, %v1283, %v1282
        %v1286 = vrot.slane %v1243, 1
        %vm1287 = vcmask 1047559
        %v1288 = vsel %vm1287, %v1286, %v1285
        %1290 = vmatpush.msra.mxu0 %v1259
        %1291 = vmatpush.msra.mxu0 %v1258
        %1292 = vmatpush.msra.mxu0 %v1257
        %1293 = vmatpush.msra.mxu0 %v1256
        %1294 = vmatpush.msra.mxu0 %v1255
        %1295 = vmatpush.msra.mxu0 %v1254
        %1296 = vmatpush.msra.mxu0 %v1253
        %1297 = vmatpush.msra.mxu0 %v1252
        %1298 = vmatpush.msra.mxu0 %v1251
        %1299 = vmatpush.msra.mxu0 %v1250
        %1300 = vmatpush.msra.mxu0 %v1249
        %1301 = vmatpush.msra.mxu0 %v1248
        %1302 = vmatpush.msra.mxu0 %v1247
        %1303 = vmatpush.msra.mxu0 %v1246
        %1304 = vmatpush.msra.mxu0 %v1245
        %1305 = vmatpush.msra.mxu0 %v1244
        %1306 = vmatmul.f32.gmra.mxu0 %v1288
        %v1307 = vpop.f32.mrf.mxu0
        %v1308 = vadd.f32 0.0, %v1307
        %1309 = vdwg.mxu0
        %v1310 = vadd.f32 %v393, %v1308
        %v1311 = vmul.f32 %v1310, %v1310
        %v1312 = vsel %vm397, %v1311, 0.0
        %1313 = vadd.xlane.f32.xlu0 %v1312
        %v1314 = vpop.xlane.xlu0 %1313
        %v1315 = vmul.f32 %v1314, %v407
        %v1316 = vadd.f32 %v1315, 1e-05
        %v1317 = vrsqrt.pop %v1316
        %v1318 = vmul.f32 %v1317, %v1316
        %v1319 = vmul.f32 %v1318, %v1317
        %v1320 = vmul.f32 0.5, %v1319
        %v1321 = vsub.f32 1.5, %v1320
        %v1322 = vmul.f32 %v1317, %v1321
        %vm1323 = vweird.f32 %v1316
        %vm1324 = vweird.f32 %v1317
        %vm1325 = vmor %vm1323, %vm1324
        %v1326 = vsel %vm1325, %v1317, %v1322
        %v1327 = vmul.f32 %v1310, %v1326
        %s1328 = scalar_lea.vmem %s1, 1
        %v1329 = vld [vmem:[%s1328] sm:$0x1]
        %v1331 = vperm.slane %v1329, 0
        %v1333 = vmul.f32 %v1327, %v1331
        %s1334 = scalar_lea.vmem %s2, 128
        %v1335 = vld [vmem:[%s1334] sm:$0xff]
        %v1336 = vld [vmem:[%s1334 + $0x8] sm:$0xff]
        %v1337 = vld [vmem:[%s1334 + $0x10] sm:$0xff]
        %v1338 = vld [vmem:[%s1334 + $0x18] sm:$0xff]
        %v1339 = vld [vmem:[%s1334 + $0x20] sm:$0xff]
        %v1340 = vld [vmem:[%s1334 + $0x28] sm:$0xff]
        %v1341 = vld [vmem:[%s1334 + $0x30] sm:$0xff]
        %v1342 = vld [vmem:[%s1334 + $0x38] sm:$0xff]
        %v1343 = vld [vmem:[%s1334 + $0x40] sm:$0xff]
        %v1344 = vld [vmem:[%s1334 + $0x48] sm:$0xff]
        %v1345 = vld [vmem:[%s1334 + $0x50] sm:$0xff]
        %v1346 = vld [vmem:[%s1334 + $0x58] sm:$0xff]
        %v1347 = vld [vmem:[%s1334 + $0x60] sm:$0xff]
        %v1348 = vld [vmem:[%s1334 + $0x68] sm:$0xff]
        %v1349 = vld [vmem:[%s1334 + $0x70] sm:$0xff]
        %v1350 = vld [vmem:[%s1334 + $0x78] sm:$0xff]
        %v1352 = vsel %vm397, %v1333, 0
        %1354 = vmatpush.msra.mxu0 0.0
        %1355 = vmatpush.msra.mxu0 0.0
        %1356 = vmatpush.msra.mxu0 0.0
        %1357 = vmatpush.msra.mxu0 0.0
        %1358 = vmatpush.msra.mxu0 0.0
        %1359 = vmatpush.msra.mxu0 0.0
        %1360 = vmatpush.msra.mxu0 0.0
        %1361 = vmatpush.msra.mxu0 0.0
        %1362 = vmatpush.msra.mxu0 %v1349
        %1363 = vmatpush.msra.mxu0 %v1347
        %1364 = vmatpush.msra.mxu0 %v1345
        %1365 = vmatpush.msra.mxu0 %v1343
        %1366 = vmatpush.msra.mxu0 %v1341
        %1367 = vmatpush.msra.mxu0 %v1339
        %1368 = vmatpush.msra.mxu0 %v1337
        %1369 = vmatpush.msra.mxu0 %v1335
        %1370 = vmatmul.f32.gmra.mxu0 %v1352
        %v1371 = vpop.f32.mrf.mxu0
        %v1372 = vadd.f32 0.0, %v1371
        %1373 = vdwg.mxu0
        %1374 = vmatpush.msra.mxu0 0.0
        %1375 = vmatpush.msra.mxu0 0.0
        %1376 = vmatpush.msra.mxu0 0.0
        %1377 = vmatpush.msra.mxu0 0.0
        %1378 = vmatpush.msra.mxu0 0.0
        %1379 = vmatpush.msra.mxu0 0.0
        %1380 = vmatpush.msra.mxu0 0.0
        %1381 = vmatpush.msra.mxu0 0.0
        %1382 = vmatpush.msra.mxu0 %v1350
        %1383 = vmatpush.msra.mxu0 %v1348
        %1384 = vmatpush.msra.mxu0 %v1346
        %1385 = vmatpush.msra.mxu0 %v1344
        %1386 = vmatpush.msra.mxu0 %v1342
        %1387 = vmatpush.msra.mxu0 %v1340
        %1388 = vmatpush.msra.mxu0 %v1338
        %1389 = vmatpush.msra.mxu0 %v1336
        %1390 = vmatmul.f32.gmra.mxu0 %v1352
        %v1391 = vpop.f32.mrf.mxu0
        %v1392 = vadd.f32 0.0, %v1391
        %1393 = vdwg.mxu0
        %s1394 = scalar_lea.vmem %s3, 4
        %v1395 = vld [vmem:[%s1394] sm:$0xf]
        %s1396 = scalar_lea.vmem [#allocation3], 8
        %v1397 = vld [vmem:[%s1396] sm:$0xff]
        %s1398 = scalar_lea.vmem %s4, 1
        %v1399 = vld [vmem:[%s1398] sm:$0x1]
        %v1401 = vperm.slane %v1399, 0
        %v1403 = vperm.slane %v1395, 3
        %v1404 = vmul.f32 %v1372, %v1403
        %v1405 = vadd.f32 %v1401, %v1404
        %v1406 = vrot.slane %v1372, 5
        %v1407 = vsel %vm495, %v1397, %v1406
        %v1408 = vperm.slane %v1395, 0
        %v1409 = vmul.f32 %v1407, %v1408
        %v1410 = vadd.f32 %v1405, %v1409
        %v1411 = vrot.slane %v1372, 6
        %v1412 = vrot.slane %v1397, 1
        %v1413 = vsel %vm502, %v1412, %v1411
        %v1414 = vperm.slane %v1395, 1
        %v1415 = vmul.f32 %v1413, %v1414
        %v1416 = vadd.f32 %v1410, %v1415
        %v1417 = vrot.slane %v1372, 7
        %v1418 = vrot.slane %v1397, 2
        %v1419 = vsel %vm509, %v1418, %v1417
        %v1420 = vperm.slane %v1395, 2
        %v1421 = vmul.f32 %v1419, %v1420
        %v1422 = vadd.f32 %v1416, %v1421
        %v1423 = vsel %vm495, %v1406, 0.0
        %1424 = vst [vmem:[%s1396] sm:$0xff] %v1423
        %v1425 = vxor.u32 %v1422, 2147483648
        %v1426 = vmul.f32 %v1425, 1.442695
        %v1427 = vpow.pop %v1426
        %v1428 = vadd.f32 %v1427, 1.0
        %v1429 = vrcp.pop %v1428
        %v1430 = vmul.f32 %v1428, %v1429
        %v1431 = vsub.f32 1.0, %v1430
        %v1432 = vmul.f32 %v1429, %v1431
        %v1433 = vadd.f32 %v1429, %v1432
        %vm1434 = vweird.f32 %v1428
        %vm1435 = vweird.f32 %v1429
        %vm1436 = vmor %vm1434, %vm1435
        %v1437 = vsel %vm1436, %v1429, %v1433
        %v1438 = vand.u32 2147483647, %v1428
        %vm1439 = vcmp.eq.f32.partialorder %v1438, 8.507059e+37
        %v1440 = vand.u32 %v1428, 2147483648
        %v1441 = vor.u32 1.1754944e-38, %v1440
        %v1442 = vsel %vm1439, %v1441, %v1437
        %v1443 = vmul.f32 1.0, %v1442
        %v1444 = vmul.f32 %v1422, %v1443
        %s1445 = scalar_lea.vmem %s5, 256
        %v1446 = vld [vmem:[%s1445] sm:$0xff]
        %v1447 = vld [vmem:[%s1445 + $0x8] sm:$0xff]
        %v1448 = vld [vmem:[%s1445 + $0x10] sm:$0xff]
        %v1449 = vld [vmem:[%s1445 + $0x18] sm:$0xff]
        %v1450 = vld [vmem:[%s1445 + $0x20] sm:$0xff]
        %v1451 = vld [vmem:[%s1445 + $0x28] sm:$0xff]
        %v1452 = vld [vmem:[%s1445 + $0x30] sm:$0xff]
        %v1453 = vld [vmem:[%s1445 + $0x38] sm:$0xff]
        %v1454 = vld [vmem:[%s1445 + $0x40] sm:$0xff]
        %v1455 = vld [vmem:[%s1445 + $0x48] sm:$0xff]
        %v1456 = vld [vmem:[%s1445 + $0x50] sm:$0xff]
        %v1457 = vld [vmem:[%s1445 + $0x58] sm:$0xff]
        %v1458 = vld [vmem:[%s1445 + $0x60] sm:$0xff]
        %v1459 = vld [vmem:[%s1445 + $0x68] sm:$0xff]
        %v1460 = vld [vmem:[%s1445 + $0x70] sm:$0xff]
        %v1461 = vld [vmem:[%s1445 + $0x78] sm:$0xff]
        %v1462 = vld [vmem:[%s1445 + $0x80] sm:$0xff]
        %v1463 = vld [vmem:[%s1445 + $0x88] sm:$0xff]
        %v1464 = vld [vmem:[%s1445 + $0x90] sm:$0xff]
        %v1465 = vld [vmem:[%s1445 + $0x98] sm:$0xff]
        %v1466 = vld [vmem:[%s1445 + $0xa0] sm:$0xff]
        %v1467 = vld [vmem:[%s1445 + $0xa8] sm:$0xff]
        %v1468 = vld [vmem:[%s1445 + $0xb0] sm:$0xff]
        %v1469 = vld [vmem:[%s1445 + $0xb8] sm:$0xff]
        %v1470 = vld [vmem:[%s1445 + $0xc0] sm:$0xff]
        %v1471 = vld [vmem:[%s1445 + $0xc8] sm:$0xff]
        %v1472 = vld [vmem:[%s1445 + $0xd0] sm:$0xff]
        %v1473 = vld [vmem:[%s1445 + $0xd8] sm:$0xff]
        %v1474 = vld [vmem:[%s1445 + $0xe0] sm:$0xff]
        %v1475 = vld [vmem:[%s1445 + $0xe8] sm:$0xff]
        %v1476 = vld [vmem:[%s1445 + $0xf0] sm:$0xff]
        %v1477 = vld [vmem:[%s1445 + $0xf8] sm:$0xff]
        %1478 = vmatpush.msra.mxu0 %v1476
        %1479 = vmatpush.msra.mxu0 %v1474
        %1480 = vmatpush.msra.mxu0 %v1472
        %1481 = vmatpush.msra.mxu0 %v1470
        %1482 = vmatpush.msra.mxu0 %v1468
        %1483 = vmatpush.msra.mxu0 %v1466
        %1484 = vmatpush.msra.mxu0 %v1464
        %1485 = vmatpush.msra.mxu0 %v1462
        %1486 = vmatpush.msra.mxu0 %v1460
        %1487 = vmatpush.msra.mxu0 %v1458
        %1488 = vmatpush.msra.mxu0 %v1456
        %1489 = vmatpush.msra.mxu0 %v1454
        %1490 = vmatpush.msra.mxu0 %v1452
        %1491 = vmatpush.msra.mxu0 %v1450
        %1492 = vmatpush.msra.mxu0 %v1448
        %1493 = vmatpush.msra.mxu0 %v1446
        %1494 = vmatmul.f32.gmra.mxu0 %v1444
        %v1495 = vpop.f32.mrf.mxu0
        %v1496 = vadd.f32 0.0, %v1495
        %1497 = vdwg.mxu0
        %1498 = vmatpush.msra.mxu0 %v1477
        %1499 = vmatpush.msra.mxu0 %v1475
        %1500 = vmatpush.msra.mxu0 %v1473
        %1501 = vmatpush.msra.mxu0 %v1471
        %1502 = vmatpush.msra.mxu0 %v1469
        %1503 = vmatpush.msra.mxu0 %v1467
        %1504 = vmatpush.msra.mxu0 %v1465
        %1505 = vmatpush.msra.mxu0 %v1463
        %1506 = vmatpush.msra.mxu0 %v1461
        %1507 = vmatpush.msra.mxu0 %v1459
        %1508 = vmatpush.msra.mxu0 %v1457
        %1509 = vmatpush.msra.mxu0 %v1455
        %1510 = vmatpush.msra.mxu0 %v1453
        %1511 = vmatpush.msra.mxu0 %v1451
        %1512 = vmatpush.msra.mxu0 %v1449
        %1513 = vmatpush.msra.mxu0 %v1447
        %1514 = vmatmul.f32.gmra.mxu0 %v1444
        %v1515 = vpop.f32.mrf.mxu0
        %v1516 = vadd.f32 0.0, %v1515
        %1517 = vdwg.mxu0
        %s1518 = scalar_lea.vmem %s6, 1
        %v1519 = vld [vmem:[%s1518] sm:$0x1]
        %v1521 = vperm.slane %v1519, 0
        %v1523 = vadd.f32 %v1496, %v1521
        %v1524 = vmax.f32 %v1523, 0.0
        %vm1525 = vcmp.ne.f32.partialorder %v1523, %v1523
        %v1526 = vadd.f32 %v1523, 0.0
        %v1527 = vand.u32 2147483647, %v1523
        %v1528 = vsub.f32 0.0, %v1527
        %v1529 = vmul.f32 %v1528, 1.442695
        %v1530 = vpow.pop %v1529
        %v1531 = vadd.f32 %v1530, 1.0
        %v1532 = vlog2.pop %v1531
        %v1533 = vmul.f32 %v1532, 0.6931472
        %v1534 = vmul.f32 -0.5, %v1530
        %v1535 = vadd.f32 %v1534, 1.0
        %v1536 = vmul.f32 %v1535, %v1530
        %v1537 = vand.u32 2147483647, %v1530
        %vm1538 = vcmp.lt.f32.partialorder %v1537, 0.0004427343
        %v1539 = vsel %vm1538, %v1536, %v1533
        %v1540 = vadd.f32 %v1524, %v1539
        %v1541 = vsel %vm1525, %v1526, %v1540
        %s1542 = scalar_lea.vmem %s7, 16
        %v1543 = vld [vmem:[%s1542] sm:$0xff]
        %v1544 = vld [vmem:[%s1542 + $0x8] sm:$0xff]
        %v1546 = vrot.slane %v1541, 1
        %v1547 = vrot.slane %v1541, 2
        %v1548 = vrot.slane %v1541, 3
        %v1549 = vrot.slane %v1541, 4
        %v1550 = vrot.slane %v1541, 5
        %v1551 = vrot.slane %v1541, 6
        %v1552 = vrot.slane %v1541, 7
        %v1553 = vperm.slane %v1541, 0
        %v1554 = vperm.slane %v1546, 0
        %v1555 = vperm.slane %v1547, 0
        %v1556 = vperm.slane %v1548, 0
        %v1557 = vperm.slane %v1549, 0
        %v1558 = vperm.slane %v1550, 0
        %v1559 = vperm.slane %v1551, 0
        %v1560 = vperm.slane %v1552, 0
        %v1569 = vmul.f32 %v1553, %v1543
        %v1570 = vmul.f32 %v1553, %v1544
        %v1571 = vmul.f32 %v1554, %v1543
        %v1572 = vmul.f32 %v1554, %v1544
        %v1573 = vmul.f32 %v1555, %v1543
        %v1574 = vmul.f32 %v1555, %v1544
        %v1575 = vmul.f32 %v1556, %v1543
        %v1576 = vmul.f32 %v1556, %v1544
        %v1577 = vmul.f32 %v1557, %v1543
        %v1578 = vmul.f32 %v1557, %v1544
        %v1579 = vmul.f32 %v1558, %v1543
        %v1580 = vmul.f32 %v1558, %v1544
        %v1581 = vmul.f32 %v1559, %v1543
        %v1582 = vmul.f32 %v1559, %v1544
        %v1583 = vmul.f32 %v1560, %v1543
        %v1584 = vmul.f32 %v1560, %v1544
        %v1585 = vmul.f32 %v1569, 1.442695
        %v1586 = vpow.pop %v1585
        %v1587 = vmul.f32 %v1570, 1.442695
        %v1588 = vpow.pop %v1587
        %v1589 = vmul.f32 %v1571, 1.442695
        %v1590 = vpow.pop %v1589
        %v1591 = vmul.f32 %v1572, 1.442695
        %v1592 = vpow.pop %v1591
        %v1593 = vmul.f32 %v1573, 1.442695
        %v1594 = vpow.pop %v1593
        %v1595 = vmul.f32 %v1574, 1.442695
        %v1596 = vpow.pop %v1595
        %v1597 = vmul.f32 %v1575, 1.442695
        %v1598 = vpow.pop %v1597
        %v1599 = vmul.f32 %v1576, 1.442695
        %v1600 = vpow.pop %v1599
        %v1601 = vmul.f32 %v1577, 1.442695
        %v1602 = vpow.pop %v1601
        %v1603 = vmul.f32 %v1578, 1.442695
        %v1604 = vpow.pop %v1603
        %v1605 = vmul.f32 %v1579, 1.442695
        %v1606 = vpow.pop %v1605
        %v1607 = vmul.f32 %v1580, 1.442695
        %v1608 = vpow.pop %v1607
        %v1609 = vmul.f32 %v1581, 1.442695
        %v1610 = vpow.pop %v1609
        %v1611 = vmul.f32 %v1582, 1.442695
        %v1612 = vpow.pop %v1611
        %v1613 = vmul.f32 %v1583, 1.442695
        %v1614 = vpow.pop %v1613
        %v1615 = vmul.f32 %v1584, 1.442695
        %v1616 = vpow.pop %v1615
        %1617 = vst [vmem:[#allocation4] sm:$0xff] %v1586
        %1618 = vst [vmem:[#allocation4 + $0x8] sm:$0xff] %v1588
        %1619 = vst [vmem:[#allocation4 + $0x10] sm:$0xff] %v1590
        %1620 = vst [vmem:[#allocation4 + $0x18] sm:$0xff] %v1592
        %1621 = vst [vmem:[#allocation4 + $0x20] sm:$0xff] %v1594
        %1622 = vst [vmem:[#allocation4 + $0x28] sm:$0xff] %v1596
        %1623 = vst [vmem:[#allocation4 + $0x30] sm:$0xff] %v1598
        %1624 = vst [vmem:[#allocation4 + $0x38] sm:$0xff] %v1600
        %1625 = vst [vmem:[#allocation4 + $0x40] sm:$0xff] %v1602
        %1626 = vst [vmem:[#allocation4 + $0x48] sm:$0xff] %v1604
        %1627 = vst [vmem:[#allocation4 + $0x50] sm:$0xff] %v1606
        %1628 = vst [vmem:[#allocation4 + $0x58] sm:$0xff] %v1608
        %1629 = vst [vmem:[#allocation4 + $0x60] sm:$0xff] %v1610
        %1630 = vst [vmem:[#allocation4 + $0x68] sm:$0xff] %v1612
        %1631 = vst [vmem:[#allocation4 + $0x70] sm:$0xff] %v1614
        %1632 = vst [vmem:[#allocation4 + $0x78] sm:$0xff] %v1616
        %v1633 = vmul.f32 %v1541, %v1444
        %v1635 = vrot.slane %v1633, 1
        %v1636 = vrot.slane %v1633, 2
        %v1637 = vrot.slane %v1633, 3
        %v1638 = vrot.slane %v1633, 4
        %v1639 = vrot.slane %v1633, 5
        %v1640 = vrot.slane %v1633, 6
        %v1641 = vrot.slane %v1633, 7
        %v1642 = vperm.slane %v1516, 0
        %v1643 = vlaneseq
        %v1644 = vshrl.u32 %v1643, 7
        %1646 = vset.pattern.permute.xlu0 %v1644
        %1647 = vperm.xlu0 %1646, %v1642
        %v1648 = vpop.permute.xlu0 %1647
        %v1649 = vlaneseq
        %v1650 = vshrl.u32 %v1649, 7
        %v1651 = vadd.s32 %v1650, 8
        %1652 = vset.pattern.permute.xlu0 %v1651
        %1653 = vperm.xlu0 %1652, %v1642
        %v1654 = vpop.permute.xlu0 %1653
        %v1655 = vperm.slane %v1516, 1
        %v1656 = vlaneseq
        %v1657 = vshrl.u32 %v1656, 7
        %1659 = vset.pattern.permute.xlu0 %v1657
        %1660 = vperm.xlu0 %1659, %v1655
        %v1661 = vpop.permute.xlu0 %1660
        %v1662 = vlaneseq
        %v1663 = vshrl.u32 %v1662, 7
        %v1664 = vadd.s32 %v1663, 8
        %1665 = vset.pattern.permute.xlu0 %v1664
        %1666 = vperm.xlu0 %1665, %v1655
        %v1667 = vpop.permute.xlu0 %1666
        %v1668 = vperm.slane %v1516, 2
        %v1669 = vlaneseq
        %v1670 = vshrl.u32 %v1669, 7
        %1672 = vset.pattern.permute.xlu0 %v1670
        %1673 = vperm.xlu0 %1672, %v1668
        %v1674 = vpop.permute.xlu0 %1673
        %v1675 = vlaneseq
        %v1676 = vshrl.u32 %v1675, 7
        %v1677 = vadd.s32 %v1676, 8
        %1678 = vset.pattern.permute.xlu0 %v1677
        %1679 = vperm.xlu0 %1678, %v1668
        %v1680 = vpop.permute.xlu0 %1679
        %v1681 = vperm.slane %v1516, 3
        %v1682 = vlaneseq
        %v1683 = vshrl.u32 %v1682, 7
        %1685 = vset.pattern.permute.xlu0 %v1683
        %1686 = vperm.xlu0 %1685, %v1681
        %v1687 = vpop.permute.xlu0 %1686
        %v1688 = vlaneseq
        %v1689 = vshrl.u32 %v1688, 7
        %v1690 = vadd.s32 %v1689, 8
        %1691 = vset.pattern.permute.xlu0 %v1690
        %1692 = vperm.xlu0 %1691, %v1681
        %v1693 = vpop.permute.xlu0 %1692
        %v1694 = vperm.slane %v1516, 4
        %v1695 = vlaneseq
        %v1696 = vshrl.u32 %v1695, 7
        %1698 = vset.pattern.permute.xlu0 %v1696
        %1699 = vperm.xlu0 %1698, %v1694
        %v1700 = vpop.permute.xlu0 %1699
        %v1701 = vlaneseq
        %v1702 = vshrl.u32 %v1701, 7
        %v1703 = vadd.s32 %v1702, 8
        %1704 = vset.pattern.permute.xlu0 %v1703
        %1705 = vperm.xlu0 %1704, %v1694
        %v1706 = vpop.permute.xlu0 %1705
        %v1707 = vperm.slane %v1516, 5
        %v1708 = vlaneseq
        %v1709 = vshrl.u32 %v1708, 7
        %1711 = vset.pattern.permute.xlu0 %v1709
        %1712 = vperm.xlu0 %1711, %v1707
        %v1713 = vpop.permute.xlu0 %1712
        %v1714 = vlaneseq
        %v1715 = vshrl.u32 %v1714, 7
        %v1716 = vadd.s32 %v1715, 8
        %1717 = vset.pattern.permute.xlu0 %v1716
        %1718 = vperm.xlu0 %1717, %v1707
        %v1719 = vpop.permute.xlu0 %1718
        %v1720 = vperm.slane %v1516, 6
        %v1721 = vlaneseq
        %v1722 = vshrl.u32 %v1721, 7
        %1724 = vset.pattern.permute.xlu0 %v1722
        %1725 = vperm.xlu0 %1724, %v1720
        %v1726 = vpop.permute.xlu0 %1725
        %v1727 = vlaneseq
        %v1728 = vshrl.u32 %v1727, 7
        %v1729 = vadd.s32 %v1728, 8
        %1730 = vset.pattern.permute.xlu0 %v1729
        %1731 = vperm.xlu0 %1730, %v1720
        %v1732 = vpop.permute.xlu0 %1731
        %v1733 = vperm.slane %v1516, 7
        %v1734 = vlaneseq
        %v1735 = vshrl.u32 %v1734, 7
        %1737 = vset.pattern.permute.xlu0 %v1735
        %1738 = vperm.xlu0 %1737, %v1733
        %v1739 = vpop.permute.xlu0 %1738
        %v1740 = vlaneseq
        %v1741 = vshrl.u32 %v1740, 7
        %v1742 = vadd.s32 %v1741, 8
        %1743 = vset.pattern.permute.xlu0 %v1742
        %1744 = vperm.xlu0 %1743, %v1733
        %v1745 = vpop.permute.xlu0 %1744
        %v1746 = vperm.slane %v1633, 0
        %v1747 = vperm.slane %v1635, 0
        %v1748 = vperm.slane %v1636, 0
        %v1749 = vperm.slane %v1637, 0
        %v1750 = vperm.slane %v1638, 0
        %v1751 = vperm.slane %v1639, 0
        %v1752 = vperm.slane %v1640, 0
        %v1753 = vperm.slane %v1641, 0
        %v1762 = vmul.f32 %v1746, %v1648
        %v1763 = vmul.f32 %v1746, %v1654
        %v1764 = vmul.f32 %v1747, %v1661
        %v1765 = vmul.f32 %v1747, %v1667
        %v1766 = vmul.f32 %v1748, %v1674
        %v1767 = vmul.f32 %v1748, %v1680
        %v1768 = vmul.f32 %v1749, %v1687
        %v1769 = vmul.f32 %v1749, %v1693
        %v1770 = vmul.f32 %v1750, %v1700
        %v1771 = vmul.f32 %v1750, %v1706
        %v1772 = vmul.f32 %v1751, %v1713
        %v1773 = vmul.f32 %v1751, %v1719
        %v1774 = vmul.f32 %v1752, %v1726
        %v1775 = vmul.f32 %v1752, %v1732
        %v1776 = vmul.f32 %v1753, %v1739
        %v1777 = vmul.f32 %v1753, %v1745
        %1778 = vst [vmem:[#allocation5] sm:$0xff] %v1762
        %1779 = vst [vmem:[#allocation5 + $0x8] sm:$0xff] %v1763
        %1780 = vst [vmem:[#allocation5 + $0x10] sm:$0xff] %v1764
        %1781 = vst [vmem:[#allocation5 + $0x18] sm:$0xff] %v1765
        %1782 = vst [vmem:[#allocation5 + $0x20] sm:$0xff] %v1766
        %1783 = vst [vmem:[#allocation5 + $0x28] sm:$0xff] %v1767
        %1784 = vst [vmem:[#allocation5 + $0x30] sm:$0xff] %v1768
        %1785 = vst [vmem:[#allocation5 + $0x38] sm:$0xff] %v1769
        %1786 = vst [vmem:[#allocation5 + $0x40] sm:$0xff] %v1770
        %1787 = vst [vmem:[#allocation5 + $0x48] sm:$0xff] %v1771
        %1788 = vst [vmem:[#allocation5 + $0x50] sm:$0xff] %v1772
        %1789 = vst [vmem:[#allocation5 + $0x58] sm:$0xff] %v1773
        %1790 = vst [vmem:[#allocation5 + $0x60] sm:$0xff] %v1774
        %1791 = vst [vmem:[#allocation5 + $0x68] sm:$0xff] %v1775
        %1792 = vst [vmem:[#allocation5 + $0x70] sm:$0xff] %v1776
        %1793 = vst [vmem:[#allocation5 + $0x78] sm:$0xff] %v1777
        %s1794 = scalar_lea.vmem [#allocation2], 16
        %v1795 = vld [vmem:[%s1794] sm:$0xff]
        %v1796 = vld [vmem:[%s1794 + $0x8] sm:$0xff]
        %v1797 = vld [vmem:[#allocation4] sm:$0xff]
        %v1798 = vld [vmem:[#allocation4 + $0x8] sm:$0xff]
        %v1799 = vmul.f32 %v1797, %v1795
        %v1800 = vmul.f32 %v1798, %v1796
        %v1801 = vld [vmem:[#allocation5] sm:$0xff]
        %v1802 = vld [vmem:[#allocation5 + $0x8] sm:$0xff]
        %v1803 = vadd.f32 %v1799, %v1801
        %v1804 = vadd.f32 %v1800, %v1802
        %1805 = vst [vmem:[#allocation6] sm:$0xff] %v1803
        %1806 = vst [vmem:[#allocation6 + $0x8] sm:$0xff] %v1804
        %v1807 = vld [vmem:[%s894] sm:$0xff]
        %v1808 = vld [vmem:[%s894 + $0x8] sm:$0xff]
        %v1809 = vmul.f32 %v1807, %v1803
        %v1810 = vmul.f32 %v1808, %v1804
        %v1811 = vld [vmem:[%s899] sm:$0xff]
        %v1812 = vld [vmem:[%s899 + $0x8] sm:$0xff]
        %v1813 = vadd.f32 %v1809, %v1811
        %v1814 = vadd.f32 %v1810, %v1812
        %1815 = vst [vmem:[%s904] sm:$0xff] %v1813
        %1816 = vst [vmem:[%s904 + $0x8] sm:$0xff] %v1814
        %v1817 = vld [vmem:[%s907] sm:$0xff]
        %v1818 = vld [vmem:[%s907 + $0x8] sm:$0xff]
        %v1819 = vmul.f32 %v1817, %v1813
        %v1820 = vmul.f32 %v1818, %v1814
        %v1821 = vld [vmem:[%s912] sm:$0xff]
        %v1822 = vld [vmem:[%s912 + $0x8] sm:$0xff]
        %v1823 = vadd.f32 %v1819, %v1821
        %v1824 = vadd.f32 %v1820, %v1822
        %1825 = vst [vmem:[%s917] sm:$0xff] %v1823
        %1826 = vst [vmem:[%s917 + $0x8] sm:$0xff] %v1824
        %v1827 = vld [vmem:[%s920] sm:$0xff]
        %v1828 = vld [vmem:[%s920 + $0x8] sm:$0xff]
        %v1829 = vmul.f32 %v1827, %v1823
        %v1830 = vmul.f32 %v1828, %v1824
        %v1831 = vld [vmem:[%s925] sm:$0xff]
        %v1832 = vld [vmem:[%s925 + $0x8] sm:$0xff]
        %v1833 = vadd.f32 %v1829, %v1831
        %v1834 = vadd.f32 %v1830, %v1832
        %1835 = vst [vmem:[%s930] sm:$0xff] %v1833
        %1836 = vst [vmem:[%s930 + $0x8] sm:$0xff] %v1834
        %v1837 = vld [vmem:[%s933] sm:$0xff]
        %v1838 = vld [vmem:[%s933 + $0x8] sm:$0xff]
        %v1839 = vmul.f32 %v1837, %v1833
        %v1840 = vmul.f32 %v1838, %v1834
        %v1841 = vld [vmem:[%s938] sm:$0xff]
        %v1842 = vld [vmem:[%s938 + $0x8] sm:$0xff]
        %v1843 = vadd.f32 %v1839, %v1841
        %v1844 = vadd.f32 %v1840, %v1842
        %1845 = vst [vmem:[%s943] sm:$0xff] %v1843
        %1846 = vst [vmem:[%s943 + $0x8] sm:$0xff] %v1844
        %v1847 = vld [vmem:[%s946] sm:$0xff]
        %v1848 = vld [vmem:[%s946 + $0x8] sm:$0xff]
        %v1849 = vmul.f32 %v1847, %v1843
        %v1850 = vmul.f32 %v1848, %v1844
        %v1851 = vld [vmem:[%s951] sm:$0xff]
        %v1852 = vld [vmem:[%s951 + $0x8] sm:$0xff]
        %v1853 = vadd.f32 %v1849, %v1851
        %v1854 = vadd.f32 %v1850, %v1852
        %1855 = vst [vmem:[%s956] sm:$0xff] %v1853
        %1856 = vst [vmem:[%s956 + $0x8] sm:$0xff] %v1854
        %v1857 = vld [vmem:[%s959] sm:$0xff]
        %v1858 = vld [vmem:[%s959 + $0x8] sm:$0xff]
        %v1859 = vmul.f32 %v1857, %v1853
        %v1860 = vmul.f32 %v1858, %v1854
        %v1861 = vld [vmem:[%s964] sm:$0xff]
        %v1862 = vld [vmem:[%s964 + $0x8] sm:$0xff]
        %v1863 = vadd.f32 %v1859, %v1861
        %v1864 = vadd.f32 %v1860, %v1862
        %1865 = vst [vmem:[%s969] sm:$0xff] %v1863
        %1866 = vst [vmem:[%s969 + $0x8] sm:$0xff] %v1864
        %v1867 = vld [vmem:[%s972] sm:$0xff]
        %v1868 = vld [vmem:[%s972 + $0x8] sm:$0xff]
        %v1869 = vmul.f32 %v1867, %v1863
        %v1870 = vmul.f32 %v1868, %v1864
        %v1871 = vld [vmem:[%s977] sm:$0xff]
        %v1872 = vld [vmem:[%s977 + $0x8] sm:$0xff]
        %v1873 = vadd.f32 %v1869, %v1871
        %v1874 = vadd.f32 %v1870, %v1872
        %1875 = vst [vmem:[%s982] sm:$0xff] %v1873
        %1876 = vst [vmem:[%s982 + $0x8] sm:$0xff] %v1874
        %1877 = vst [vmem:[%s1794] sm:$0xff] %v1873
        %1878 = vst [vmem:[%s1794 + $0x8] sm:$0xff] %v1874
        %v1879 = vld [vmem:[#allocation6] sm:$0xff]
        %v1880 = vld [vmem:[#allocation6 + $0x8] sm:$0xff]
        %v1881 = vld [vmem:[#allocation6 + $0x10] sm:$0xff]
        %v1882 = vld [vmem:[#allocation6 + $0x18] sm:$0xff]
        %v1883 = vld [vmem:[#allocation6 + $0x20] sm:$0xff]
        %v1884 = vld [vmem:[#allocation6 + $0x28] sm:$0xff]
        %v1885 = vld [vmem:[#allocation6 + $0x30] sm:$0xff]
        %v1886 = vld [vmem:[#allocation6 + $0x38] sm:$0xff]
        %v1887 = vld [vmem:[#allocation6 + $0x40] sm:$0xff]
        %v1888 = vld [vmem:[#allocation6 + $0x48] sm:$0xff]
        %v1889 = vld [vmem:[#allocation6 + $0x50] sm:$0xff]
        %v1890 = vld [vmem:[#allocation6 + $0x58] sm:$0xff]
        %v1891 = vld [vmem:[#allocation6 + $0x60] sm:$0xff]
        %v1892 = vld [vmem:[#allocation6 + $0x68] sm:$0xff]
        %v1893 = vld [vmem:[#allocation6 + $0x70] sm:$0xff]
        %v1894 = vld [vmem:[#allocation6 + $0x78] sm:$0xff]
        %v1895 = vlaneseq
        %v1896 = vshrl.u32 %v1895, 7
        %v1897 = vadd.s32 %v1896, 16
        %1898 = vset.pattern.permute.xlu0 %v1897
        %1899 = vperm.xlu0 %1898, %v1642
        %v1900 = vpop.permute.xlu0 %1899
        %v1901 = vlaneseq
        %v1902 = vshrl.u32 %v1901, 7
        %v1903 = vadd.s32 %v1902, 24
        %1904 = vset.pattern.permute.xlu0 %v1903
        %1905 = vperm.xlu0 %1904, %v1642
        %v1906 = vpop.permute.xlu0 %1905
        %v1907 = vlaneseq
        %v1908 = vshrl.u32 %v1907, 7
        %v1909 = vadd.s32 %v1908, 16
        %1910 = vset.pattern.permute.xlu0 %v1909
        %1911 = vperm.xlu0 %1910, %v1655
        %v1912 = vpop.permute.xlu0 %1911
        %v1913 = vlaneseq
        %v1914 = vshrl.u32 %v1913, 7
        %v1915 = vadd.s32 %v1914, 24
        %1916 = vset.pattern.permute.xlu0 %v1915
        %1917 = vperm.xlu0 %1916, %v1655
        %v1918 = vpop.permute.xlu0 %1917
        %v1919 = vlaneseq
        %v1920 = vshrl.u32 %v1919, 7
        %v1921 = vadd.s32 %v1920, 16
        %1922 = vset.pattern.permute.xlu0 %v1921
        %1923 = vperm.xlu0 %1922, %v1668
        %v1924 = vpop.permute.xlu0 %1923
        %v1925 = vlaneseq
        %v1926 = vshrl.u32 %v1925, 7
        %v1927 = vadd.s32 %v1926, 24
        %1928 = vset.pattern.permute.xlu0 %v1927
        %1929 = vperm.xlu0 %1928, %v1668
        %v1930 = vpop.permute.xlu0 %1929
        %v1931 = vlaneseq
        %v1932 = vshrl.u32 %v1931, 7
        %v1933 = vadd.s32 %v1932, 16
        %1934 = vset.pattern.permute.xlu0 %v1933
        %1935 = vperm.xlu0 %1934, %v1681
        %v1936 = vpop.permute.xlu0 %1935
        %v1937 = vlaneseq
        %v1938 = vshrl.u32 %v1937, 7
        %v1939 = vadd.s32 %v1938, 24
        %1940 = vset.pattern.permute.xlu0 %v1939
        %1941 = vperm.xlu0 %1940, %v1681
        %v1942 = vpop.permute.xlu0 %1941
        %v1943 = vlaneseq
        %v1944 = vshrl.u32 %v1943, 7
        %v1945 = vadd.s32 %v1944, 16
        %1946 = vset.pattern.permute.xlu0 %v1945
        %1947 = vperm.xlu0 %1946, %v1694
        %v1948 = vpop.permute.xlu0 %1947
        %v1949 = vlaneseq
        %v1950 = vshrl.u32 %v1949, 7
        %v1951 = vadd.s32 %v1950, 24
        %1952 = vset.pattern.permute.xlu0 %v1951
        %1953 = vperm.xlu0 %1952, %v1694
        %v1954 = vpop.permute.xlu0 %1953
        %v1955 = vlaneseq
        %v1956 = vshrl.u32 %v1955, 7
        %v1957 = vadd.s32 %v1956, 16
        %1958 = vset.pattern.permute.xlu0 %v1957
        %1959 = vperm.xlu0 %1958, %v1707
        %v1960 = vpop.permute.xlu0 %1959
        %v1961 = vlaneseq
        %v1962 = vshrl.u32 %v1961, 7
        %v1963 = vadd.s32 %v1962, 24
        %1964 = vset.pattern.permute.xlu0 %v1963
        %1965 = vperm.xlu0 %1964, %v1707
        %v1966 = vpop.permute.xlu0 %1965
        %v1967 = vlaneseq
        %v1968 = vshrl.u32 %v1967, 7
        %v1969 = vadd.s32 %v1968, 16
        %1970 = vset.pattern.permute.xlu0 %v1969
        %1971 = vperm.xlu0 %1970, %v1720
        %v1972 = vpop.permute.xlu0 %1971
        %v1973 = vlaneseq
        %v1974 = vshrl.u32 %v1973, 7
        %v1975 = vadd.s32 %v1974, 24
        %1976 = vset.pattern.permute.xlu0 %v1975
        %1977 = vperm.xlu0 %1976, %v1720
        %v1978 = vpop.permute.xlu0 %1977
        %v1979 = vlaneseq
        %v1980 = vshrl.u32 %v1979, 7
        %v1981 = vadd.s32 %v1980, 16
        %1982 = vset.pattern.permute.xlu0 %v1981
        %1983 = vperm.xlu0 %1982, %v1733
        %v1984 = vpop.permute.xlu0 %1983
        %v1985 = vlaneseq
        %v1986 = vshrl.u32 %v1985, 7
        %v1987 = vadd.s32 %v1986, 24
        %1988 = vset.pattern.permute.xlu0 %v1987
        %1989 = vperm.xlu0 %1988, %v1733
        %v1990 = vpop.permute.xlu0 %1989
        %v1991 = vmul.f32 %v1879, %v1900
        %v1992 = vmul.f32 %v1880, %v1906
        %v1993 = vmul.f32 %v1881, %v1912
        %v1994 = vmul.f32 %v1882, %v1918
        %v1995 = vmul.f32 %v1883, %v1924
        %v1996 = vmul.f32 %v1884, %v1930
        %v1997 = vmul.f32 %v1885, %v1936
        %v1998 = vmul.f32 %v1886, %v1942
        %v1999 = vmul.f32 %v1887, %v1948
        %v2000 = vmul.f32 %v1888, %v1954
        %v2001 = vmul.f32 %v1889, %v1960
        %v2002 = vmul.f32 %v1890, %v1966
        %v2003 = vmul.f32 %v1891, %v1972
        %v2004 = vmul.f32 %v1892, %v1978
        %v2005 = vmul.f32 %v1893, %v1984
        %v2006 = vmul.f32 %v1894, %v1990
        %v2007 = vadd.f32 %v1991, %v1992
        %v2008 = vrot.slane %v2007, 4
        %v2009 = vadd.f32 %v2007, %v2008
        %v2010 = vrot.slane %v2009, 2
        %v2011 = vadd.f32 %v2009, %v2010
        %v2012 = vrot.slane %v2011, 1
        %v2013 = vadd.f32 %v2011, %v2012
        %v2014 = vadd.f32 %v1993, %v1994
        %v2015 = vrot.slane %v2014, 4
        %v2016 = vadd.f32 %v2014, %v2015
        %v2017 = vrot.slane %v2016, 2
        %v2018 = vadd.f32 %v2016, %v2017
        %v2019 = vrot.slane %v2018, 1
        %v2020 = vadd.f32 %v2018, %v2019
        %v2021 = vadd.f32 %v1995, %v1996
        %v2022 = vrot.slane %v2021, 4
        %v2023 = vadd.f32 %v2021, %v2022
        %v2024 = vrot.slane %v2023, 2
        %v2025 = vadd.f32 %v2023, %v2024
        %v2026 = vrot.slane %v2025, 1
        %v2027 = vadd.f32 %v2025, %v2026
        %v2028 = vadd.f32 %v1997, %v1998
        %v2029 = vrot.slane %v2028, 4
        %v2030 = vadd.f32 %v2028, %v2029
        %v2031 = vrot.slane %v2030, 2
        %v2032 = vadd.f32 %v2030, %v2031
        %v2033 = vrot.slane %v2032, 1
        %v2034 = vadd.f32 %v2032, %v2033
        %v2035 = vadd.f32 %v1999, %v2000
        %v2036 = vrot.slane %v2035, 4
        %v2037 = vadd.f32 %v2035, %v2036
        %v2038 = vrot.slane %v2037, 2
        %v2039 = vadd.f32 %v2037, %v2038
        %v2040 = vrot.slane %v2039, 1
        %v2041 = vadd.f32 %v2039, %v2040
        %v2042 = vadd.f32 %v2001, %v2002
        %v2043 = vrot.slane %v2042, 4
        %v2044 = vadd.f32 %v2042, %v2043
        %v2045 = vrot.slane %v2044, 2
        %v2046 = vadd.f32 %v2044, %v2045
        %v2047 = vrot.slane %v2046, 1
        %v2048 = vadd.f32 %v2046, %v2047
        %v2049 = vadd.f32 %v2003, %v2004
        %v2050 = vrot.slane %v2049, 4
        %v2051 = vadd.f32 %v2049, %v2050
        %v2052 = vrot.slane %v2051, 2
        %v2053 = vadd.f32 %v2051, %v2052
        %v2054 = vrot.slane %v2053, 1
        %v2055 = vadd.f32 %v2053, %v2054
        %v2056 = vadd.f32 %v2005, %v2006
        %v2057 = vrot.slane %v2056, 4
        %v2058 = vadd.f32 %v2056, %v2057
        %v2059 = vrot.slane %v2058, 2
        %v2060 = vadd.f32 %v2058, %v2059
        %v2061 = vrot.slane %v2060, 1
        %v2062 = vadd.f32 %v2060, %v2061
        %s2063 = scalar_lea.vmem %s8, 1
        %v2064 = vld [vmem:[%s2063] sm:$0x1]
        %v2066 = vperm.slane %v2064, 0
        %v2068 = vmul.f32 %v1444, %v2066
        %v2070 = vrot.slane %v2068, 1
        %v2071 = vrot.slane %v2068, 2
        %v2072 = vrot.slane %v2068, 3
        %v2073 = vrot.slane %v2068, 4
        %v2074 = vrot.slane %v2068, 5
        %v2075 = vrot.slane %v2068, 6
        %v2076 = vrot.slane %v2068, 7
        %v2085 = vadd.f32 %v2013, %v2068
        %v2086 = vadd.f32 %v2020, %v2070
        %v2087 = vadd.f32 %v2027, %v2071
        %v2088 = vadd.f32 %v2034, %v2072
        %v2089 = vadd.f32 %v2041, %v2073
        %v2090 = vadd.f32 %v2048, %v2074
        %v2091 = vadd.f32 %v2055, %v2075
        %v2092 = vadd.f32 %v2062, %v2076
        %v2093 = vxor.u32 %v1392, 2147483648
        %v2094 = vmul.f32 %v2093, 1.442695
        %v2095 = vpow.pop %v2094
        %v2096 = vadd.f32 %v2095, 1.0
        %v2097 = vrcp.pop %v2096
        %v2098 = vmul.f32 %v2096, %v2097
        %v2099 = vsub.f32 1.0, %v2098
        %v2100 = vmul.f32 %v2097, %v2099
        %v2101 = vadd.f32 %v2097, %v2100
        %vm2102 = vweird.f32 %v2096
        %vm2103 = vweird.f32 %v2097
        %vm2104 = vmor %vm2102, %vm2103
        %v2105 = vsel %vm2104, %v2097, %v2101
        %v2106 = vand.u32 2147483647, %v2096
        %vm2107 = vcmp.eq.f32.partialorder %v2106, 8.507059e+37
        %v2108 = vand.u32 %v2096, 2147483648
        %v2109 = vor.u32 1.1754944e-38, %v2108
        %v2110 = vsel %vm2107, %v2109, %v2105
        %v2111 = vmul.f32 1.0, %v2110
        %v2112 = vmul.f32 %v1392, %v2111
        %v2114 = vrot.slane %v2112, 1
        %v2115 = vrot.slane %v2112, 2
        %v2116 = vrot.slane %v2112, 3
        %v2117 = vrot.slane %v2112, 4
        %v2118 = vrot.slane %v2112, 5
        %v2119 = vrot.slane %v2112, 6
        %v2120 = vrot.slane %v2112, 7
        %v2129 = vmul.f32 %v2085, %v2112
        %v2130 = vmul.f32 %v2086, %v2114
        %v2131 = vmul.f32 %v2087, %v2115
        %v2132 = vmul.f32 %v2088, %v2116
        %v2133 = vmul.f32 %v2089, %v2117
        %v2134 = vmul.f32 %v2090, %v2118
        %v2135 = vmul.f32 %v2091, %v2119
        %v2136 = vmul.f32 %v2092, %v2120
        %s2137 = scalar_lea.vmem %s9, 128
        %v2138 = vld [vmem:[%s2137] sm:$0xff]
        %v2139 = vld [vmem:[%s2137 + $0x8] sm:$0xff]
        %v2140 = vld [vmem:[%s2137 + $0x10] sm:$0xff]
        %v2141 = vld [vmem:[%s2137 + $0x18] sm:$0xff]
        %v2142 = vld [vmem:[%s2137 + $0x20] sm:$0xff]
        %v2143 = vld [vmem:[%s2137 + $0x28] sm:$0xff]
        %v2144 = vld [vmem:[%s2137 + $0x30] sm:$0xff]
        %v2145 = vld [vmem:[%s2137 + $0x38] sm:$0xff]
        %v2146 = vld [vmem:[%s2137 + $0x40] sm:$0xff]
        %v2147 = vld [vmem:[%s2137 + $0x48] sm:$0xff]
        %v2148 = vld [vmem:[%s2137 + $0x50] sm:$0xff]
        %v2149 = vld [vmem:[%s2137 + $0x58] sm:$0xff]
        %v2150 = vld [vmem:[%s2137 + $0x60] sm:$0xff]
        %v2151 = vld [vmem:[%s2137 + $0x68] sm:$0xff]
        %v2152 = vld [vmem:[%s2137 + $0x70] sm:$0xff]
        %v2153 = vld [vmem:[%s2137 + $0x78] sm:$0xff]
        %v2162 = vrot.slane %v2130, 7
        %v2163 = vsel %vm1269, %v2162, %v2129
        %v2164 = vrot.slane %v2131, 6
        %v2165 = vsel %vm1272, %v2164, %v2163
        %v2166 = vrot.slane %v2132, 5
        %v2167 = vsel %vm1275, %v2166, %v2165
        %v2168 = vrot.slane %v2133, 4
        %v2169 = vsel %vm1278, %v2168, %v2167
        %v2170 = vrot.slane %v2134, 3
        %v2171 = vsel %vm1281, %v2170, %v2169
        %v2172 = vrot.slane %v2135, 2
        %v2173 = vsel %vm1284, %v2172, %v2171
        %v2174 = vrot.slane %v2136, 1
        %v2175 = vsel %vm1287, %v2174, %v2173
        %2177 = vmatpush.msra.mxu0 %v2153
        %2178 = vmatpush.msra.mxu0 %v2152
        %2179 = vmatpush.msra.mxu0 %v2151
        %2180 = vmatpush.msra.mxu0 %v2150
        %2181 = vmatpush.msra.mxu0 %v2149
        %2182 = vmatpush.msra.mxu0 %v2148
        %2183 = vmatpush.msra.mxu0 %v2147
        %2184 = vmatpush.msra.mxu0 %v2146
        %2185 = vmatpush.msra.mxu0 %v2145
        %2186 = vmatpush.msra.mxu0 %v2144
        %2187 = vmatpush.msra.mxu0 %v2143
        %2188 = vmatpush.msra.mxu0 %v2142
        %2189 = vmatpush.msra.mxu0 %v2141
        %2190 = vmatpush.msra.mxu0 %v2140
        %2191 = vmatpush.msra.mxu0 %v2139
        %2192 = vmatpush.msra.mxu0 %v2138
        %2193 = vmatmul.f32.gmra.mxu0 %v2175
        %v2194 = vpop.f32.mrf.mxu0
        %v2195 = vadd.f32 0.0, %v2194
        %2196 = vdwg.mxu0
        %v2197 = vadd.f32 %v1310, %v2195
        %2198 = vst.msk [vmem:[%s374] sm:$0xff] %vm397, %v2197
        %s2199 = sand.u32 %s263, 1
        %s2200 = scalar_lea.sflag [#allocation8], %s2199
        %s2201 = sand.u32 %s263, 1
        %s2202 = smul.addr %s2201, 8
        %s2203 = scalar_lea.vmem [#allocation7], %s2202
        // Predicated region
        $region65: #{model_forward.1} parent=59 // pred_check
          %p2204 = pneg %p273
        $region66: #{model_forward.1} parent=59 // pred_check_branch
          %2206 = sbr.rel (%p2204) target = $region68
        $region67: #{model_forward.1} parent=59 // pred_region
          %2208 = vsyncadd %s2200, 0
          %s2209 = smul.addr %s28, 4
          %s2210 = sadd.s32 %s29, %s2209
          %s2211 = smul.addr %s2210, 8
          %s2212 = scalar_lea.hbm %s10, %s2211
          %s2214 = sshll.u32 %s2203, 4
          %s2215 = int_to_ptr.vmem [resolvable:$true] %s2214
          %s2216 = sshll.u32 %s2212, 4
          %s2217 = int_to_ptr.hbm [resolvable:$true] %s2216
          %2219 = dma.vmem_to_hbm [thread:$0]  %s2215, 128, %s2217, %s2200
        $region68: #{model_forward.1} parent=59 // pred_fallthru
          _
      $region60: #{model_forward.1} parent=5 // pred_fallthru
        _
      %p2220 = scmp.le.s32.totalorder 2, %s19
      // Predicated region
      $region69: #{model_forward.1} parent=5 // pred_check
        %p2221 = pneg %p2220
      $region70: #{model_forward.1} parent=5 // pred_check_branch
        %2223 = sbr.rel (%p2221) target = $region72
      $region71: #{model_forward.1} parent=5 // pred_region
        %s2224 = ssub.s32 %s19, 2
        // Predicated region
        $region73: #{model_forward.1} parent=71 // pred_check
          %p2225 = pneg %p279
        $region74: #{model_forward.1} parent=71 // pred_check_branch
          %2227 = sbr.rel (%p2225) target = $region76
        $region75: #{model_forward.1} parent=71 // pred_region
          %s2228 = sand.u32 %s264, 1
          %s2229 = scalar_lea.sflag [#allocation8], %s2228
          %s2230 = sand.u32 %s264, 1
          %s2231 = smul.addr %s2230, 8
          %s2232 = scalar_lea.vmem [#allocation7], %s2231
          %2234 = dma.done %s2229, 128
        $region76: #{model_forward.1} parent=71 // pred_fallthru
          _
      $region72: #{model_forward.1} parent=5 // pred_fallthru
        _
    $region6: #{model_forward.1} parent=1 // loop_footer
      %s23 = sadd.s32 1, %s19
    $region7: #{model_forward.1} parent=1 // loop_footer_branch
      %18 = sbr.rel target = $region3
    $region8: #{model_forward.1} parent=1 // loop_exit
      _
    %2235 = vsyncpa [#allocation8], 1
    %s2236 = scalar_lea.sflag [#allocation8], 1
    %2237 = vsyncpa %s2236, 1

</llo_original>
